<compile_context>
chip_gen: v7x
topology: tpu7x:2x2x1
jax: 0.10.0
libtpu: 0.0.40
codegen_flags: <defaults>
</compile_context>

<pallas_src>
import jax
import jax.numpy as jnp
from jax import lax
from jax.experimental import pallas as pl
from jax.experimental.pallas import tpu as pltpu

# Set to jnp.bfloat16 on v5e/v6e/v7x for the bf16 MXU path (weights are cast
# ONCE at init; all dots still accumulate in f32 via preferred_element_type).
MATMUL_WEIGHT_DTYPE = jnp.float32

_VMEM_CAP = 64 * 1024 * 1024  # stay within v7x physical VMEM


def _vmem_limit(nbytes):
    return int(min(_VMEM_CAP, max(16 * 1024 * 1024, 4 * int(nbytes))))


def _pick_tile(dim, target, align):
    """Largest multiple of `align` <= target that divides `dim`, else `dim`."""
    if dim <= target:
        return dim
    t = (target // align) * align
    while t >= align:
        if dim % t == 0:
            return t
        t -= align
    return dim


# ----------------------------------------------------------------------------
# Tiled linear:  y = x @ w + b   (used for the hoisted LSTM input projection
# and for the vocab projection — the only big, embarrassingly parallel matmuls)
# ----------------------------------------------------------------------------
def _linear_kernel(x_ref, w_ref, b_ref, o_ref):
    x = x_ref[...].astype(w_ref.dtype)
    o_ref[...] = (jnp.dot(x, w_ref[...], preferred_element_type=jnp.float32)
                  + b_ref[...]).astype(o_ref.dtype)


def linear_forward(x2d, w, b, *, tm_target=256, tn_target=512):
    M, K = x2d.shape
    Kw, N = w.shape
    assert K == Kw
    tm = _pick_tile(M, tm_target, 8)
    tn = _pick_tile(N, tn_target, 128)
    grid = (M // tm, N // tn)
    block_bytes = 4 * (tm * K + K * tn + tn + tm * tn)
    return pl.pallas_call(
        _linear_kernel,
        out_shape=jax.ShapeDtypeStruct((M, N), x2d.dtype),
        grid=grid,
        in_specs=[
            pl.BlockSpec((tm, K), lambda i, j: (i, 0)),
            pl.BlockSpec((K, tn), lambda i, j: (0, j)),
            pl.BlockSpec((1, tn), lambda i, j: (0, j)),
        ],
        out_specs=pl.BlockSpec((tm, tn), lambda i, j: (i, j)),
        compiler_params=pltpu.CompilerParams(
            dimension_semantics=("parallel", "parallel"),
            vmem_limit_bytes=_vmem_limit(block_bytes)),
        cost_estimate=pl.CostEstimate(
            flops=2 * M * N * K, transcendentals=0,
            bytes_accessed=4 * (M * K + K * N + M * N + N)),
    )(x2d, w, b)


# ----------------------------------------------------------------------------
# Encoder LSTM recurrence + time-mean (single invocation, fori_loop over time)
# ----------------------------------------------------------------------------
def _lstm_mean_kernel(xp_ref, whh_ref, o_ref):
    """xp_ref : (S, B, 4H) = x_t @ W_ih + (b_ih + b_hh), precomputed outside.
       whh_ref: (H, 4H)    loaded once, resident for the whole sequence.
       o_ref  : (B, H)     mean_t(h_t) — the only thing the model consumes."""
    S, B, _ = xp_ref.shape
    H = whh_ref.shape[0]
    wd = whh_ref.dtype

    def step(t, carry):
        h, c, hsum = carry
        gates = xp_ref[t] + jnp.dot(h.astype(wd), whh_ref[...],
                                    preferred_element_type=jnp.float32)
        # PyTorch gate order (i, f, g, o). For H >= 128 these slices are
        # lane-tile aligned; at tiny H the masked-slice cost is negligible.
        i = jax.nn.sigmoid(gates[:, 0 * H:1 * H])
        f = jax.nn.sigmoid(gates[:, 1 * H:2 * H])
        g = jnp.tanh(gates[:, 2 * H:3 * H])
        o = jax.nn.sigmoid(gates[:, 3 * H:4 * H])
        c = f * c + i * g
        h = o * jnp.tanh(c)
        return h, c, hsum + h

    z = jnp.zeros((B, H), jnp.float32)
    _, _, hsum = lax.fori_loop(0, S, step, (z, z, z), unroll=(S <= 16))
    o_ref[...] = (hsum * (1.0 / S)).astype(o_ref.dtype)


def lstm_mean_forward(xproj_sbg, w_hh):
    S, B, G = xproj_sbg.shape
    H = w_hh.shape[0]
    return pl.pallas_call(
        _lstm_mean_kernel,
        out_shape=jax.ShapeDtypeStruct((B, H), xproj_sbg.dtype),
        in_specs=[pl.BlockSpec(memory_space=pltpu.MemorySpace.VMEM),
                  pl.BlockSpec(memory_space=pltpu.MemorySpace.VMEM)],
        out_specs=pl.BlockSpec(memory_space=pltpu.MemorySpace.VMEM),
        compiler_params=pltpu.CompilerParams(
            vmem_limit_bytes=_vmem_limit(4 * (S * B * G + H * G + B * H))),
        cost_estimate=pl.CostEstimate(
            flops=2 * S * B * H * G,
            transcendentals=5 * S * B * H,
            bytes_accessed=4 * (S * B * G + H * G + B * H)),
    )(xproj_sbg, w_hh)


# ----------------------------------------------------------------------------
# Two GCNConv layers (no inter-layer activation, per the reference forward)
# fused with the node mean: only a (1, H) vector leaves the kernel.
# ----------------------------------------------------------------------------
def _gcn_mean_kernel(a_ref, x_ref, w1_ref, b1_ref, w2_ref, b2_ref, o_ref):
    wd = w1_ref.dtype
    h = jnp.dot(x_ref[...].astype(wd), w1_ref[...],
                preferred_element_type=jnp.float32)
    h = jnp.dot(a_ref[...], h, preferred_element_type=jnp.float32) + b1_ref[...]
    h2 = jnp.dot(h.astype(wd), w2_ref[...], preferred_element_type=jnp.float32)
    h2 = jnp.dot(a_ref[...], h2, preferred_element_type=jnp.float32) + b2_ref[...]
    o_ref[...] = jnp.mean(h2, axis=0, keepdims=True).astype(o_ref.dtype)


def gcn_mean_forward(a_hat, node_x, w1, b1, w2, b2):
    N, H = node_x.shape
    # TODO(synk): tile the dense NxN propagation with a grid if N grows beyond
    # what fits in VMEM (A_hat is the O(N^2) limiter, especially on v7x 64MiB).
    return pl.pallas_call(
        _gcn_mean_kernel,
        out_shape=jax.ShapeDtypeStruct((1, H), node_x.dtype),
        in_specs=[pl.BlockSpec(memory_space=pltpu.MemorySpace.VMEM)] * 6,
        out_specs=pl.BlockSpec(memory_space=pltpu.MemorySpace.VMEM),
        compiler_params=pltpu.CompilerParams(
            vmem_limit_bytes=_vmem_limit(4 * (N * N + 2 * N * H + 2 * H * H))),
        cost_estimate=pl.CostEstimate(
            flops=4 * N * H * H + 4 * N * N * H, transcendentals=0,
            bytes_accessed=4 * (N * N + N * H + 2 * H * H + 2 * H + H)),
    )(a_hat, node_x, w1, b1, w2, b2)


# ----------------------------------------------------------------------------
# Fusion Linear + decoder LSTM in one kernel.
# ----------------------------------------------------------------------------
def _fusion_decoder_kernel(enc_ref, node_ref, wf_ref, bf_ref,
                           wih_ref, bih_ref, whh_ref, o_ref, hs_ref):
    S = hs_ref.shape[0]
    B, H = enc_ref.shape
    wd = whh_ref.dtype

    # fusion Linear(2H -> H): concat replaced by splitting the weight rows;
    # the (B, H) broadcast of the node mean is never materialized.
    fused = (jnp.dot(enc_ref[...].astype(wd), wf_ref[0:H, :],
                     preferred_element_type=jnp.float32)
             + jnp.dot(node_ref[...].astype(wd), wf_ref[H:2 * H, :],
                       preferred_element_type=jnp.float32)
             + bf_ref[...])                                         # (B, H)

    # decoder input is the same fused vector every step -> project it once.
    xp = (jnp.dot(fused.astype(wd), wih_ref[...],
                  preferred_element_type=jnp.float32) + bih_ref[...])  # (B, 4H)

    def step(t, carry):
        h, c = carry
        gates = xp + jnp.dot(h.astype(wd), whh_ref[...],
                             preferred_element_type=jnp.float32)
        i = jax.nn.sigmoid(gates[:, 0 * H:1 * H])
        f = jax.nn.sigmoid(gates[:, 1 * H:2 * H])
        g = jnp.tanh(gates[:, 2 * H:3 * H])
        o = jax.nn.sigmoid(gates[:, 3 * H:4 * H])
        c = f * c + i * g
        h = o * jnp.tanh(c)
        hs_ref[t] = h                    # time-major scratch, contiguous store
        return h, c

    z = jnp.zeros((B, H), jnp.float32)
    lax.fori_loop(0, S, step, (z, z), unroll=(S <= 16))

    # Batch-major writeback done in VMEM via static per-batch slab copies, so
    # the logits come out in (B, S, V) order with no HBM transpose downstream.
    hs = hs_ref[...]
    for b in range(B):
        o_ref[b] = hs[:, b, :].astype(o_ref.dtype)


def fusion_decoder_forward(enc_mean, node_mean, w_f, b_f, w_ih, b_ih, w_hh,
                           seq_len):
    B, H = enc_mean.shape
    S = seq_len
    G = w_hh.shape[1]
    return pl.pallas_call(
        _fusion_decoder_kernel,
        out_shape=jax.ShapeDtypeStruct((B, S, H), enc_mean.dtype),
        in_specs=[pl.BlockSpec(memory_space=pltpu.MemorySpace.VMEM)] * 7,
        out_specs=pl.BlockSpec(memory_space=pltpu.MemorySpace.VMEM),
        scratch_shapes=[pltpu.VMEM((S, B, H), jnp.float32)],
        compiler_params=pltpu.CompilerParams(
            vmem_limit_bytes=_vmem_limit(
                4 * (2 * B * S * H + 2 * H * G + 2 * H * H + B * H))),
        cost_estimate=pl.CostEstimate(
            flops=2 * B * H * (2 * H + G) + 2 * S * B * H * G,
            transcendentals=5 * S * B * H,
            bytes_accessed=4 * (B * H + H + 2 * H * H + 2 * H * G + B * S * H)),
    )(enc_mean, node_mean, w_f, b_f, w_ih, b_ih, w_hh)


# ----------------------------------------------------------------------------
# SAFM forward (glue in plain JAX, hot paths in Pallas)
# ----------------------------------------------------------------------------
def safm_forward(params, json_input, graph_node_ids, edge_index):
    B, S = json_input.shape
    H = params["embedding"].shape[1]
    V = params["out_w"].shape[1]

    # Embedding gather directly in TIME-MAJOR row order (only the tiny int32
    # index array is transposed — no (B,S,H) HBM activation relayout).
    flat_ids = json_input.T.reshape(-1)                               # (S*B,)
    x2d = jnp.take(params["embedding"], flat_ids, axis=0)             # (S*B, H)
    node_x = jnp.take(params["embedding"], graph_node_ids, axis=0)    # (N, H)

    # Encoder: hoisted input projection (one well-shaped MXU matmul), then the
    # recurrence + time-mean fused into a single kernel invocation.
    xproj = linear_forward(x2d, params["enc_w_ih"], params["enc_b"])  # (S*B,4H)
    xproj = xproj.reshape(S, B, 4 * H)                                # free
    enc_mean = lstm_mean_forward(xproj, params["enc_w_hh"])           # (B, H)

    # GCN: dense symmetric-normalized adjacency with self loops built in glue
    # (data-dependent scatter), both conv layers + node mean in one kernel.
    N = node_x.shape[0]
    src, dst = edge_index
    A = jnp.zeros((N, N), jnp.float32)
    A = A.at[src, dst].set(1.0)
    A = A.at[dst, src].set(1.0)            # symmetric edges
    A = A + jnp.eye(N, dtype=jnp.float32)  # self loops
    deg = jnp.sum(A, axis=1)
    dinv = 1.0 / jnp.sqrt(deg)
    a_hat = A * dinv[:, None] * dinv[None, :]
    node_mean = gcn_mean_forward(a_hat, node_x,
                                 params["gcn1_w"], params["gcn1_b"],
                                 params["gcn2_w"], params["gcn2_b"])  # (1, H)

    # Fusion + decoder LSTM: fused input projected once, reused for all steps;
    # no (S,B,H) broadcast input is ever materialized.
    decoded = fusion_decoder_forward(enc_mean, node_mean,
                                     params["fusion_w"], params["fusion_b"],
                                     params["dec_w_ih"], params["dec_b"],
                                     params["dec_w_hh"], S)           # (B,S,H)

    # Output projection: tiled grid, both axes parallel (megacore on v7x).
    logits = linear_forward(decoded.reshape(B * S, H),
                            params["out_w"], params["out_b"])         # (B*S,V)
    return logits.reshape(B, S, V)


def init_params(key, vocab_size, hidden_dim):
    H = hidden_dim
    ks = jax.random.split(key, 16)
    s = 1.0 / jnp.sqrt(jnp.float32(H))

    def rnd(k, shape, dtype=jnp.float32):
        return (jax.random.normal(k, shape, jnp.float32) * s).astype(dtype)

    wd = MATMUL_WEIGHT_DTYPE  # weights cast once here, never per-step
    return {
        "embedding": rnd(ks[0], (vocab_size, H)),
        # encoder LSTM (PyTorch gate order i,f,g,o; b = b_ih + b_hh folded —
        # must equal that sum if weights are imported from PyTorch)
        "enc_w_ih": rnd(ks[1], (H, 4 * H), wd),
        "enc_w_hh": rnd(ks[2], (H, 4 * H), wd),
        "enc_b": rnd(ks[3], (1, 4 * H)),
        # GCN layers
        "gcn1_w": rnd(ks[4], (H, H), wd),
        "gcn1_b": rnd(ks[5], (1, H)),
        "gcn2_w": rnd(ks[6], (H, H), wd),
        "gcn2_b": rnd(ks[7], (1, H)),
        # fusion Linear(2H -> H)
        "fusion_w": rnd(ks[8], (2 * H, H), wd),
        "fusion_b": rnd(ks[9], (1, H)),
        # decoder LSTM
        "dec_w_ih": rnd(ks[10], (H, 4 * H), wd),
        "dec_w_hh": rnd(ks[11], (H, 4 * H), wd),
        "dec_b": rnd(ks[12], (1, 4 * H)),
        # output Linear(H -> vocab)
        "out_w": rnd(ks[13], (H, vocab_size), wd),
        "out_b": rnd(ks[14], (1, vocab_size)),
    }


if __name__ == "__main__":
    vocab_size, hidden_dim = 16, 32
    B, S, N = 2, 8, 6

    key = jax.random.PRNGKey(0)
    k_p, k_json, k_nodes = jax.random.split(key, 3)

    params = init_params(k_p, vocab_size, hidden_dim)
    json_input = jax.random.randint(k_json, (B, S), 0, vocab_size, jnp.int32)
    graph_node_ids = jax.random.randint(k_nodes, (N,), 0, vocab_size, jnp.int32)
    edge_index = jnp.array([[0, 1, 2, 3, 4, 5, 0],
                            [1, 2, 3, 4, 5, 0, 3]], dtype=jnp.int32)

    fwd = jax.jit(safm_forward)
    out = fwd(params, json_input, graph_node_ids, edge_index)
    out = jax.block_until_ready(out)
    assert out.shape == (B, S, vocab_size), out.shape
    print("KERNEL_OK")
</pallas_src>

<mosaic_0001>
module attributes {stable_mosaic.version = 11 : i64} {
  func.func @_gcn_mean_kernel(%arg0: memref<6x6xf32, #tpu.memory_space<vmem>>, %arg1: memref<6x32xf32, #tpu.memory_space<vmem>>, %arg2: memref<32x32xf32, #tpu.memory_space<vmem>>, %arg3: memref<1x32xf32, #tpu.memory_space<vmem>>, %arg4: memref<32x32xf32, #tpu.memory_space<vmem>>, %arg5: memref<1x32xf32, #tpu.memory_space<vmem>>, %arg6: memref<1x32xf32, #tpu.memory_space<vmem>>) attributes {dimension_semantics = [], scalar_prefetch = 0 : i64, scratch_operands = 0 : i64, tpu.core_type = #tpu.core_type<tc>} {
    %c0 = arith.constant 0 : index
    %c0_0 = arith.constant 0 : index
    %0 = vector.load %arg1[%c0, %c0_0] : memref<6x32xf32, #tpu.memory_space<vmem>>, vector<6x32xf32>
    %c0_1 = arith.constant 0 : index
    %c0_2 = arith.constant 0 : index
    %1 = vector.load %arg2[%c0_1, %c0_2] : memref<32x32xf32, #tpu.memory_space<vmem>>, vector<32x32xf32>
    %cst = arith.constant dense<0.000000e+00> : vector<6x32xf32>
    %2 = tpu.matmul %0, %1, %cst {dimension_numbers = #tpu.dot_dimension_numbers<[1], [0], [0], [1], [0, 0, 1, 1], [], []>} : vector<6x32xf32>, vector<32x32xf32>, vector<6x32xf32> -> vector<6x32xf32>
    %c0_3 = arith.constant 0 : index
    %c0_4 = arith.constant 0 : index
    %3 = vector.load %arg0[%c0_3, %c0_4] : memref<6x6xf32, #tpu.memory_space<vmem>>, vector<6x6xf32>
    %cst_5 = arith.constant dense<0.000000e+00> : vector<6x32xf32>
    %4 = tpu.matmul %3, %2, %cst_5 {dimension_numbers = #tpu.dot_dimension_numbers<[1], [0], [0], [1], [0, 0, 1, 1], [], []>} : vector<6x6xf32>, vector<6x32xf32>, vector<6x32xf32> -> vector<6x32xf32>
    %c0_6 = arith.constant 0 : index
    %c0_7 = arith.constant 0 : index
    %5 = vector.load %arg3[%c0_6, %c0_7] : memref<1x32xf32, #tpu.memory_space<vmem>>, vector<1x32xf32>
    %6 = vector.broadcast %5 : vector<1x32xf32> to vector<6x32xf32>
    %7 = arith.addf %4, %6 : vector<6x32xf32>
    %c0_8 = arith.constant 0 : index
    %c0_9 = arith.constant 0 : index
    %8 = vector.load %arg4[%c0_8, %c0_9] : memref<32x32xf32, #tpu.memory_space<vmem>>, vector<32x32xf32>
    %cst_10 = arith.constant dense<0.000000e+00> : vector<6x32xf32>
    %9 = tpu.matmul %7, %8, %cst_10 {dimension_numbers = #tpu.dot_dimension_numbers<[1], [0], [0], [1], [0, 0, 1, 1], [], []>} : vector<6x32xf32>, vector<32x32xf32>, vector<6x32xf32> -> vector<6x32xf32>
    %c0_11 = arith.constant 0 : index
    %c0_12 = arith.constant 0 : index
    %10 = vector.load %arg0[%c0_11, %c0_12] : memref<6x6xf32, #tpu.memory_space<vmem>>, vector<6x6xf32>
    %cst_13 = arith.constant dense<0.000000e+00> : vector<6x32xf32>
    %11 = tpu.matmul %10, %9, %cst_13 {dimension_numbers = #tpu.dot_dimension_numbers<[1], [0], [0], [1], [0, 0, 1, 1], [], []>} : vector<6x6xf32>, vector<6x32xf32>, vector<6x32xf32> -> vector<6x32xf32>
    %c0_14 = arith.constant 0 : index
    %c0_15 = arith.constant 0 : index
    %12 = vector.load %arg5[%c0_14, %c0_15] : memref<1x32xf32, #tpu.memory_space<vmem>>, vector<1x32xf32>
    %13 = vector.broadcast %12 : vector<1x32xf32> to vector<6x32xf32>
    %14 = arith.addf %11, %13 : vector<6x32xf32>
    %cst_16 = arith.constant dense<0.000000e+00> : vector<32xf32>
    %15 = vector.multi_reduction <add>, %14, %cst_16 [0] : vector<6x32xf32> to vector<32xf32>
    %16 = vector.shape_cast %15 : vector<32xf32> to vector<1x32xf32>
    %cst_17 = arith.constant 6.000000e+00 : f32
    %17 = vector.broadcast %cst_17 : f32 to vector<1x32xf32>
    %18 = arith.divf %16, %17 : vector<1x32xf32>
    %c0_18 = arith.constant 0 : index
    %c0_19 = arith.constant 0 : index
    %19 = vector.load %arg6[%c0_18, %c0_19] : memref<1x32xf32, #tpu.memory_space<vmem>>, vector<1x32xf32>
    tpu.vector_store %arg6[%c0_18, %c0_19], %18 {strides = array<i32>} : memref<1x32xf32, #tpu.memory_space<vmem>>, vector<1x32xf32>,
    return
  }
}

module attributes {stable_mosaic.version = 11 : i64} {
  func.func @_linear_kernel(%arg0: i32, %arg1: i32, %arg2: memref<16x32xf32, #tpu.memory_space<vmem>>, %arg3: memref<32x128xf32, #tpu.memory_space<vmem>>, %arg4: memref<1x128xf32, #tpu.memory_space<vmem>>, %arg5: memref<16x128xf32, #tpu.memory_space<vmem>>) attributes {dimension_semantics = [#tpu.dimension_semantics<parallel>, #tpu.dimension_semantics<parallel>], iteration_bounds = array<i64: 1, 1>, scalar_prefetch = 0 : i64, scratch_operands = 0 : i64, tpu.core_type = #tpu.core_type<tc>, window_params = [{transform_indices = @transform_0, window_bounds = array<i64: 16, 32>}, {transform_indices = @transform_1, window_bounds = array<i64: 32, 128>}, {transform_indices = @transform_2, window_bounds = array<i64: 1, 128>}, {transform_indices = @transform_3, window_bounds = array<i64: 16, 128>}]} {
    %c0 = arith.constant 0 : index
    %c0_0 = arith.constant 0 : index
    %0 = vector.load %arg2[%c0, %c0_0] : memref<16x32xf32, #tpu.memory_space<vmem>>, vector<16x32xf32>
    %c0_1 = arith.constant 0 : index
    %c0_2 = arith.constant 0 : index
    %1 = vector.load %arg3[%c0_1, %c0_2] : memref<32x128xf32, #tpu.memory_space<vmem>>, vector<32x128xf32>
    %cst = arith.constant dense<0.000000e+00> : vector<16x128xf32>
    %2 = tpu.matmul %0, %1, %cst {dimension_numbers = #tpu.dot_dimension_numbers<[1], [0], [0], [1], [0, 0, 1, 1], [], []>} : vector<16x32xf32>, vector<32x128xf32>, vector<16x128xf32> -> vector<16x128xf32>
    %c0_3 = arith.constant 0 : index
    %c0_4 = arith.constant 0 : index
    %3 = vector.load %arg4[%c0_3, %c0_4] : memref<1x128xf32, #tpu.memory_space<vmem>>, vector<1x128xf32>
    %4 = vector.broadcast %3 : vector<1x128xf32> to vector<16x128xf32>
    %5 = arith.addf %2, %4 : vector<16x128xf32>
    %c0_5 = arith.constant 0 : index
    %c0_6 = arith.constant 0 : index
    %6 = vector.load %arg5[%c0_5, %c0_6] : memref<16x128xf32, #tpu.memory_space<vmem>>, vector<16x128xf32>
    tpu.vector_store %arg5[%c0_5, %c0_6], %5 {strides = array<i32>} : memref<16x128xf32, #tpu.memory_space<vmem>>, vector<16x128xf32>,
    return
  }
  func.func @transform_0(%arg0: i32, %arg1: i32) -> (i32, i32) {
    %c0_i32 = arith.constant 0 : i32
    %c0_i32_0 = arith.constant 0 : i32
    return %arg0, %c0_i32 : i32, i32
  }
  func.func @transform_1(%arg0: i32, %arg1: i32) -> (i32, i32) {
    %c0_i32 = arith.constant 0 : i32
    %c0_i32_0 = arith.constant 0 : i32
    return %c0_i32, %arg1 : i32, i32
  }
  func.func @transform_2(%arg0: i32, %arg1: i32) -> (i32, i32) {
    %c0_i32 = arith.constant 0 : i32
    %c0_i32_0 = arith.constant 0 : i32
    return %c0_i32, %arg1 : i32, i32
  }
  func.func @transform_3(%arg0: i32, %arg1: i32) -> (i32, i32) {
    %c0_i32 = arith.constant 0 : i32
    return %arg0, %arg1 : i32, i32
  }
}

module attributes {stable_mosaic.version = 11 : i64} {
  func.func @_lstm_mean_kernel(%arg0: memref<8x2x128xf32, #tpu.memory_space<vmem>>, %arg1: memref<32x128xf32, #tpu.memory_space<vmem>>, %arg2: memref<2x32xf32, #tpu.memory_space<vmem>>) attributes {dimension_semantics = [], scalar_prefetch = 0 : i64, scratch_operands = 0 : i64, tpu.core_type = #tpu.core_type<tc>} {
    %cst = arith.constant 0.000000e+00 : f32
    %0 = vector.broadcast %cst : f32 to vector<2x32xf32>
    %c0_i32 = arith.constant 0 : i32
    %1 = arith.index_cast %c0_i32 : i32 to index
    %c0 = arith.constant 0 : index
    %c0_0 = arith.constant 0 : index
    %2 = vector.load %arg0[%1, %c0, %c0_0] : memref<8x2x128xf32, #tpu.memory_space<vmem>>, vector<1x2x128xf32>
    %3 = vector.shape_cast %2 : vector<1x2x128xf32> to vector<2x128xf32>
    %c0_1 = arith.constant 0 : index
    %c0_2 = arith.constant 0 : index
    %4 = vector.load %arg1[%c0_1, %c0_2] : memref<32x128xf32, #tpu.memory_space<vmem>>, vector<32x128xf32>
    %cst_3 = arith.constant dense<0.000000e+00> : vector<2x128xf32>
    %5 = tpu.matmul %0, %4, %cst_3 {dimension_numbers = #tpu.dot_dimension_numbers<[1], [0], [0], [1], [0, 0, 1, 1], [], []>} : vector<2x32xf32>, vector<32x128xf32>, vector<2x128xf32> -> vector<2x128xf32>
    %6 = arith.addf %3, %5 : vector<2x128xf32>
    %7 = vector.extract_strided_slice %6 {offsets = [0, 0], sizes = [2, 32], strides = [1, 1]} : vector<2x128xf32> to vector<2x32xf32>
    %8 = arith.negf %7 : vector<2x32xf32>
    %9 = math.exp %8 : vector<2x32xf32>
    %cst_4 = arith.constant 1.000000e+00 : f32
    %10 = vector.broadcast %cst_4 : f32 to vector<2x32xf32>
    %11 = arith.addf %10, %9 : vector<2x32xf32>
    %12 = arith.divf %10, %11 : vector<2x32xf32>
    %13 = vector.extract_strided_slice %6 {offsets = [0, 32], sizes = [2, 32], strides = [1, 1]} : vector<2x128xf32> to vector<2x32xf32>
    %14 = arith.negf %13 : vector<2x32xf32>
    %15 = math.exp %14 : vector<2x32xf32>
    %cst_5 = arith.constant 1.000000e+00 : f32
    %16 = vector.broadcast %cst_5 : f32 to vector<2x32xf32>
    %17 = arith.addf %16, %15 : vector<2x32xf32>
    %18 = arith.divf %16, %17 : vector<2x32xf32>
    %19 = vector.extract_strided_slice %6 {offsets = [0, 64], sizes = [2, 32], strides = [1, 1]} : vector<2x128xf32> to vector<2x32xf32>
    %20 = math.tanh %19 : vector<2x32xf32>
    %21 = vector.extract_strided_slice %6 {offsets = [0, 96], sizes = [2, 32], strides = [1, 1]} : vector<2x128xf32> to vector<2x32xf32>
    %22 = arith.negf %21 : vector<2x32xf32>
    %23 = math.exp %22 : vector<2x32xf32>
    %cst_6 = arith.constant 1.000000e+00 : f32
    %24 = vector.broadcast %cst_6 : f32 to vector<2x32xf32>
    %25 = arith.addf %24, %23 : vector<2x32xf32>
    %26 = arith.divf %24, %25 : vector<2x32xf32>
    %27 = arith.mulf %18, %0 : vector<2x32xf32>
    %28 = arith.mulf %12, %20 : vector<2x32xf32>
    %29 = arith.addf %27, %28 : vector<2x32xf32>
    %30 = math.tanh %29 : vector<2x32xf32>
    %31 = arith.mulf %26, %30 : vector<2x32xf32>
    %32 = arith.addf %0, %31 : vector<2x32xf32>
    %c1_i32 = arith.constant 1 : i32
    %33 = arith.index_cast %c1_i32 : i32 to index
    %c0_7 = arith.constant 0 : index
    %c0_8 = arith.constant 0 : index
    %34 = vector.load %arg0[%33, %c0_7, %c0_8] : memref<8x2x128xf32, #tpu.memory_space<vmem>>, vector<1x2x128xf32>
    %35 = vector.shape_cast %34 : vector<1x2x128xf32> to vector<2x128xf32>
    %c0_9 = arith.constant 0 : index
    %c0_10 = arith.constant 0 : index
    %36 = vector.load %arg1[%c0_9, %c0_10] : memref<32x128xf32, #tpu.memory_space<vmem>>, vector<32x128xf32>
    %cst_11 = arith.constant dense<0.000000e+00> : vector<2x128xf32>
    %37 = tpu.matmul %31, %36, %cst_11 {dimension_numbers = #tpu.dot_dimension_numbers<[1], [0], [0], [1], [0, 0, 1, 1], [], []>} : vector<2x32xf32>, vector<32x128xf32>, vector<2x128xf32> -> vector<2x128xf32>
    %38 = arith.addf %35, %37 : vector<2x128xf32>
    %39 = vector.extract_strided_slice %38 {offsets = [0, 0], sizes = [2, 32], strides = [1, 1]} : vector<2x128xf32> to vector<2x32xf32>
    %40 = arith.negf %39 : vector<2x32xf32>
    %41 = math.exp %40 : vector<2x32xf32>
    %cst_12 = arith.constant 1.000000e+00 : f32
    %42 = vector.broadcast %cst_12 : f32 to vector<2x32xf32>
    %43 = arith.addf %42, %41 : vector<2x32xf32>
    %44 = arith.divf %42, %43 : vector<2x32xf32>
    %45 = vector.extract_strided_slice %38 {offsets = [0, 32], sizes = [2, 32], strides = [1, 1]} : vector<2x128xf32> to vector<2x32xf32>
    %46 = arith.negf %45 : vector<2x32xf32>
    %47 = math.exp %46 : vector<2x32xf32>
    %cst_13 = arith.constant 1.000000e+00 : f32
    %48 = vector.broadcast %cst_13 : f32 to vector<2x32xf32>
    %49 = arith.addf %48, %47 : vector<2x32xf32>
    %50 = arith.divf %48, %49 : vector<2x32xf32>
    %51 = vector.extract_strided_slice %38 {offsets = [0, 64], sizes = [2, 32], strides = [1, 1]} : vector<2x128xf32> to vector<2x32xf32>
    %52 = math.tanh %51 : vector<2x32xf32>
    %53 = vector.extract_strided_slice %38 {offsets = [0, 96], sizes = [2, 32], strides = [1, 1]} : vector<2x128xf32> to vector<2x32xf32>
    %54 = arith.negf %53 : vector<2x32xf32>
    %55 = math.exp %54 : vector<2x32xf32>
    %cst_14 = arith.constant 1.000000e+00 : f32
    %56 = vector.broadcast %cst_14 : f32 to vector<2x32xf32>
    %57 = arith.addf %56, %55 : vector<2x32xf32>
    %58 = arith.divf %56, %57 : vector<2x32xf32>
    %59 = arith.mulf %50, %29 : vector<2x32xf32>
    %60 = arith.mulf %44, %52 : vector<2x32xf32>
    %61 = arith.addf %59, %60 : vector<2x32xf32>
    %62 = math.tanh %61 : vector<2x32xf32>
    %63 = arith.mulf %58, %62 : vector<2x32xf32>
    %64 = arith.addf %32, %63 : vector<2x32xf32>
    %c2_i32 = arith.constant 2 : i32
    %65 = arith.index_cast %c2_i32 : i32 to index
    %c0_15 = arith.constant 0 : index
    %c0_16 = arith.constant 0 : index
    %66 = vector.load %arg0[%65, %c0_15, %c0_16] : memref<8x2x128xf32, #tpu.memory_space<vmem>>, vector<1x2x128xf32>
    %67 = vector.shape_cast %66 : vector<1x2x128xf32> to vector<2x128xf32>
    %c0_17 = arith.constant 0 : index
    %c0_18 = arith.constant 0 : index
    %68 = vector.load %arg1[%c0_17, %c0_18] : memref<32x128xf32, #tpu.memory_space<vmem>>, vector<32x128xf32>
    %cst_19 = arith.constant dense<0.000000e+00> : vector<2x128xf32>
    %69 = tpu.matmul %63, %68, %cst_19 {dimension_numbers = #tpu.dot_dimension_numbers<[1], [0], [0], [1], [0, 0, 1, 1], [], []>} : vector<2x32xf32>, vector<32x128xf32>, vector<2x128xf32> -> vector<2x128xf32>
    %70 = arith.addf %67, %69 : vector<2x128xf32>
    %71 = vector.extract_strided_slice %70 {offsets = [0, 0], sizes = [2, 32], strides = [1, 1]} : vector<2x128xf32> to vector<2x32xf32>
    %72 = arith.negf %71 : vector<2x32xf32>
    %73 = math.exp %72 : vector<2x32xf32>
    %cst_20 = arith.constant 1.000000e+00 : f32
    %74 = vector.broadcast %cst_20 : f32 to vector<2x32xf32>
    %75 = arith.addf %74, %73 : vector<2x32xf32>
    %76 = arith.divf %74, %75 : vector<2x32xf32>
    %77 = vector.extract_strided_slice %70 {offsets = [0, 32], sizes = [2, 32], strides = [1, 1]} : vector<2x128xf32> to vector<2x32xf32>
    %78 = arith.negf %77 : vector<2x32xf32>
    %79 = math.exp %78 : vector<2x32xf32>
    %cst_21 = arith.constant 1.000000e+00 : f32
    %80 = vector.broadcast %cst_21 : f32 to vector<2x32xf32>
    %81 = arith.addf %80, %79 : vector<2x32xf32>
    %82 = arith.divf %80, %81 : vector<2x32xf32>
    %83 = vector.extract_strided_slice %70 {offsets = [0, 64], sizes = [2, 32], strides = [1, 1]} : vector<2x128xf32> to vector<2x32xf32>
    %84 = math.tanh %83 : vector<2x32xf32>
    %85 = vector.extract_strided_slice %70 {offsets = [0, 96], sizes = [2, 32], strides = [1, 1]} : vector<2x128xf32> to vector<2x32xf32>
    %86 = arith.negf %85 : vector<2x32xf32>
    %87 = math.exp %86 : vector<2x32xf32>
    %cst_22 = arith.constant 1.000000e+00 : f32
    %88 = vector.broadcast %cst_22 : f32 to vector<2x32xf32>
    %89 = arith.addf %88, %87 : vector<2x32xf32>
    %90 = arith.divf %88, %89 : vector<2x32xf32>
    %91 = arith.mulf %82, %61 : vector<2x32xf32>
    %92 = arith.mulf %76, %84 : vector<2x32xf32>
    %93 = arith.addf %91, %92 : vector<2x32xf32>
    %94 = math.tanh %93 : vector<2x32xf32>
    %95 = arith.mulf %90, %94 : vector<2x32xf32>
    %96 = arith.addf %64, %95 : vector<2x32xf32>
    %c3_i32 = arith.constant 3 : i32
    %97 = arith.index_cast %c3_i32 : i32 to index
    %c0_23 = arith.constant 0 : index
    %c0_24 = arith.constant 0 : index
    %98 = vector.load %arg0[%97, %c0_23, %c0_24] : memref<8x2x128xf32, #tpu.memory_space<vmem>>, vector<1x2x128xf32>
    %99 = vector.shape_cast %98 : vector<1x2x128xf32> to vector<2x128xf32>
    %c0_25 = arith.constant 0 : index
    %c0_26 = arith.constant 0 : index
    %100 = vector.load %arg1[%c0_25, %c0_26] : memref<32x128xf32, #tpu.memory_space<vmem>>, vector<32x128xf32>
    %cst_27 = arith.constant dense<0.000000e+00> : vector<2x128xf32>
    %101 = tpu.matmul %95, %100, %cst_27 {dimension_numbers = #tpu.dot_dimension_numbers<[1], [0], [0], [1], [0, 0, 1, 1], [], []>} : vector<2x32xf32>, vector<32x128xf32>, vector<2x128xf32> -> vector<2x128xf32>
    %102 = arith.addf %99, %101 : vector<2x128xf32>
    %103 = vector.extract_strided_slice %102 {offsets = [0, 0], sizes = [2, 32], strides = [1, 1]} : vector<2x128xf32> to vector<2x32xf32>
    %104 = arith.negf %103 : vector<2x32xf32>
    %105 = math.exp %104 : vector<2x32xf32>
    %cst_28 = arith.constant 1.000000e+00 : f32
    %106 = vector.broadcast %cst_28 : f32 to vector<2x32xf32>
    %107 = arith.addf %106, %105 : vector<2x32xf32>
    %108 = arith.divf %106, %107 : vector<2x32xf32>
    %109 = vector.extract_strided_slice %102 {offsets = [0, 32], sizes = [2, 32], strides = [1, 1]} : vector<2x128xf32> to vector<2x32xf32>
    %110 = arith.negf %109 : vector<2x32xf32>
    %111 = math.exp %110 : vector<2x32xf32>
    %cst_29 = arith.constant 1.000000e+00 : f32
    %112 = vector.broadcast %cst_29 : f32 to vector<2x32xf32>
    %113 = arith.addf %112, %111 : vector<2x32xf32>
    %114 = arith.divf %112, %113 : vector<2x32xf32>
    %115 = vector.extract_strided_slice %102 {offsets = [0, 64], sizes = [2, 32], strides = [1, 1]} : vector<2x128xf32> to vector<2x32xf32>
    %116 = math.tanh %115 : vector<2x32xf32>
    %117 = vector.extract_strided_slice %102 {offsets = [0, 96], sizes = [2, 32], strides = [1, 1]} : vector<2x128xf32> to vector<2x32xf32>
    %118 = arith.negf %117 : vector<2x32xf32>
    %119 = math.exp %118 : vector<2x32xf32>
    %cst_30 = arith.constant 1.000000e+00 : f32
    %120 = vector.broadcast %cst_30 : f32 to vector<2x32xf32>
    %121 = arith.addf %120, %119 : vector<2x32xf32>
    %122 = arith.divf %120, %121 : vector<2x32xf32>
    %123 = arith.mulf %114, %93 : vector<2x32xf32>
    %124 = arith.mulf %108, %116 : vector<2x32xf32>
    %125 = arith.addf %123, %124 : vector<2x32xf32>
    %126 = math.tanh %125 : vector<2x32xf32>
    %127 = arith.mulf %122, %126 : vector<2x32xf32>
    %128 = arith.addf %96, %127 : vector<2x32xf32>
    %c4_i32 = arith.constant 4 : i32
    %129 = arith.index_cast %c4_i32 : i32 to index
    %c0_31 = arith.constant 0 : index
    %c0_32 = arith.constant 0 : index
    %130 = vector.load %arg0[%129, %c0_31, %c0_32] : memref<8x2x128xf32, #tpu.memory_space<vmem>>, vector<1x2x128xf32>
    %131 = vector.shape_cast %130 : vector<1x2x128xf32> to vector<2x128xf32>
    %c0_33 = arith.constant 0 : index
    %c0_34 = arith.constant 0 : index
    %132 = vector.load %arg1[%c0_33, %c0_34] : memref<32x128xf32, #tpu.memory_space<vmem>>, vector<32x128xf32>
    %cst_35 = arith.constant dense<0.000000e+00> : vector<2x128xf32>
    %133 = tpu.matmul %127, %132, %cst_35 {dimension_numbers = #tpu.dot_dimension_numbers<[1], [0], [0], [1], [0, 0, 1, 1], [], []>} : vector<2x32xf32>, vector<32x128xf32>, vector<2x128xf32> -> vector<2x128xf32>
    %134 = arith.addf %131, %133 : vector<2x128xf32>
    %135 = vector.extract_strided_slice %134 {offsets = [0, 0], sizes = [2, 32], strides = [1, 1]} : vector<2x128xf32> to vector<2x32xf32>
    %136 = arith.negf %135 : vector<2x32xf32>
    %137 = math.exp %136 : vector<2x32xf32>
    %cst_36 = arith.constant 1.000000e+00 : f32
    %138 = vector.broadcast %cst_36 : f32 to vector<2x32xf32>
    %139 = arith.addf %138, %137 : vector<2x32xf32>
    %140 = arith.divf %138, %139 : vector<2x32xf32>
    %141 = vector.extract_strided_slice %134 {offsets = [0, 32], sizes = [2, 32], strides = [1, 1]} : vector<2x128xf32> to vector<2x32xf32>
    %142 = arith.negf %141 : vector<2x32xf32>
    %143 = math.exp %142 : vector<2x32xf32>
    %cst_37 = arith.constant 1.000000e+00 : f32
    %144 = vector.broadcast %cst_37 : f32 to vector<2x32xf32>
    %145 = arith.addf %144, %143 : vector<2x32xf32>
    %146 = arith.divf %144, %145 : vector<2x32xf32>
    %147 = vector.extract_strided_slice %134 {offsets = [0, 64], sizes = [2, 32], strides = [1, 1]} : vector<2x128xf32> to vector<2x32xf32>
    %148 = math.tanh %147 : vector<2x32xf32>
    %149 = vector.extract_strided_slice %134 {offsets = [0, 96], sizes = [2, 32], strides = [1, 1]} : vector<2x128xf32> to vector<2x32xf32>
    %150 = arith.negf %149 : vector<2x32xf32>
    %151 = math.exp %150 : vector<2x32xf32>
    %cst_38 = arith.constant 1.000000e+00 : f32
    %152 = vector.broadcast %cst_38 : f32 to vector<2x32xf32>
    %153 = arith.addf %152, %151 : vector<2x32xf32>
    %154 = arith.divf %152, %153 : vector<2x32xf32>
    %155 = arith.mulf %146, %125 : vector<2x32xf32>
    %156 = arith.mulf %140, %148 : vector<2x32xf32>
    %157 = arith.addf %155, %156 : vector<2x32xf32>
    %158 = math.tanh %157 : vector<2x32xf32>
    %159 = arith.mulf %154, %158 : vector<2x32xf32>
    %160 = arith.addf %128, %159 : vector<2x32xf32>
    %c5_i32 = arith.constant 5 : i32
    %161 = arith.index_cast %c5_i32 : i32 to index
    %c0_39 = arith.constant 0 : index
    %c0_40 = arith.constant 0 : index
    %162 = vector.load %arg0[%161, %c0_39, %c0_40] : memref<8x2x128xf32, #tpu.memory_space<vmem>>, vector<1x2x128xf32>
    %163 = vector.shape_cast %162 : vector<1x2x128xf32> to vector<2x128xf32>
    %c0_41 = arith.constant 0 : index
    %c0_42 = arith.constant 0 : index
    %164 = vector.load %arg1[%c0_41, %c0_42] : memref<32x128xf32, #tpu.memory_space<vmem>>, vector<32x128xf32>
    %cst_43 = arith.constant dense<0.000000e+00> : vector<2x128xf32>
    %165 = tpu.matmul %159, %164, %cst_43 {dimension_numbers = #tpu.dot_dimension_numbers<[1], [0], [0], [1], [0, 0, 1, 1], [], []>} : vector<2x32xf32>, vector<32x128xf32>, vector<2x128xf32> -> vector<2x128xf32>
    %166 = arith.addf %163, %165 : vector<2x128xf32>
    %167 = vector.extract_strided_slice %166 {offsets = [0, 0], sizes = [2, 32], strides = [1, 1]} : vector<2x128xf32> to vector<2x32xf32>
    %168 = arith.negf %167 : vector<2x32xf32>
    %169 = math.exp %168 : vector<2x32xf32>
    %cst_44 = arith.constant 1.000000e+00 : f32
    %170 = vector.broadcast %cst_44 : f32 to vector<2x32xf32>
    %171 = arith.addf %170, %169 : vector<2x32xf32>
    %172 = arith.divf %170, %171 : vector<2x32xf32>
    %173 = vector.extract_strided_slice %166 {offsets = [0, 32], sizes = [2, 32], strides = [1, 1]} : vector<2x128xf32> to vector<2x32xf32>
    %174 = arith.negf %173 : vector<2x32xf32>
    %175 = math.exp %174 : vector<2x32xf32>
    %cst_45 = arith.constant 1.000000e+00 : f32
    %176 = vector.broadcast %cst_45 : f32 to vector<2x32xf32>
    %177 = arith.addf %176, %175 : vector<2x32xf32>
    %178 = arith.divf %176, %177 : vector<2x32xf32>
    %179 = vector.extract_strided_slice %166 {offsets = [0, 64], sizes = [2, 32], strides = [1, 1]} : vector<2x128xf32> to vector<2x32xf32>
    %180 = math.tanh %179 : vector<2x32xf32>
    %181 = vector.extract_strided_slice %166 {offsets = [0, 96], sizes = [2, 32], strides = [1, 1]} : vector<2x128xf32> to vector<2x32xf32>
    %182 = arith.negf %181 : vector<2x32xf32>
    %183 = math.exp %182 : vector<2x32xf32>
    %cst_46 = arith.constant 1.000000e+00 : f32
    %184 = vector.broadcast %cst_46 : f32 to vector<2x32xf32>
    %185 = arith.addf %184, %183 : vector<2x32xf32>
    %186 = arith.divf %184, %185 : vector<2x32xf32>
    %187 = arith.mulf %178, %157 : vector<2x32xf32>
    %188 = arith.mulf %172, %180 : vector<2x32xf32>
    %189 = arith.addf %187, %188 : vector<2x32xf32>
    %190 = math.tanh %189 : vector<2x32xf32>
    %191 = arith.mulf %186, %190 : vector<2x32xf32>
    %192 = arith.addf %160, %191 : vector<2x32xf32>
    %c6_i32 = arith.constant 6 : i32
    %193 = arith.index_cast %c6_i32 : i32 to index
    %c0_47 = arith.constant 0 : index
    %c0_48 = arith.constant 0 : index
    %194 = vector.load %arg0[%193, %c0_47, %c0_48] : memref<8x2x128xf32, #tpu.memory_space<vmem>>, vector<1x2x128xf32>
    %195 = vector.shape_cast %194 : vector<1x2x128xf32> to vector<2x128xf32>
    %c0_49 = arith.constant 0 : index
    %c0_50 = arith.constant 0 : index
    %196 = vector.load %arg1[%c0_49, %c0_50] : memref<32x128xf32, #tpu.memory_space<vmem>>, vector<32x128xf32>
    %cst_51 = arith.constant dense<0.000000e+00> : vector<2x128xf32>
    %197 = tpu.matmul %191, %196, %cst_51 {dimension_numbers = #tpu.dot_dimension_numbers<[1], [0], [0], [1], [0, 0, 1, 1], [], []>} : vector<2x32xf32>, vector<32x128xf32>, vector<2x128xf32> -> vector<2x128xf32>
    %198 = arith.addf %195, %197 : vector<2x128xf32>
    %199 = vector.extract_strided_slice %198 {offsets = [0, 0], sizes = [2, 32], strides = [1, 1]} : vector<2x128xf32> to vector<2x32xf32>
    %200 = arith.negf %199 : vector<2x32xf32>
    %201 = math.exp %200 : vector<2x32xf32>
    %cst_52 = arith.constant 1.000000e+00 : f32
    %202 = vector.broadcast %cst_52 : f32 to vector<2x32xf32>
    %203 = arith.addf %202, %201 : vector<2x32xf32>
    %204 = arith.divf %202, %203 : vector<2x32xf32>
    %205 = vector.extract_strided_slice %198 {offsets = [0, 32], sizes = [2, 32], strides = [1, 1]} : vector<2x128xf32> to vector<2x32xf32>
    %206 = arith.negf %205 : vector<2x32xf32>
    %207 = math.exp %206 : vector<2x32xf32>
    %cst_53 = arith.constant 1.000000e+00 : f32
    %208 = vector.broadcast %cst_53 : f32 to vector<2x32xf32>
    %209 = arith.addf %208, %207 : vector<2x32xf32>
    %210 = arith.divf %208, %209 : vector<2x32xf32>
    %211 = vector.extract_strided_slice %198 {offsets = [0, 64], sizes = [2, 32], strides = [1, 1]} : vector<2x128xf32> to vector<2x32xf32>
    %212 = math.tanh %211 : vector<2x32xf32>
    %213 = vector.extract_strided_slice %198 {offsets = [0, 96], sizes = [2, 32], strides = [1, 1]} : vector<2x128xf32> to vector<2x32xf32>
    %214 = arith.negf %213 : vector<2x32xf32>
    %215 = math.exp %214 : vector<2x32xf32>
    %cst_54 = arith.constant 1.000000e+00 : f32
    %216 = vector.broadcast %cst_54 : f32 to vector<2x32xf32>
    %217 = arith.addf %216, %215 : vector<2x32xf32>
    %218 = arith.divf %216, %217 : vector<2x32xf32>
    %219 = arith.mulf %210, %189 : vector<2x32xf32>
    %220 = arith.mulf %204, %212 : vector<2x32xf32>
    %221 = arith.addf %219, %220 : vector<2x32xf32>
    %222 = math.tanh %221 : vector<2x32xf32>
    %223 = arith.mulf %218, %222 : vector<2x32xf32>
    %224 = arith.addf %192, %223 : vector<2x32xf32>
    %c7_i32 = arith.constant 7 : i32
    %225 = arith.index_cast %c7_i32 : i32 to index
    %c0_55 = arith.constant 0 : index
    %c0_56 = arith.constant 0 : index
    %226 = vector.load %arg0[%225, %c0_55, %c0_56] : memref<8x2x128xf32, #tpu.memory_space<vmem>>, vector<1x2x128xf32>
    %227 = vector.shape_cast %226 : vector<1x2x128xf32> to vector<2x128xf32>
    %c0_57 = arith.constant 0 : index
    %c0_58 = arith.constant 0 : index
    %228 = vector.load %arg1[%c0_57, %c0_58] : memref<32x128xf32, #tpu.memory_space<vmem>>, vector<32x128xf32>
    %cst_59 = arith.constant dense<0.000000e+00> : vector<2x128xf32>
    %229 = tpu.matmul %223, %228, %cst_59 {dimension_numbers = #tpu.dot_dimension_numbers<[1], [0], [0], [1], [0, 0, 1, 1], [], []>} : vector<2x32xf32>, vector<32x128xf32>, vector<2x128xf32> -> vector<2x128xf32>
    %230 = arith.addf %227, %229 : vector<2x128xf32>
    %231 = vector.extract_strided_slice %230 {offsets = [0, 0], sizes = [2, 32], strides = [1, 1]} : vector<2x128xf32> to vector<2x32xf32>
    %232 = arith.negf %231 : vector<2x32xf32>
    %233 = math.exp %232 : vector<2x32xf32>
    %cst_60 = arith.constant 1.000000e+00 : f32
    %234 = vector.broadcast %cst_60 : f32 to vector<2x32xf32>
    %235 = arith.addf %234, %233 : vector<2x32xf32>
    %236 = arith.divf %234, %235 : vector<2x32xf32>
    %237 = vector.extract_strided_slice %230 {offsets = [0, 32], sizes = [2, 32], strides = [1, 1]} : vector<2x128xf32> to vector<2x32xf32>
    %238 = arith.negf %237 : vector<2x32xf32>
    %239 = math.exp %238 : vector<2x32xf32>
    %cst_61 = arith.constant 1.000000e+00 : f32
    %240 = vector.broadcast %cst_61 : f32 to vector<2x32xf32>
    %241 = arith.addf %240, %239 : vector<2x32xf32>
    %242 = arith.divf %240, %241 : vector<2x32xf32>
    %243 = vector.extract_strided_slice %230 {offsets = [0, 64], sizes = [2, 32], strides = [1, 1]} : vector<2x128xf32> to vector<2x32xf32>
    %244 = math.tanh %243 : vector<2x32xf32>
    %245 = vector.extract_strided_slice %230 {offsets = [0, 96], sizes = [2, 32], strides = [1, 1]} : vector<2x128xf32> to vector<2x32xf32>
    %246 = arith.negf %245 : vector<2x32xf32>
    %247 = math.exp %246 : vector<2x32xf32>
    %cst_62 = arith.constant 1.000000e+00 : f32
    %248 = vector.broadcast %cst_62 : f32 to vector<2x32xf32>
    %249 = arith.addf %248, %247 : vector<2x32xf32>
    %250 = arith.divf %248, %249 : vector<2x32xf32>
    %251 = arith.mulf %242, %221 : vector<2x32xf32>
    %252 = arith.mulf %236, %244 : vector<2x32xf32>
    %253 = arith.addf %251, %252 : vector<2x32xf32>
    %254 = math.tanh %253 : vector<2x32xf32>
    %255 = arith.mulf %250, %254 : vector<2x32xf32>
    %256 = arith.addf %224, %255 : vector<2x32xf32>
    %c8_i32 = arith.constant 8 : i32
    %cst_63 = arith.constant 1.250000e-01 : f32
    %257 = vector.broadcast %cst_63 : f32 to vector<2x32xf32>
    %258 = arith.mulf %256, %257 : vector<2x32xf32>
    %c0_64 = arith.constant 0 : index
    %c0_65 = arith.constant 0 : index
    %259 = vector.load %arg2[%c0_64, %c0_65] : memref<2x32xf32, #tpu.memory_space<vmem>>, vector<2x32xf32>
    tpu.vector_store %arg2[%c0_64, %c0_65], %258 {strides = array<i32>} : memref<2x32xf32, #tpu.memory_space<vmem>>, vector<2x32xf32>,
    return
  }
}

module attributes {stable_mosaic.version = 11 : i64} {
  func.func @_fusion_decoder_kernel(%arg0: memref<2x32xf32, #tpu.memory_space<vmem>>, %arg1: memref<1x32xf32, #tpu.memory_space<vmem>>, %arg2: memref<64x32xf32, #tpu.memory_space<vmem>>, %arg3: memref<1x32xf32, #tpu.memory_space<vmem>>, %arg4: memref<32x128xf32, #tpu.memory_space<vmem>>, %arg5: memref<1x128xf32, #tpu.memory_space<vmem>>, %arg6: memref<32x128xf32, #tpu.memory_space<vmem>>, %arg7: memref<2x8x32xf32, #tpu.memory_space<vmem>>, %arg8: memref<8x2x32xf32, #tpu.memory_space<vmem>>) attributes {dimension_semantics = [], scalar_prefetch = 0 : i64, scratch_operands = 1 : i64, tpu.core_type = #tpu.core_type<tc>} {
    %c0 = arith.constant 0 : index
    %c0_0 = arith.constant 0 : index
    %0 = vector.load %arg0[%c0, %c0_0] : memref<2x32xf32, #tpu.memory_space<vmem>>, vector<2x32xf32>
    %c0_1 = arith.constant 0 : index
    %c0_2 = arith.constant 0 : index
    %1 = vector.load %arg2[%c0_1, %c0_2] : memref<64x32xf32, #tpu.memory_space<vmem>>, vector<32x32xf32>
    %cst = arith.constant dense<0.000000e+00> : vector<2x32xf32>
    %2 = tpu.matmul %0, %1, %cst {dimension_numbers = #tpu.dot_dimension_numbers<[1], [0], [0], [1], [0, 0, 1, 1], [], []>} : vector<2x32xf32>, vector<32x32xf32>, vector<2x32xf32> -> vector<2x32xf32>
    %c0_3 = arith.constant 0 : index
    %c0_4 = arith.constant 0 : index
    %3 = vector.load %arg1[%c0_3, %c0_4] : memref<1x32xf32, #tpu.memory_space<vmem>>, vector<1x32xf32>
    %c32 = arith.constant 32 : index
    %c0_5 = arith.constant 0 : index
    %4 = vector.load %arg2[%c32, %c0_5] : memref<64x32xf32, #tpu.memory_space<vmem>>, vector<32x32xf32>
    %cst_6 = arith.constant dense<0.000000e+00> : vector<1x32xf32>
    %5 = tpu.matmul %3, %4, %cst_6 {dimension_numbers = #tpu.dot_dimension_numbers<[1], [0], [0], [1], [0, 0, 1, 1], [], []>} : vector<1x32xf32>, vector<32x32xf32>, vector<1x32xf32> -> vector<1x32xf32>
    %6 = vector.broadcast %5 : vector<1x32xf32> to vector<2x32xf32>
    %7 = arith.addf %2, %6 : vector<2x32xf32>
    %c0_7 = arith.constant 0 : index
    %c0_8 = arith.constant 0 : index
    %8 = vector.load %arg3[%c0_7, %c0_8] : memref<1x32xf32, #tpu.memory_space<vmem>>, vector<1x32xf32>
    %9 = vector.broadcast %8 : vector<1x32xf32> to vector<2x32xf32>
    %10 = arith.addf %7, %9 : vector<2x32xf32>
    %c0_9 = arith.constant 0 : index
    %c0_10 = arith.constant 0 : index
    %11 = vector.load %arg4[%c0_9, %c0_10] : memref<32x128xf32, #tpu.memory_space<vmem>>, vector<32x128xf32>
    %cst_11 = arith.constant dense<0.000000e+00> : vector<2x128xf32>
    %12 = tpu.matmul %10, %11, %cst_11 {dimension_numbers = #tpu.dot_dimension_numbers<[1], [0], [0], [1], [0, 0, 1, 1], [], []>} : vector<2x32xf32>, vector<32x128xf32>, vector<2x128xf32> -> vector<2x128xf32>
    %c0_12 = arith.constant 0 : index
    %c0_13 = arith.constant 0 : index
    %13 = vector.load %arg5[%c0_12, %c0_13] : memref<1x128xf32, #tpu.memory_space<vmem>>, vector<1x128xf32>
    %14 = vector.broadcast %13 : vector<1x128xf32> to vector<2x128xf32>
    %15 = arith.addf %12, %14 : vector<2x128xf32>
    %cst_14 = arith.constant 0.000000e+00 : f32
    %16 = vector.broadcast %cst_14 : f32 to vector<2x32xf32>
    %c0_i32 = arith.constant 0 : i32
    %c0_15 = arith.constant 0 : index
    %c0_16 = arith.constant 0 : index
    %17 = vector.load %arg6[%c0_15, %c0_16] : memref<32x128xf32, #tpu.memory_space<vmem>>, vector<32x128xf32>
    %cst_17 = arith.constant dense<0.000000e+00> : vector<2x128xf32>
    %18 = tpu.matmul %16, %17, %cst_17 {dimension_numbers = #tpu.dot_dimension_numbers<[1], [0], [0], [1], [0, 0, 1, 1], [], []>} : vector<2x32xf32>, vector<32x128xf32>, vector<2x128xf32> -> vector<2x128xf32>
    %19 = arith.addf %15, %18 : vector<2x128xf32>
    %20 = vector.extract_strided_slice %19 {offsets = [0, 0], sizes = [2, 32], strides = [1, 1]} : vector<2x128xf32> to vector<2x32xf32>
    %21 = arith.negf %20 : vector<2x32xf32>
    %22 = math.exp %21 : vector<2x32xf32>
    %cst_18 = arith.constant 1.000000e+00 : f32
    %23 = vector.broadcast %cst_18 : f32 to vector<2x32xf32>
    %24 = arith.addf %23, %22 : vector<2x32xf32>
    %25 = arith.divf %23, %24 : vector<2x32xf32>
    %26 = vector.extract_strided_slice %19 {offsets = [0, 32], sizes = [2, 32], strides = [1, 1]} : vector<2x128xf32> to vector<2x32xf32>
    %27 = arith.negf %26 : vector<2x32xf32>
    %28 = math.exp %27 : vector<2x32xf32>
    %cst_19 = arith.constant 1.000000e+00 : f32
    %29 = vector.broadcast %cst_19 : f32 to vector<2x32xf32>
    %30 = arith.addf %29, %28 : vector<2x32xf32>
    %31 = arith.divf %29, %30 : vector<2x32xf32>
    %32 = vector.extract_strided_slice %19 {offsets = [0, 64], sizes = [2, 32], strides = [1, 1]} : vector<2x128xf32> to vector<2x32xf32>
    %33 = math.tanh %32 : vector<2x32xf32>
    %34 = vector.extract_strided_slice %19 {offsets = [0, 96], sizes = [2, 32], strides = [1, 1]} : vector<2x128xf32> to vector<2x32xf32>
    %35 = arith.negf %34 : vector<2x32xf32>
    %36 = math.exp %35 : vector<2x32xf32>
    %cst_20 = arith.constant 1.000000e+00 : f32
    %37 = vector.broadcast %cst_20 : f32 to vector<2x32xf32>
    %38 = arith.addf %37, %36 : vector<2x32xf32>
    %39 = arith.divf %37, %38 : vector<2x32xf32>
    %40 = arith.mulf %31, %16 : vector<2x32xf32>
    %41 = arith.mulf %25, %33 : vector<2x32xf32>
    %42 = arith.addf %40, %41 : vector<2x32xf32>
    %43 = math.tanh %42 : vector<2x32xf32>
    %44 = arith.mulf %39, %43 : vector<2x32xf32>
    %45 = arith.index_cast %c0_i32 : i32 to index
    %c0_21 = arith.constant 0 : index
    %c0_22 = arith.constant 0 : index
    %46 = vector.load %arg8[%45, %c0_21, %c0_22] : memref<8x2x32xf32, #tpu.memory_space<vmem>>, vector<1x2x32xf32>
    %47 = vector.shape_cast %46 : vector<1x2x32xf32> to vector<2x32xf32>
    %48 = vector.shape_cast %44 : vector<2x32xf32> to vector<1x2x32xf32>
    tpu.vector_store %arg8[%45, %c0_21, %c0_22], %48 {strides = array<i32>} : memref<8x2x32xf32, #tpu.memory_space<vmem>>, vector<1x2x32xf32>,
    %c1_i32 = arith.constant 1 : i32
    %c0_23 = arith.constant 0 : index
    %c0_24 = arith.constant 0 : index
    %49 = vector.load %arg6[%c0_23, %c0_24] : memref<32x128xf32, #tpu.memory_space<vmem>>, vector<32x128xf32>
    %cst_25 = arith.constant dense<0.000000e+00> : vector<2x128xf32>
    %50 = tpu.matmul %44, %49, %cst_25 {dimension_numbers = #tpu.dot_dimension_numbers<[1], [0], [0], [1], [0, 0, 1, 1], [], []>} : vector<2x32xf32>, vector<32x128xf32>, vector<2x128xf32> -> vector<2x128xf32>
    %51 = arith.addf %15, %50 : vector<2x128xf32>
    %52 = vector.extract_strided_slice %51 {offsets = [0, 0], sizes = [2, 32], strides = [1, 1]} : vector<2x128xf32> to vector<2x32xf32>
    %53 = arith.negf %52 : vector<2x32xf32>
    %54 = math.exp %53 : vector<2x32xf32>
    %cst_26 = arith.constant 1.000000e+00 : f32
    %55 = vector.broadcast %cst_26 : f32 to vector<2x32xf32>
    %56 = arith.addf %55, %54 : vector<2x32xf32>
    %57 = arith.divf %55, %56 : vector<2x32xf32>
    %58 = vector.extract_strided_slice %51 {offsets = [0, 32], sizes = [2, 32], strides = [1, 1]} : vector<2x128xf32> to vector<2x32xf32>
    %59 = arith.negf %58 : vector<2x32xf32>
    %60 = math.exp %59 : vector<2x32xf32>
    %cst_27 = arith.constant 1.000000e+00 : f32
    %61 = vector.broadcast %cst_27 : f32 to vector<2x32xf32>
    %62 = arith.addf %61, %60 : vector<2x32xf32>
    %63 = arith.divf %61, %62 : vector<2x32xf32>
    %64 = vector.extract_strided_slice %51 {offsets = [0, 64], sizes = [2, 32], strides = [1, 1]} : vector<2x128xf32> to vector<2x32xf32>
    %65 = math.tanh %64 : vector<2x32xf32>
    %66 = vector.extract_strided_slice %51 {offsets = [0, 96], sizes = [2, 32], strides = [1, 1]} : vector<2x128xf32> to vector<2x32xf32>
    %67 = arith.negf %66 : vector<2x32xf32>
    %68 = math.exp %67 : vector<2x32xf32>
    %cst_28 = arith.constant 1.000000e+00 : f32
    %69 = vector.broadcast %cst_28 : f32 to vector<2x32xf32>
    %70 = arith.addf %69, %68 : vector<2x32xf32>
    %71 = arith.divf %69, %70 : vector<2x32xf32>
    %72 = arith.mulf %63, %42 : vector<2x32xf32>
    %73 = arith.mulf %57, %65 : vector<2x32xf32>
    %74 = arith.addf %72, %73 : vector<2x32xf32>
    %75 = math.tanh %74 : vector<2x32xf32>
    %76 = arith.mulf %71, %75 : vector<2x32xf32>
    %77 = arith.index_cast %c1_i32 : i32 to index
    %c0_29 = arith.constant 0 : index
    %c0_30 = arith.constant 0 : index
    %78 = vector.load %arg8[%77, %c0_29, %c0_30] : memref<8x2x32xf32, #tpu.memory_space<vmem>>, vector<1x2x32xf32>
    %79 = vector.shape_cast %78 : vector<1x2x32xf32> to vector<2x32xf32>
    %80 = vector.shape_cast %76 : vector<2x32xf32> to vector<1x2x32xf32>
    tpu.vector_store %arg8[%77, %c0_29, %c0_30], %80 {strides = array<i32>} : memref<8x2x32xf32, #tpu.memory_space<vmem>>, vector<1x2x32xf32>,
    %c2_i32 = arith.constant 2 : i32
    %c0_31 = arith.constant 0 : index
    %c0_32 = arith.constant 0 : index
    %81 = vector.load %arg6[%c0_31, %c0_32] : memref<32x128xf32, #tpu.memory_space<vmem>>, vector<32x128xf32>
    %cst_33 = arith.constant dense<0.000000e+00> : vector<2x128xf32>
    %82 = tpu.matmul %76, %81, %cst_33 {dimension_numbers = #tpu.dot_dimension_numbers<[1], [0], [0], [1], [0, 0, 1, 1], [], []>} : vector<2x32xf32>, vector<32x128xf32>, vector<2x128xf32> -> vector<2x128xf32>
    %83 = arith.addf %15, %82 : vector<2x128xf32>
    %84 = vector.extract_strided_slice %83 {offsets = [0, 0], sizes = [2, 32], strides = [1, 1]} : vector<2x128xf32> to vector<2x32xf32>
    %85 = arith.negf %84 : vector<2x32xf32>
    %86 = math.exp %85 : vector<2x32xf32>
    %cst_34 = arith.constant 1.000000e+00 : f32
    %87 = vector.broadcast %cst_34 : f32 to vector<2x32xf32>
    %88 = arith.addf %87, %86 : vector<2x32xf32>
    %89 = arith.divf %87, %88 : vector<2x32xf32>
    %90 = vector.extract_strided_slice %83 {offsets = [0, 32], sizes = [2, 32], strides = [1, 1]} : vector<2x128xf32> to vector<2x32xf32>
    %91 = arith.negf %90 : vector<2x32xf32>
    %92 = math.exp %91 : vector<2x32xf32>
    %cst_35 = arith.constant 1.000000e+00 : f32
    %93 = vector.broadcast %cst_35 : f32 to vector<2x32xf32>
    %94 = arith.addf %93, %92 : vector<2x32xf32>
    %95 = arith.divf %93, %94 : vector<2x32xf32>
    %96 = vector.extract_strided_slice %83 {offsets = [0, 64], sizes = [2, 32], strides = [1, 1]} : vector<2x128xf32> to vector<2x32xf32>
    %97 = math.tanh %96 : vector<2x32xf32>
    %98 = vector.extract_strided_slice %83 {offsets = [0, 96], sizes = [2, 32], strides = [1, 1]} : vector<2x128xf32> to vector<2x32xf32>
    %99 = arith.negf %98 : vector<2x32xf32>
    %100 = math.exp %99 : vector<2x32xf32>
    %cst_36 = arith.constant 1.000000e+00 : f32
    %101 = vector.broadcast %cst_36 : f32 to vector<2x32xf32>
    %102 = arith.addf %101, %100 : vector<2x32xf32>
    %103 = arith.divf %101, %102 : vector<2x32xf32>
    %104 = arith.mulf %95, %74 : vector<2x32xf32>
    %105 = arith.mulf %89, %97 : vector<2x32xf32>
    %106 = arith.addf %104, %105 : vector<2x32xf32>
    %107 = math.tanh %106 : vector<2x32xf32>
    %108 = arith.mulf %103, %107 : vector<2x32xf32>
    %109 = arith.index_cast %c2_i32 : i32 to index
    %c0_37 = arith.constant 0 : index
    %c0_38 = arith.constant 0 : index
    %110 = vector.load %arg8[%109, %c0_37, %c0_38] : memref<8x2x32xf32, #tpu.memory_space<vmem>>, vector<1x2x32xf32>
    %111 = vector.shape_cast %110 : vector<1x2x32xf32> to vector<2x32xf32>
    %112 = vector.shape_cast %108 : vector<2x32xf32> to vector<1x2x32xf32>
    tpu.vector_store %arg8[%109, %c0_37, %c0_38], %112 {strides = array<i32>} : memref<8x2x32xf32, #tpu.memory_space<vmem>>, vector<1x2x32xf32>,
    %c3_i32 = arith.constant 3 : i32
    %c0_39 = arith.constant 0 : index
    %c0_40 = arith.constant 0 : index
    %113 = vector.load %arg6[%c0_39, %c0_40] : memref<32x128xf32, #tpu.memory_space<vmem>>, vector<32x128xf32>
    %cst_41 = arith.constant dense<0.000000e+00> : vector<2x128xf32>
    %114 = tpu.matmul %108, %113, %cst_41 {dimension_numbers = #tpu.dot_dimension_numbers<[1], [0], [0], [1], [0, 0, 1, 1], [], []>} : vector<2x32xf32>, vector<32x128xf32>, vector<2x128xf32> -> vector<2x128xf32>
    %115 = arith.addf %15, %114 : vector<2x128xf32>
    %116 = vector.extract_strided_slice %115 {offsets = [0, 0], sizes = [2, 32], strides = [1, 1]} : vector<2x128xf32> to vector<2x32xf32>
    %117 = arith.negf %116 : vector<2x32xf32>
    %118 = math.exp %117 : vector<2x32xf32>
    %cst_42 = arith.constant 1.000000e+00 : f32
    %119 = vector.broadcast %cst_42 : f32 to vector<2x32xf32>
    %120 = arith.addf %119, %118 : vector<2x32xf32>
    %121 = arith.divf %119, %120 : vector<2x32xf32>
    %122 = vector.extract_strided_slice %115 {offsets = [0, 32], sizes = [2, 32], strides = [1, 1]} : vector<2x128xf32> to vector<2x32xf32>
    %123 = arith.negf %122 : vector<2x32xf32>
    %124 = math.exp %123 : vector<2x32xf32>
    %cst_43 = arith.constant 1.000000e+00 : f32
    %125 = vector.broadcast %cst_43 : f32 to vector<2x32xf32>
    %126 = arith.addf %125, %124 : vector<2x32xf32>
    %127 = arith.divf %125, %126 : vector<2x32xf32>
    %128 = vector.extract_strided_slice %115 {offsets = [0, 64], sizes = [2, 32], strides = [1, 1]} : vector<2x128xf32> to vector<2x32xf32>
    %129 = math.tanh %128 : vector<2x32xf32>
    %130 = vector.extract_strided_slice %115 {offsets = [0, 96], sizes = [2, 32], strides = [1, 1]} : vector<2x128xf32> to vector<2x32xf32>
    %131 = arith.negf %130 : vector<2x32xf32>
    %132 = math.exp %131 : vector<2x32xf32>
    %cst_44 = arith.constant 1.000000e+00 : f32
    %133 = vector.broadcast %cst_44 : f32 to vector<2x32xf32>
    %134 = arith.addf %133, %132 : vector<2x32xf32>
    %135 = arith.divf %133, %134 : vector<2x32xf32>
    %136 = arith.mulf %127, %106 : vector<2x32xf32>
    %137 = arith.mulf %121, %129 : vector<2x32xf32>
    %138 = arith.addf %136, %137 : vector<2x32xf32>
    %139 = math.tanh %138 : vector<2x32xf32>
    %140 = arith.mulf %135, %139 : vector<2x32xf32>
    %141 = arith.index_cast %c3_i32 : i32 to index
    %c0_45 = arith.constant 0 : index
    %c0_46 = arith.constant 0 : index
    %142 = vector.load %arg8[%141, %c0_45, %c0_46] : memref<8x2x32xf32, #tpu.memory_space<vmem>>, vector<1x2x32xf32>
    %143 = vector.shape_cast %142 : vector<1x2x32xf32> to vector<2x32xf32>
    %144 = vector.shape_cast %140 : vector<2x32xf32> to vector<1x2x32xf32>
    tpu.vector_store %arg8[%141, %c0_45, %c0_46], %144 {strides = array<i32>} : memref<8x2x32xf32, #tpu.memory_space<vmem>>, vector<1x2x32xf32>,
    %c4_i32 = arith.constant 4 : i32
    %c0_47 = arith.constant 0 : index
    %c0_48 = arith.constant 0 : index
    %145 = vector.load %arg6[%c0_47, %c0_48] : memref<32x128xf32, #tpu.memory_space<vmem>>, vector<32x128xf32>
    %cst_49 = arith.constant dense<0.000000e+00> : vector<2x128xf32>
    %146 = tpu.matmul %140, %145, %cst_49 {dimension_numbers = #tpu.dot_dimension_numbers<[1], [0], [0], [1], [0, 0, 1, 1], [], []>} : vector<2x32xf32>, vector<32x128xf32>, vector<2x128xf32> -> vector<2x128xf32>
    %147 = arith.addf %15, %146 : vector<2x128xf32>
    %148 = vector.extract_strided_slice %147 {offsets = [0, 0], sizes = [2, 32], strides = [1, 1]} : vector<2x128xf32> to vector<2x32xf32>
    %149 = arith.negf %148 : vector<2x32xf32>
    %150 = math.exp %149 : vector<2x32xf32>
    %cst_50 = arith.constant 1.000000e+00 : f32
    %151 = vector.broadcast %cst_50 : f32 to vector<2x32xf32>
    %152 = arith.addf %151, %150 : vector<2x32xf32>
    %153 = arith.divf %151, %152 : vector<2x32xf32>
    %154 = vector.extract_strided_slice %147 {offsets = [0, 32], sizes = [2, 32], strides = [1, 1]} : vector<2x128xf32> to vector<2x32xf32>
    %155 = arith.negf %154 : vector<2x32xf32>
    %156 = math.exp %155 : vector<2x32xf32>
    %cst_51 = arith.constant 1.000000e+00 : f32
    %157 = vector.broadcast %cst_51 : f32 to vector<2x32xf32>
    %158 = arith.addf %157, %156 : vector<2x32xf32>
    %159 = arith.divf %157, %158 : vector<2x32xf32>
    %160 = vector.extract_strided_slice %147 {offsets = [0, 64], sizes = [2, 32], strides = [1, 1]} : vector<2x128xf32> to vector<2x32xf32>
    %161 = math.tanh %160 : vector<2x32xf32>
    %162 = vector.extract_strided_slice %147 {offsets = [0, 96], sizes = [2, 32], strides = [1, 1]} : vector<2x128xf32> to vector<2x32xf32>
    %163 = arith.negf %162 : vector<2x32xf32>
    %164 = math.exp %163 : vector<2x32xf32>
    %cst_52 = arith.constant 1.000000e+00 : f32
    %165 = vector.broadcast %cst_52 : f32 to vector<2x32xf32>
    %166 = arith.addf %165, %164 : vector<2x32xf32>
    %167 = arith.divf %165, %166 : vector<2x32xf32>
    %168 = arith.mulf %159, %138 : vector<2x32xf32>
    %169 = arith.mulf %153, %161 : vector<2x32xf32>
    %170 = arith.addf %168, %169 : vector<2x32xf32>
    %171 = math.tanh %170 : vector<2x32xf32>
    %172 = arith.mulf %167, %171 : vector<2x32xf32>
    %173 = arith.index_cast %c4_i32 : i32 to index
    %c0_53 = arith.constant 0 : index
    %c0_54 = arith.constant 0 : index
    %174 = vector.load %arg8[%173, %c0_53, %c0_54] : memref<8x2x32xf32, #tpu.memory_space<vmem>>, vector<1x2x32xf32>
    %175 = vector.shape_cast %174 : vector<1x2x32xf32> to vector<2x32xf32>
    %176 = vector.shape_cast %172 : vector<2x32xf32> to vector<1x2x32xf32>
    tpu.vector_store %arg8[%173, %c0_53, %c0_54], %176 {strides = array<i32>} : memref<8x2x32xf32, #tpu.memory_space<vmem>>, vector<1x2x32xf32>,
    %c5_i32 = arith.constant 5 : i32
    %c0_55 = arith.constant 0 : index
    %c0_56 = arith.constant 0 : index
    %177 = vector.load %arg6[%c0_55, %c0_56] : memref<32x128xf32, #tpu.memory_space<vmem>>, vector<32x128xf32>
    %cst_57 = arith.constant dense<0.000000e+00> : vector<2x128xf32>
    %178 = tpu.matmul %172, %177, %cst_57 {dimension_numbers = #tpu.dot_dimension_numbers<[1], [0], [0], [1], [0, 0, 1, 1], [], []>} : vector<2x32xf32>, vector<32x128xf32>, vector<2x128xf32> -> vector<2x128xf32>
    %179 = arith.addf %15, %178 : vector<2x128xf32>
    %180 = vector.extract_strided_slice %179 {offsets = [0, 0], sizes = [2, 32], strides = [1, 1]} : vector<2x128xf32> to vector<2x32xf32>
    %181 = arith.negf %180 : vector<2x32xf32>
    %182 = math.exp %181 : vector<2x32xf32>
    %cst_58 = arith.constant 1.000000e+00 : f32
    %183 = vector.broadcast %cst_58 : f32 to vector<2x32xf32>
    %184 = arith.addf %183, %182 : vector<2x32xf32>
    %185 = arith.divf %183, %184 : vector<2x32xf32>
    %186 = vector.extract_strided_slice %179 {offsets = [0, 32], sizes = [2, 32], strides = [1, 1]} : vector<2x128xf32> to vector<2x32xf32>
    %187 = arith.negf %186 : vector<2x32xf32>
    %188 = math.exp %187 : vector<2x32xf32>
    %cst_59 = arith.constant 1.000000e+00 : f32
    %189 = vector.broadcast %cst_59 : f32 to vector<2x32xf32>
    %190 = arith.addf %189, %188 : vector<2x32xf32>
    %191 = arith.divf %189, %190 : vector<2x32xf32>
    %192 = vector.extract_strided_slice %179 {offsets = [0, 64], sizes = [2, 32], strides = [1, 1]} : vector<2x128xf32> to vector<2x32xf32>
    %193 = math.tanh %192 : vector<2x32xf32>
    %194 = vector.extract_strided_slice %179 {offsets = [0, 96], sizes = [2, 32], strides = [1, 1]} : vector<2x128xf32> to vector<2x32xf32>
    %195 = arith.negf %194 : vector<2x32xf32>
    %196 = math.exp %195 : vector<2x32xf32>
    %cst_60 = arith.constant 1.000000e+00 : f32
    %197 = vector.broadcast %cst_60 : f32 to vector<2x32xf32>
    %198 = arith.addf %197, %196 : vector<2x32xf32>
    %199 = arith.divf %197, %198 : vector<2x32xf32>
    %200 = arith.mulf %191, %170 : vector<2x32xf32>
    %201 = arith.mulf %185, %193 : vector<2x32xf32>
    %202 = arith.addf %200, %201 : vector<2x32xf32>
    %203 = math.tanh %202 : vector<2x32xf32>
    %204 = arith.mulf %199, %203 : vector<2x32xf32>
    %205 = arith.index_cast %c5_i32 : i32 to index
    %c0_61 = arith.constant 0 : index
    %c0_62 = arith.constant 0 : index
    %206 = vector.load %arg8[%205, %c0_61, %c0_62] : memref<8x2x32xf32, #tpu.memory_space<vmem>>, vector<1x2x32xf32>
    %207 = vector.shape_cast %206 : vector<1x2x32xf32> to vector<2x32xf32>
    %208 = vector.shape_cast %204 : vector<2x32xf32> to vector<1x2x32xf32>
    tpu.vector_store %arg8[%205, %c0_61, %c0_62], %208 {strides = array<i32>} : memref<8x2x32xf32, #tpu.memory_space<vmem>>, vector<1x2x32xf32>,
    %c6_i32 = arith.constant 6 : i32
    %c0_63 = arith.constant 0 : index
    %c0_64 = arith.constant 0 : index
    %209 = vector.load %arg6[%c0_63, %c0_64] : memref<32x128xf32, #tpu.memory_space<vmem>>, vector<32x128xf32>
    %cst_65 = arith.constant dense<0.000000e+00> : vector<2x128xf32>
    %210 = tpu.matmul %204, %209, %cst_65 {dimension_numbers = #tpu.dot_dimension_numbers<[1], [0], [0], [1], [0, 0, 1, 1], [], []>} : vector<2x32xf32>, vector<32x128xf32>, vector<2x128xf32> -> vector<2x128xf32>
    %211 = arith.addf %15, %210 : vector<2x128xf32>
    %212 = vector.extract_strided_slice %211 {offsets = [0, 0], sizes = [2, 32], strides = [1, 1]} : vector<2x128xf32> to vector<2x32xf32>
    %213 = arith.negf %212 : vector<2x32xf32>
    %214 = math.exp %213 : vector<2x32xf32>
    %cst_66 = arith.constant 1.000000e+00 : f32
    %215 = vector.broadcast %cst_66 : f32 to vector<2x32xf32>
    %216 = arith.addf %215, %214 : vector<2x32xf32>
    %217 = arith.divf %215, %216 : vector<2x32xf32>
    %218 = vector.extract_strided_slice %211 {offsets = [0, 32], sizes = [2, 32], strides = [1, 1]} : vector<2x128xf32> to vector<2x32xf32>
    %219 = arith.negf %218 : vector<2x32xf32>
    %220 = math.exp %219 : vector<2x32xf32>
    %cst_67 = arith.constant 1.000000e+00 : f32
    %221 = vector.broadcast %cst_67 : f32 to vector<2x32xf32>
    %222 = arith.addf %221, %220 : vector<2x32xf32>
    %223 = arith.divf %221, %222 : vector<2x32xf32>
    %224 = vector.extract_strided_slice %211 {offsets = [0, 64], sizes = [2, 32], strides = [1, 1]} : vector<2x128xf32> to vector<2x32xf32>
    %225 = math.tanh %224 : vector<2x32xf32>
    %226 = vector.extract_strided_slice %211 {offsets = [0, 96], sizes = [2, 32], strides = [1, 1]} : vector<2x128xf32> to vector<2x32xf32>
    %227 = arith.negf %226 : vector<2x32xf32>
    %228 = math.exp %227 : vector<2x32xf32>
    %cst_68 = arith.constant 1.000000e+00 : f32
    %229 = vector.broadcast %cst_68 : f32 to vector<2x32xf32>
    %230 = arith.addf %229, %228 : vector<2x32xf32>
    %231 = arith.divf %229, %230 : vector<2x32xf32>
    %232 = arith.mulf %223, %202 : vector<2x32xf32>
    %233 = arith.mulf %217, %225 : vector<2x32xf32>
    %234 = arith.addf %232, %233 : vector<2x32xf32>
    %235 = math.tanh %234 : vector<2x32xf32>
    %236 = arith.mulf %231, %235 : vector<2x32xf32>
    %237 = arith.index_cast %c6_i32 : i32 to index
    %c0_69 = arith.constant 0 : index
    %c0_70 = arith.constant 0 : index
    %238 = vector.load %arg8[%237, %c0_69, %c0_70] : memref<8x2x32xf32, #tpu.memory_space<vmem>>, vector<1x2x32xf32>
    %239 = vector.shape_cast %238 : vector<1x2x32xf32> to vector<2x32xf32>
    %240 = vector.shape_cast %236 : vector<2x32xf32> to vector<1x2x32xf32>
    tpu.vector_store %arg8[%237, %c0_69, %c0_70], %240 {strides = array<i32>} : memref<8x2x32xf32, #tpu.memory_space<vmem>>, vector<1x2x32xf32>,
    %c7_i32 = arith.constant 7 : i32
    %c0_71 = arith.constant 0 : index
    %c0_72 = arith.constant 0 : index
    %241 = vector.load %arg6[%c0_71, %c0_72] : memref<32x128xf32, #tpu.memory_space<vmem>>, vector<32x128xf32>
    %cst_73 = arith.constant dense<0.000000e+00> : vector<2x128xf32>
    %242 = tpu.matmul %236, %241, %cst_73 {dimension_numbers = #tpu.dot_dimension_numbers<[1], [0], [0], [1], [0, 0, 1, 1], [], []>} : vector<2x32xf32>, vector<32x128xf32>, vector<2x128xf32> -> vector<2x128xf32>
    %243 = arith.addf %15, %242 : vector<2x128xf32>
    %244 = vector.extract_strided_slice %243 {offsets = [0, 0], sizes = [2, 32], strides = [1, 1]} : vector<2x128xf32> to vector<2x32xf32>
    %245 = arith.negf %244 : vector<2x32xf32>
    %246 = math.exp %245 : vector<2x32xf32>
    %cst_74 = arith.constant 1.000000e+00 : f32
    %247 = vector.broadcast %cst_74 : f32 to vector<2x32xf32>
    %248 = arith.addf %247, %246 : vector<2x32xf32>
    %249 = arith.divf %247, %248 : vector<2x32xf32>
    %250 = vector.extract_strided_slice %243 {offsets = [0, 32], sizes = [2, 32], strides = [1, 1]} : vector<2x128xf32> to vector<2x32xf32>
    %251 = arith.negf %250 : vector<2x32xf32>
    %252 = math.exp %251 : vector<2x32xf32>
    %cst_75 = arith.constant 1.000000e+00 : f32
    %253 = vector.broadcast %cst_75 : f32 to vector<2x32xf32>
    %254 = arith.addf %253, %252 : vector<2x32xf32>
    %255 = arith.divf %253, %254 : vector<2x32xf32>
    %256 = vector.extract_strided_slice %243 {offsets = [0, 64], sizes = [2, 32], strides = [1, 1]} : vector<2x128xf32> to vector<2x32xf32>
    %257 = math.tanh %256 : vector<2x32xf32>
    %258 = vector.extract_strided_slice %243 {offsets = [0, 96], sizes = [2, 32], strides = [1, 1]} : vector<2x128xf32> to vector<2x32xf32>
    %259 = arith.negf %258 : vector<2x32xf32>
    %260 = math.exp %259 : vector<2x32xf32>
    %cst_76 = arith.constant 1.000000e+00 : f32
    %261 = vector.broadcast %cst_76 : f32 to vector<2x32xf32>
    %262 = arith.addf %261, %260 : vector<2x32xf32>
    %263 = arith.divf %261, %262 : vector<2x32xf32>
    %264 = arith.mulf %255, %234 : vector<2x32xf32>
    %265 = arith.mulf %249, %257 : vector<2x32xf32>
    %266 = arith.addf %264, %265 : vector<2x32xf32>
    %267 = math.tanh %266 : vector<2x32xf32>
    %268 = arith.mulf %263, %267 : vector<2x32xf32>
    %269 = arith.index_cast %c7_i32 : i32 to index
    %c0_77 = arith.constant 0 : index
    %c0_78 = arith.constant 0 : index
    %270 = vector.load %arg8[%269, %c0_77, %c0_78] : memref<8x2x32xf32, #tpu.memory_space<vmem>>, vector<1x2x32xf32>
    %271 = vector.shape_cast %270 : vector<1x2x32xf32> to vector<2x32xf32>
    %272 = vector.shape_cast %268 : vector<2x32xf32> to vector<1x2x32xf32>
    tpu.vector_store %arg8[%269, %c0_77, %c0_78], %272 {strides = array<i32>} : memref<8x2x32xf32, #tpu.memory_space<vmem>>, vector<1x2x32xf32>,
    %c8_i32 = arith.constant 8 : i32
    %c0_79 = arith.constant 0 : index
    %c0_80 = arith.constant 0 : index
    %c0_81 = arith.constant 0 : index
    %273 = vector.load %arg8[%c0_79, %c0_80, %c0_81] : memref<8x2x32xf32, #tpu.memory_space<vmem>>, vector<8x2x32xf32>
    %274 = vector.extract_strided_slice %273 {offsets = [0, 0, 0], sizes = [8, 1, 32], strides = [1, 1, 1]} : vector<8x2x32xf32> to vector<8x1x32xf32>
    %275 = vector.shape_cast %274 : vector<8x1x32xf32> to vector<8x32xf32>
    %c0_82 = arith.constant 0 : index
    %c0_83 = arith.constant 0 : index
    %c0_84 = arith.constant 0 : index
    %276 = vector.load %arg7[%c0_82, %c0_83, %c0_84] : memref<2x8x32xf32, #tpu.memory_space<vmem>>, vector<1x8x32xf32>
    %277 = vector.shape_cast %276 : vector<1x8x32xf32> to vector<8x32xf32>
    %278 = vector.shape_cast %275 : vector<8x32xf32> to vector<1x8x32xf32>
    tpu.vector_store %arg7[%c0_82, %c0_83, %c0_84], %278 {strides = array<i32>} : memref<2x8x32xf32, #tpu.memory_space<vmem>>, vector<1x8x32xf32>,
    %279 = vector.extract_strided_slice %273 {offsets = [0, 1, 0], sizes = [8, 1, 32], strides = [1, 1, 1]} : vector<8x2x32xf32> to vector<8x1x32xf32>
    %280 = vector.shape_cast %279 : vector<8x1x32xf32> to vector<8x32xf32>
    %c1 = arith.constant 1 : index
    %c0_85 = arith.constant 0 : index
    %c0_86 = arith.constant 0 : index
    %281 = vector.load %arg7[%c1, %c0_85, %c0_86] : memref<2x8x32xf32, #tpu.memory_space<vmem>>, vector<1x8x32xf32>
    %282 = vector.shape_cast %281 : vector<1x8x32xf32> to vector<8x32xf32>
    %283 = vector.shape_cast %280 : vector<8x32xf32> to vector<1x8x32xf32>
    tpu.vector_store %arg7[%c1, %c0_85, %c0_86], %283 {strides = array<i32>} : memref<2x8x32xf32, #tpu.memory_space<vmem>>, vector<1x8x32xf32>,
    return
  }
}

module attributes {stable_mosaic.version = 11 : i64} {
  func.func @_linear_kernel(%arg0: i32, %arg1: i32, %arg2: memref<16x32xf32, #tpu.memory_space<vmem>>, %arg3: memref<32x16xf32, #tpu.memory_space<vmem>>, %arg4: memref<1x16xf32, #tpu.memory_space<vmem>>, %arg5: memref<16x16xf32, #tpu.memory_space<vmem>>) attributes {dimension_semantics = [#tpu.dimension_semantics<parallel>, #tpu.dimension_semantics<parallel>], iteration_bounds = array<i64: 1, 1>, scalar_prefetch = 0 : i64, scratch_operands = 0 : i64, tpu.core_type = #tpu.core_type<tc>, window_params = [{transform_indices = @transform_0, window_bounds = array<i64: 16, 32>}, {transform_indices = @transform_1, window_bounds = array<i64: 32, 16>}, {transform_indices = @transform_2, window_bounds = array<i64: 1, 16>}, {transform_indices = @transform_3, window_bounds = array<i64: 16, 16>}]} {
    %c0 = arith.constant 0 : index
    %c0_0 = arith.constant 0 : index
    %0 = vector.load %arg2[%c0, %c0_0] : memref<16x32xf32, #tpu.memory_space<vmem>>, vector<16x32xf32>
    %c0_1 = arith.constant 0 : index
    %c0_2 = arith.constant 0 : index
    %1 = vector.load %arg3[%c0_1, %c0_2] : memref<32x16xf32, #tpu.memory_space<vmem>>, vector<32x16xf32>
    %cst = arith.constant dense<0.000000e+00> : vector<16x16xf32>
    %2 = tpu.matmul %0, %1, %cst {dimension_numbers = #tpu.dot_dimension_numbers<[1], [0], [0], [1], [0, 0, 1, 1], [], []>} : vector<16x32xf32>, vector<32x16xf32>, vector<16x16xf32> -> vector<16x16xf32>
    %c0_3 = arith.constant 0 : index
    %c0_4 = arith.constant 0 : index
    %3 = vector.load %arg4[%c0_3, %c0_4] : memref<1x16xf32, #tpu.memory_space<vmem>>, vector<1x16xf32>
    %4 = vector.broadcast %3 : vector<1x16xf32> to vector<16x16xf32>
    %5 = arith.addf %2, %4 : vector<16x16xf32>
    %c0_5 = arith.constant 0 : index
    %c0_6 = arith.constant 0 : index
    %6 = vector.load %arg5[%c0_5, %c0_6] : memref<16x16xf32, #tpu.memory_space<vmem>>, vector<16x16xf32>
    tpu.vector_store %arg5[%c0_5, %c0_6], %5 {strides = array<i32>} : memref<16x16xf32, #tpu.memory_space<vmem>>, vector<16x16xf32>,
    return
  }
  func.func @transform_0(%arg0: i32, %arg1: i32) -> (i32, i32) {
    %c0_i32 = arith.constant 0 : i32
    %c0_i32_0 = arith.constant 0 : i32
    return %arg0, %c0_i32 : i32, i32
  }
  func.func @transform_1(%arg0: i32, %arg1: i32) -> (i32, i32) {
    %c0_i32 = arith.constant 0 : i32
    %c0_i32_0 = arith.constant 0 : i32
    return %c0_i32, %arg1 : i32, i32
  }
  func.func @transform_2(%arg0: i32, %arg1: i32) -> (i32, i32) {
    %c0_i32 = arith.constant 0 : i32
    %c0_i32_0 = arith.constant 0 : i32
    return %c0_i32, %arg1 : i32, i32
  }
  func.func @transform_3(%arg0: i32, %arg1: i32) -> (i32, i32) {
    %c0_i32 = arith.constant 0 : i32
    return %arg0, %arg1 : i32, i32
  }
}

</mosaic_0001>

<llo_original>
// kernel: safm_forward.7
$region0: #{safm_forward.7}
  #allocation0 [shape = 'u32[]', space=smem, size = 0x4, offset = 0x4, fixed_abs, tag = 'smem constant byte address 0x4 - core index']
  #allocation1 [shape = 'u32[144,128]{1,0:T(1,128)}', space=vmem, size = 0x12000, scoped, tag = 'internal scratch']
  %s0 = inlined_call_operand.vmem [shape: f32[6,6], index: 0, kind: input, shape index: {}]
  %s1 = inlined_call_operand.vmem [shape: f32[6,32], index: 1, kind: input, shape index: {}]
  %s2 = inlined_call_operand.vmem [shape: f32[32,32], index: 2, kind: input, shape index: {}]
  %s3 = inlined_call_operand.vmem [shape: f32[1,32], index: 3, kind: input, shape index: {}]
  %s4 = inlined_call_operand.vmem [shape: f32[32,32], index: 4, kind: input, shape index: {}]
  %s5 = inlined_call_operand.vmem [shape: f32[1,32], index: 5, kind: input, shape index: {}]
  %s6 = inlined_call_operand.vmem [shape: f32[1,32], index: 6, kind: output, shape index: {}]
  %s7 = sld [smem:[#allocation0]]
  $region34: #{safm_forward.7} parent=0
    _
  %s9 = ssub.s32 1, %s7
  %s10 = scalar_select 0, %s9, %s7
  // Predicated region
  $region2: #{safm_forward.7} parent=0 // pred_check
    _
  $region3: #{safm_forward.7} parent=0 // pred_check_branch
    %12 = sbr.rel (0) target = $region5
  $region4: #{safm_forward.7} parent=0 // pred_region
    _
  $region5: #{safm_forward.7} parent=0 // pred_fallthru
    _
  // Predicated region
  $region6: #{safm_forward.7} parent=0 // pred_check
    _
  $region7: #{safm_forward.7} parent=0 // pred_check_branch
    %14 = sbr.rel (0) target = $region9
  $region8: #{safm_forward.7} parent=0 // pred_region
    _
  $region9: #{safm_forward.7} parent=0 // pred_fallthru
    _
  // Predicated region
  $region10: #{safm_forward.7} parent=0 // pred_check
    _
  $region11: #{safm_forward.7} parent=0 // pred_check_branch
    %16 = sbr.rel (0) target = $region13
  $region12: #{safm_forward.7} parent=0 // pred_region
    _
  $region13: #{safm_forward.7} parent=0 // pred_fallthru
    _
  // Predicated region
  $region14: #{safm_forward.7} parent=0 // pred_check
    _
  $region15: #{safm_forward.7} parent=0 // pred_check_branch
    %18 = sbr.rel (0) target = $region17
  $region16: #{safm_forward.7} parent=0 // pred_region
    _
  $region17: #{safm_forward.7} parent=0 // pred_fallthru
    _
  // Predicated region
  $region18: #{safm_forward.7} parent=0 // pred_check
    _
  $region19: #{safm_forward.7} parent=0 // pred_check_branch
    %20 = sbr.rel (0) target = $region21
  $region20: #{safm_forward.7} parent=0 // pred_region
    _
  $region21: #{safm_forward.7} parent=0 // pred_fallthru
    _
  // Predicated region
  $region22: #{safm_forward.7} parent=0 // pred_check
    _
  $region23: #{safm_forward.7} parent=0 // pred_check_branch
    %22 = sbr.rel (0) target = $region25
  $region24: #{safm_forward.7} parent=0 // pred_region
    _
  $region25: #{safm_forward.7} parent=0 // pred_fallthru
    _
  %v23 = vld [vmem:[%s1] sm:$0x3f]
  %v24 = vld [vmem:[%s2] sm:$0xff]
  %v25 = vld [vmem:[%s2 + $0x8] sm:$0xff]
  %v26 = vld [vmem:[%s2 + $0x10] sm:$0xff]
  %v27 = vld [vmem:[%s2 + $0x18] sm:$0xff]
  %vm28 = vcmask 261120
  %v30 = vsel %vm28, %v23, 0
  %32 = vmatprep.subr.mxu0 0.0
  %33 = vmatpush1.msra.mxu0 %v24
  %34 = vmatprep.subr.mxu0 0.0
  %35 = vmatpush1.msra.mxu0 %v25
  %36 = vmatprep.subr.mxu0 0.0
  %37 = vmatpush1.msra.mxu0 %v26
  %38 = vmatprep.subr.mxu0 0.0
  %39 = vmatpush1.msra.mxu0 %v27
  %40 = vmatprep.subr.mxu0 0.0
  %41 = vmatpush1.msra.mxu0 0.0
  %42 = vmatprep.subr.mxu0 0.0
  %43 = vmatpush1.msra.mxu0 0.0
  %44 = vmatprep.subr.mxu0 0.0
  %45 = vmatpush1.msra.mxu0 0.0
  %46 = vmatprep.subr.mxu0 0.0
  %47 = vmatpush1.msra.mxu0 0.0
  %48 = vmatprep.subr.mxu0 0.0
  %49 = vmatpush1.msra.mxu0 0.0
  %50 = vmatprep.subr.mxu0 0.0
  %51 = vmatpush1.msra.mxu0 0.0
  %52 = vmatprep.subr.mxu0 0.0
  %53 = vmatpush1.msra.mxu0 0.0
  %54 = vmatprep.subr.mxu0 0.0
  %55 = vmatpush1.msra.mxu0 0.0
  %56 = vmatprep.subr.mxu0 0.0
  %57 = vmatpush1.msra.mxu0 0.0
  %58 = vmatprep.subr.mxu0 0.0
  %59 = vmatpush1.msra.mxu0 0.0
  %60 = vmatprep.subr.mxu0 0.0
  %61 = vmatpush1.msra.mxu0 0.0
  %62 = vmatprep.subr.mxu0 0.0
  %63 = vmatpush1.msra.mxu0 0.0
  %64 = vmatprep.subr.mxu0 0.0
  %65 = vmatpush1.msra.mxu0 0.0
  %66 = vmatprep.subr.mxu0 0.0
  %67 = vmatpush1.msra.mxu0 0.0
  %68 = vmatprep.subr.mxu0 0.0
  %69 = vmatpush1.msra.mxu0 0.0
  %70 = vmatprep.subr.mxu0 0.0
  %71 = vmatpush1.msra.mxu0 0.0
  %72 = vmatprep.subr.mxu0 0.0
  %73 = vmatpush1.msra.mxu0 0.0
  %74 = vmatprep.subr.mxu0 0.0
  %75 = vmatpush1.msra.mxu0 0.0
  %76 = vmatprep.subr.mxu0 0.0
  %77 = vmatpush1.msra.mxu0 0.0
  %78 = vmatprep.subr.mxu0 0.0
  %79 = vmatpush1.msra.mxu0 0.0
  %80 = vmatprep.subr.mxu0 0.0
  %81 = vmatpush1.msra.mxu0 0.0
  %82 = vmatprep.subr.mxu0 0.0
  %83 = vmatpush1.msra.mxu0 0.0
  %84 = vmatprep.subr.mxu0 0.0
  %85 = vmatpush1.msra.mxu0 0.0
  %86 = vmatprep.subr.mxu0 0.0
  %87 = vmatpush1.msra.mxu0 0.0
  %88 = vmatprep.subr.mxu0 0.0
  %89 = vmatpush1.msra.mxu0 0.0
  %90 = vmatprep.subr.mxu0 0.0
  %91 = vmatpush1.msra.mxu0 0.0
  %92 = vmatprep.subr.mxu0 0.0
  %93 = vmatpush1.msra.mxu0 0.0
  %94 = vmatprep.subr.mxu0 0.0
  %95 = vmatpush1.msra.mxu0 0.0
  %96 = vmatprep.mubr.f32.mxu0 0.0
  %97 = vmatmul.mubr.f32.gmra.mrb[0].mxu0 %v30
  %v98 = vpop.f32.mrb[0].mxu0
  %v99 = vadd.f32 0.0, %v98
  %v100 = vpop.f32.mrb[0].mxu0
  %101 = vdwg.mxu0
  %v102 = vld [vmem:[%s0] sm:$0x3f]
  %v103 = vld [vmem:[%s3] sm:$0x1]
  %v105 = vlaneseq
  %v106 = vshrl.u32 %v105, 7
  %v107 = vsub.s32 0, %v106
  %v108 = vrot.slane %v103, %v107
  %vm110 = vcmask 48128
  %v112 = vsel %vm110, %v102, 0
  %vm114 = vcmask 1045504
  %v116 = vsel %vm114, %v99, 0
  %118 = vmatprep.subr.mxu0 0.0
  %119 = vmatpush1.msra.mxu0 %v116
  %120 = vmatprep.subr.mxu0 0.0
  %121 = vmatpush1.msra.mxu0 0.0
  %122 = vmatprep.subr.mxu0 0.0
  %123 = vmatpush1.msra.mxu0 0.0
  %124 = vmatprep.subr.mxu0 0.0
  %125 = vmatpush1.msra.mxu0 0.0
  %126 = vmatprep.subr.mxu0 0.0
  %127 = vmatpush1.msra.mxu0 0.0
  %128 = vmatprep.subr.mxu0 0.0
  %129 = vmatpush1.msra.mxu0 0.0
  %130 = vmatprep.subr.mxu0 0.0
  %131 = vmatpush1.msra.mxu0 0.0
  %132 = vmatprep.subr.mxu0 0.0
  %133 = vmatpush1.msra.mxu0 0.0
  %134 = vmatprep.subr.mxu0 0.0
  %135 = vmatpush1.msra.mxu0 0.0
  %136 = vmatprep.subr.mxu0 0.0
  %137 = vmatpush1.msra.mxu0 0.0
  %138 = vmatprep.subr.mxu0 0.0
  %139 = vmatpush1.msra.mxu0 0.0
  %140 = vmatprep.subr.mxu0 0.0
  %141 = vmatpush1.msra.mxu0 0.0
  %142 = vmatprep.subr.mxu0 0.0
  %143 = vmatpush1.msra.mxu0 0.0
  %144 = vmatprep.subr.mxu0 0.0
  %145 = vmatpush1.msra.mxu0 0.0
  %146 = vmatprep.subr.mxu0 0.0
  %147 = vmatpush1.msra.mxu0 0.0
  %148 = vmatprep.subr.mxu0 0.0
  %149 = vmatpush1.msra.mxu0 0.0
  %150 = vmatprep.subr.mxu0 0.0
  %151 = vmatpush1.msra.mxu0 0.0
  %152 = vmatprep.subr.mxu0 0.0
  %153 = vmatpush1.msra.mxu0 0.0
  %154 = vmatprep.subr.mxu0 0.0
  %155 = vmatpush1.msra.mxu0 0.0
  %156 = vmatprep.subr.mxu0 0.0
  %157 = vmatpush1.msra.mxu0 0.0
  %158 = vmatprep.subr.mxu0 0.0
  %159 = vmatpush1.msra.mxu0 0.0
  %160 = vmatprep.subr.mxu0 0.0
  %161 = vmatpush1.msra.mxu0 0.0
  %162 = vmatprep.subr.mxu0 0.0
  %163 = vmatpush1.msra.mxu0 0.0
  %164 = vmatprep.subr.mxu0 0.0
  %165 = vmatpush1.msra.mxu0 0.0
  %166 = vmatprep.subr.mxu0 0.0
  %167 = vmatpush1.msra.mxu0 0.0
  %168 = vmatprep.subr.mxu0 0.0
  %169 = vmatpush1.msra.mxu0 0.0
  %170 = vmatprep.subr.mxu0 0.0
  %171 = vmatpush1.msra.mxu0 0.0
  %172 = vmatprep.subr.mxu0 0.0
  %173 = vmatpush1.msra.mxu0 0.0
  %174 = vmatprep.subr.mxu0 0.0
  %175 = vmatpush1.msra.mxu0 0.0
  %176 = vmatprep.subr.mxu0 0.0
  %177 = vmatpush1.msra.mxu0 0.0
  %178 = vmatprep.subr.mxu0 0.0
  %179 = vmatpush1.msra.mxu0 0.0
  %180 = vmatprep.subr.mxu0 0.0
  %181 = vmatpush1.msra.mxu0 0.0
  %182 = vmatprep.mubr.f32.mxu0 0.0
  %183 = vmatmul.mubr.f32.gmra.mrb[0].mxu0 %v112
  %v184 = vpop.f32.mrb[0].mxu0
  %v185 = vadd.f32 %v108, %v184
  %v186 = vpop.f32.mrb[0].mxu0
  %187 = vdwg.mxu0
  %v188 = vld [vmem:[%s4] sm:$0xff]
  %v189 = vld [vmem:[%s4 + $0x8] sm:$0xff]
  %v190 = vld [vmem:[%s4 + $0x10] sm:$0xff]
  %v191 = vld [vmem:[%s4 + $0x18] sm:$0xff]
  %v193 = vsel %vm28, %v185, 0
  %195 = vmatprep.subr.mxu0 0.0
  %196 = vmatpush1.msra.mxu0 %v188
  %197 = vmatprep.subr.mxu0 0.0
  %198 = vmatpush1.msra.mxu0 %v189
  %199 = vmatprep.subr.mxu0 0.0
  %200 = vmatpush1.msra.mxu0 %v190
  %201 = vmatprep.subr.mxu0 0.0
  %202 = vmatpush1.msra.mxu0 %v191
  %203 = vmatprep.subr.mxu0 0.0
  %204 = vmatpush1.msra.mxu0 0.0
  %205 = vmatprep.subr.mxu0 0.0
  %206 = vmatpush1.msra.mxu0 0.0
  %207 = vmatprep.subr.mxu0 0.0
  %208 = vmatpush1.msra.mxu0 0.0
  %209 = vmatprep.subr.mxu0 0.0
  %210 = vmatpush1.msra.mxu0 0.0
  %211 = vmatprep.subr.mxu0 0.0
  %212 = vmatpush1.msra.mxu0 0.0
  %213 = vmatprep.subr.mxu0 0.0
  %214 = vmatpush1.msra.mxu0 0.0
  %215 = vmatprep.subr.mxu0 0.0
  %216 = vmatpush1.msra.mxu0 0.0
  %217 = vmatprep.subr.mxu0 0.0
  %218 = vmatpush1.msra.mxu0 0.0
  %219 = vmatprep.subr.mxu0 0.0
  %220 = vmatpush1.msra.mxu0 0.0
  %221 = vmatprep.subr.mxu0 0.0
  %222 = vmatpush1.msra.mxu0 0.0
  %223 = vmatprep.subr.mxu0 0.0
  %224 = vmatpush1.msra.mxu0 0.0
  %225 = vmatprep.subr.mxu0 0.0
  %226 = vmatpush1.msra.mxu0 0.0
  %227 = vmatprep.subr.mxu0 0.0
  %228 = vmatpush1.msra.mxu0 0.0
  %229 = vmatprep.subr.mxu0 0.0
  %230 = vmatpush1.msra.mxu0 0.0
  %231 = vmatprep.subr.mxu0 0.0
  %232 = vmatpush1.msra.mxu0 0.0
  %233 = vmatprep.subr.mxu0 0.0
  %234 = vmatpush1.msra.mxu0 0.0
  %235 = vmatprep.subr.mxu0 0.0
  %236 = vmatpush1.msra.mxu0 0.0
  %237 = vmatprep.subr.mxu0 0.0
  %238 = vmatpush1.msra.mxu0 0.0
  %239 = vmatprep.subr.mxu0 0.0
  %240 = vmatpush1.msra.mxu0 0.0
  %241 = vmatprep.subr.mxu0 0.0
  %242 = vmatpush1.msra.mxu0 0.0
  %243 = vmatprep.subr.mxu0 0.0
  %244 = vmatpush1.msra.mxu0 0.0
  %245 = vmatprep.subr.mxu0 0.0
  %246 = vmatpush1.msra.mxu0 0.0
  %247 = vmatprep.subr.mxu0 0.0
  %248 = vmatpush1.msra.mxu0 0.0
  %249 = vmatprep.subr.mxu0 0.0
  %250 = vmatpush1.msra.mxu0 0.0
  %251 = vmatprep.subr.mxu0 0.0
  %252 = vmatpush1.msra.mxu0 0.0
  %253 = vmatprep.subr.mxu0 0.0
  %254 = vmatpush1.msra.mxu0 0.0
  %255 = vmatprep.subr.mxu0 0.0
  %256 = vmatpush1.msra.mxu0 0.0
  %257 = vmatprep.subr.mxu0 0.0
  %258 = vmatpush1.msra.mxu0 0.0
  %259 = vmatprep.mubr.f32.mxu0 0.0
  %260 = vmatmul.mubr.f32.gmra.mrb[0].mxu0 %v193
  %v261 = vpop.f32.mrb[0].mxu0
  %v262 = vadd.f32 0.0, %v261
  %v263 = vpop.f32.mrb[0].mxu0
  %264 = vdwg.mxu0
  %v265 = vld [vmem:[%s5] sm:$0x1]
  %v267 = vlaneseq
  %v268 = vshrl.u32 %v267, 7
  %v269 = vsub.s32 0, %v268
  %v270 = vrot.slane %v265, %v269
  %v273 = vsel %vm114, %v262, 0
  %275 = vmatprep.subr.mxu0 0.0
  %276 = vmatpush1.msra.mxu0 %v273
  %277 = vmatprep.subr.mxu0 0.0
  %278 = vmatpush1.msra.mxu0 0.0
  %279 = vmatprep.subr.mxu0 0.0
  %280 = vmatpush1.msra.mxu0 0.0
  %281 = vmatprep.subr.mxu0 0.0
  %282 = vmatpush1.msra.mxu0 0.0
  %283 = vmatprep.subr.mxu0 0.0
  %284 = vmatpush1.msra.mxu0 0.0
  %285 = vmatprep.subr.mxu0 0.0
  %286 = vmatpush1.msra.mxu0 0.0
  %287 = vmatprep.subr.mxu0 0.0
  %288 = vmatpush1.msra.mxu0 0.0
  %289 = vmatprep.subr.mxu0 0.0
  %290 = vmatpush1.msra.mxu0 0.0
  %291 = vmatprep.subr.mxu0 0.0
  %292 = vmatpush1.msra.mxu0 0.0
  %293 = vmatprep.subr.mxu0 0.0
  %294 = vmatpush1.msra.mxu0 0.0
  %295 = vmatprep.subr.mxu0 0.0
  %296 = vmatpush1.msra.mxu0 0.0
  %297 = vmatprep.subr.mxu0 0.0
  %298 = vmatpush1.msra.mxu0 0.0
  %299 = vmatprep.subr.mxu0 0.0
  %300 = vmatpush1.msra.mxu0 0.0
  %301 = vmatprep.subr.mxu0 0.0
  %302 = vmatpush1.msra.mxu0 0.0
  %303 = vmatprep.subr.mxu0 0.0
  %304 = vmatpush1.msra.mxu0 0.0
  %305 = vmatprep.subr.mxu0 0.0
  %306 = vmatpush1.msra.mxu0 0.0
  %307 = vmatprep.subr.mxu0 0.0
  %308 = vmatpush1.msra.mxu0 0.0
  %309 = vmatprep.subr.mxu0 0.0
  %310 = vmatpush1.msra.mxu0 0.0
  %311 = vmatprep.subr.mxu0 0.0
  %312 = vmatpush1.msra.mxu0 0.0
  %313 = vmatprep.subr.mxu0 0.0
  %314 = vmatpush1.msra.mxu0 0.0
  %315 = vmatprep.subr.mxu0 0.0
  %316 = vmatpush1.msra.mxu0 0.0
  %317 = vmatprep.subr.mxu0 0.0
  %318 = vmatpush1.msra.mxu0 0.0
  %319 = vmatprep.subr.mxu0 0.0
  %320 = vmatpush1.msra.mxu0 0.0
  %321 = vmatprep.subr.mxu0 0.0
  %322 = vmatpush1.msra.mxu0 0.0
  %323 = vmatprep.subr.mxu0 0.0
  %324 = vmatpush1.msra.mxu0 0.0
  %325 = vmatprep.subr.mxu0 0.0
  %326 = vmatpush1.msra.mxu0 0.0
  %327 = vmatprep.subr.mxu0 0.0
  %328 = vmatpush1.msra.mxu0 0.0
  %329 = vmatprep.subr.mxu0 0.0
  %330 = vmatpush1.msra.mxu0 0.0
  %331 = vmatprep.subr.mxu0 0.0
  %332 = vmatpush1.msra.mxu0 0.0
  %333 = vmatprep.subr.mxu0 0.0
  %334 = vmatpush1.msra.mxu0 0.0
  %335 = vmatprep.subr.mxu0 0.0
  %336 = vmatpush1.msra.mxu0 0.0
  %337 = vmatprep.subr.mxu0 0.0
  %338 = vmatpush1.msra.mxu0 0.0
  %339 = vmatprep.mubr.f32.mxu0 0.0
  %340 = vmatmul.mubr.f32.gmra.mrb[0].mxu0 %v112
  %v341 = vpop.f32.mrb[0].mxu0
  %v342 = vadd.f32 %v270, %v341
  %v343 = vpop.f32.mrb[0].mxu0
  %344 = vdwg.mxu0
  %vm345 = vcmask 259072
  %v346 = vsel %vm345, %v342, 0.0
  %v347 = vrot.slane %v346, 4
  %v348 = vadd.f32 %v346, %v347
  %v349 = vrot.slane %v348, 2
  %v350 = vadd.f32 %v348, %v349
  %v351 = vrot.slane %v350, 1
  %v352 = vadd.f32 %v350, %v351
  %v353 = vrcp.pop 6.0
  %v354 = vmul.f32 %v352, %v353
  %vm355 = vcmask 253952
  %356 = vst.msk [vmem:[%s6] sm:$0x1] %vm355, %v354
  // Predicated region
  $region26: #{safm_forward.7} parent=0 // pred_check
    _
  $region27: #{safm_forward.7} parent=0 // pred_check_branch
    %358 = sbr.rel (0) target = $region29
  $region28: #{safm_forward.7} parent=0 // pred_region
    _
  $region29: #{safm_forward.7} parent=0 // pred_fallthru
    _
  // Predicated region
  $region30: #{safm_forward.7} parent=0 // pred_check
    _
  $region31: #{safm_forward.7} parent=0 // pred_check_branch
    %360 = sbr.rel (0) target = $region33
  $region32: #{safm_forward.7} parent=0 // pred_region
    _
  $region33: #{safm_forward.7} parent=0 // pred_fallthru
    _

// kernel: safm_forward.5
$region0: #{safm_forward.5}
  #allocation0 [shape = 'u32[]', space=smem, size = 0x4, offset = 0x4, fixed_abs, tag = 'smem constant byte address 0x4 - core index']
  #allocation1 [shape = 'u32[144,128]{1,0:T(1,128)}', space=vmem, size = 0x12000, scoped, tag = 'internal scratch']
  %s0 = inlined_call_operand.vmem [shape: f32[16,32], index: 0, kind: input, shape index: {}]
  %s1 = inlined_call_operand.vmem [shape: f32[32,128], index: 1, kind: input, shape index: {}]
  %s2 = inlined_call_operand.vmem [shape: f32[1,128], index: 2, kind: input, shape index: {}]
  %s3 = inlined_call_operand.vmem [shape: f32[16,128], index: 3, kind: output, shape index: {}]
  %s4 = sld [smem:[#allocation0]]
  $region22: #{safm_forward.5} parent=0
    _
  %s6 = ssub.s32 1, %s4
  %s7 = scalar_select 0, %s6, %s4
  // Predicated region
  $region2: #{safm_forward.5} parent=0 // pred_check
    _
  $region3: #{safm_forward.5} parent=0 // pred_check_branch
    %9 = sbr.rel (0) target = $region5
  $region4: #{safm_forward.5} parent=0 // pred_region
    _
  $region5: #{safm_forward.5} parent=0 // pred_fallthru
    _
  // Predicated region
  $region6: #{safm_forward.5} parent=0 // pred_check
    _
  $region7: #{safm_forward.5} parent=0 // pred_check_branch
    %11 = sbr.rel (0) target = $region9
  $region8: #{safm_forward.5} parent=0 // pred_region
    _
  $region9: #{safm_forward.5} parent=0 // pred_fallthru
    _
  // Predicated region
  $region10: #{safm_forward.5} parent=0 // pred_check
    _
  $region11: #{safm_forward.5} parent=0 // pred_check_branch
    %13 = sbr.rel (0) target = $region13
  $region12: #{safm_forward.5} parent=0 // pred_region
    _
  $region13: #{safm_forward.5} parent=0 // pred_fallthru
    _
  %v14 = vld [vmem:[%s0] sm:$0xff]
  %v15 = vld [vmem:[%s0 + $0x8] sm:$0xff]
  %v16 = vld [vmem:[%s1] sm:$0xff]
  %v17 = vld [vmem:[%s1 + $0x8] sm:$0xff]
  %v18 = vld [vmem:[%s1 + $0x10] sm:$0xff]
  %v19 = vld [vmem:[%s1 + $0x18] sm:$0xff]
  %v20 = vld [vmem:[%s2] sm:$0x1]
  %v22 = vlaneseq
  %v23 = vshrl.u32 %v22, 7
  %v24 = vsub.s32 0, %v23
  %v25 = vrot.slane %v20, %v24
  %vm27 = vcmask 261120
  %v29 = vsel %vm27, %v14, 0
  %v32 = vsel %vm27, %v15, 0
  %34 = vmatprep.subr.mxu0 0.0
  %35 = vmatpush1.msra.mxu0 %v16
  %36 = vmatprep.subr.mxu0 0.0
  %37 = vmatpush1.msra.mxu0 %v17
  %38 = vmatprep.subr.mxu0 0.0
  %39 = vmatpush1.msra.mxu0 %v18
  %40 = vmatprep.subr.mxu0 0.0
  %41 = vmatpush1.msra.mxu0 %v19
  %42 = vmatprep.subr.mxu0 0.0
  %43 = vmatpush1.msra.mxu0 0.0
  %44 = vmatprep.subr.mxu0 0.0
  %45 = vmatpush1.msra.mxu0 0.0
  %46 = vmatprep.subr.mxu0 0.0
  %47 = vmatpush1.msra.mxu0 0.0
  %48 = vmatprep.subr.mxu0 0.0
  %49 = vmatpush1.msra.mxu0 0.0
  %50 = vmatprep.subr.mxu0 0.0
  %51 = vmatpush1.msra.mxu0 0.0
  %52 = vmatprep.subr.mxu0 0.0
  %53 = vmatpush1.msra.mxu0 0.0
  %54 = vmatprep.subr.mxu0 0.0
  %55 = vmatpush1.msra.mxu0 0.0
  %56 = vmatprep.subr.mxu0 0.0
  %57 = vmatpush1.msra.mxu0 0.0
  %58 = vmatprep.subr.mxu0 0.0
  %59 = vmatpush1.msra.mxu0 0.0
  %60 = vmatprep.subr.mxu0 0.0
  %61 = vmatpush1.msra.mxu0 0.0
  %62 = vmatprep.subr.mxu0 0.0
  %63 = vmatpush1.msra.mxu0 0.0
  %64 = vmatprep.subr.mxu0 0.0
  %65 = vmatpush1.msra.mxu0 0.0
  %66 = vmatprep.subr.mxu0 0.0
  %67 = vmatpush1.msra.mxu0 0.0
  %68 = vmatprep.subr.mxu0 0.0
  %69 = vmatpush1.msra.mxu0 0.0
  %70 = vmatprep.subr.mxu0 0.0
  %71 = vmatpush1.msra.mxu0 0.0
  %72 = vmatprep.subr.mxu0 0.0
  %73 = vmatpush1.msra.mxu0 0.0
  %74 = vmatprep.subr.mxu0 0.0
  %75 = vmatpush1.msra.mxu0 0.0
  %76 = vmatprep.subr.mxu0 0.0
  %77 = vmatpush1.msra.mxu0 0.0
  %78 = vmatprep.subr.mxu0 0.0
  %79 = vmatpush1.msra.mxu0 0.0
  %80 = vmatprep.subr.mxu0 0.0
  %81 = vmatpush1.msra.mxu0 0.0
  %82 = vmatprep.subr.mxu0 0.0
  %83 = vmatpush1.msra.mxu0 0.0
  %84 = vmatprep.subr.mxu0 0.0
  %85 = vmatpush1.msra.mxu0 0.0
  %86 = vmatprep.subr.mxu0 0.0
  %87 = vmatpush1.msra.mxu0 0.0
  %88 = vmatprep.subr.mxu0 0.0
  %89 = vmatpush1.msra.mxu0 0.0
  %90 = vmatprep.subr.mxu0 0.0
  %91 = vmatpush1.msra.mxu0 0.0
  %92 = vmatprep.subr.mxu0 0.0
  %93 = vmatpush1.msra.mxu0 0.0
  %94 = vmatprep.subr.mxu0 0.0
  %95 = vmatpush1.msra.mxu0 0.0
  %96 = vmatprep.subr.mxu0 0.0
  %97 = vmatpush1.msra.mxu0 0.0
  %98 = vmatprep.mubr.f32.mxu0 0.0
  %99 = vmatmul.mubr.f32.gmra.mrb[0].mxu0 %v29
  %v100 = vpop.f32.mrb[0].mxu0
  %v101 = vadd.f32 %v25, %v100
  %v102 = vpop.f32.mrb[0].mxu0
  %103 = vmatprep.mubr.f32.mxu0 0.0
  %104 = vmatmul.mubr.f32.gmra.mrb[0].mxu0 %v32
  %v105 = vpop.f32.mrb[0].mxu0
  %v106 = vadd.f32 %v25, %v105
  %v107 = vpop.f32.mrb[0].mxu0
  %108 = vdwg.mxu0
  %109 = vst [vmem:[%s3] sm:$0xff] %v101
  %110 = vst [vmem:[%s3 + $0x8] sm:$0xff] %v106
  // Predicated region
  $region14: #{safm_forward.5} parent=0 // pred_check
    _
  $region15: #{safm_forward.5} parent=0 // pred_check_branch
    %112 = sbr.rel (0) target = $region17
  $region16: #{safm_forward.5} parent=0 // pred_region
    _
  $region17: #{safm_forward.5} parent=0 // pred_fallthru
    _
  // Predicated region
  $region18: #{safm_forward.5} parent=0 // pred_check
    _
  $region19: #{safm_forward.5} parent=0 // pred_check_branch
    %114 = sbr.rel (0) target = $region21
  $region20: #{safm_forward.5} parent=0 // pred_region
    _
  $region21: #{safm_forward.5} parent=0 // pred_fallthru
    _

// kernel: safm_forward.6
$region0: #{safm_forward.6}
  #allocation0 [shape = 'u32[]', space=smem, size = 0x4, offset = 0x4, fixed_abs, tag = 'smem constant byte address 0x4 - core index']
  #allocation1 [shape = 'u32[144,128]{1,0:T(1,128)}', space=vmem, size = 0x12000, scoped, tag = 'internal scratch']
  %s0 = inlined_call_operand.vmem [shape: f32[8,2,128], index: 0, kind: input, shape index: {}]
  %s1 = inlined_call_operand.vmem [shape: f32[32,128], index: 1, kind: input, shape index: {}]
  %s2 = inlined_call_operand.vmem [shape: f32[2,32], index: 2, kind: output, shape index: {}]
  %s3 = sld [smem:[#allocation0]]
  $region18: #{safm_forward.6} parent=0
    _
  %s5 = ssub.s32 1, %s3
  %s6 = scalar_select 0, %s5, %s3
  // Predicated region
  $region2: #{safm_forward.6} parent=0 // pred_check
    _
  $region3: #{safm_forward.6} parent=0 // pred_check_branch
    %8 = sbr.rel (0) target = $region5
  $region4: #{safm_forward.6} parent=0 // pred_region
    _
  $region5: #{safm_forward.6} parent=0 // pred_fallthru
    _
  // Predicated region
  $region6: #{safm_forward.6} parent=0 // pred_check
    _
  $region7: #{safm_forward.6} parent=0 // pred_check_branch
    %10 = sbr.rel (0) target = $region9
  $region8: #{safm_forward.6} parent=0 // pred_region
    _
  $region9: #{safm_forward.6} parent=0 // pred_fallthru
    _
  %v11 = vld [vmem:[%s0] sm:$0x3]
  %v12 = vld [vmem:[%s1] sm:$0xff]
  %v13 = vld [vmem:[%s1 + $0x8] sm:$0xff]
  %v14 = vld [vmem:[%s1 + $0x10] sm:$0xff]
  %v15 = vld [vmem:[%s1 + $0x18] sm:$0xff]
  %vm16 = vcmask 261120
  %v18 = vsel %vm16, 0.0, 0
  %20 = vmatprep.subr.mxu0 0.0
  %21 = vmatpush1.msra.mxu0 %v12
  %22 = vmatprep.subr.mxu0 0.0
  %23 = vmatpush1.msra.mxu0 %v13
  %24 = vmatprep.subr.mxu0 0.0
  %25 = vmatpush1.msra.mxu0 %v14
  %26 = vmatprep.subr.mxu0 0.0
  %27 = vmatpush1.msra.mxu0 %v15
  %28 = vmatprep.subr.mxu0 0.0
  %29 = vmatpush1.msra.mxu0 0.0
  %30 = vmatprep.subr.mxu0 0.0
  %31 = vmatpush1.msra.mxu0 0.0
  %32 = vmatprep.subr.mxu0 0.0
  %33 = vmatpush1.msra.mxu0 0.0
  %34 = vmatprep.subr.mxu0 0.0
  %35 = vmatpush1.msra.mxu0 0.0
  %36 = vmatprep.subr.mxu0 0.0
  %37 = vmatpush1.msra.mxu0 0.0
  %38 = vmatprep.subr.mxu0 0.0
  %39 = vmatpush1.msra.mxu0 0.0
  %40 = vmatprep.subr.mxu0 0.0
  %41 = vmatpush1.msra.mxu0 0.0
  %42 = vmatprep.subr.mxu0 0.0
  %43 = vmatpush1.msra.mxu0 0.0
  %44 = vmatprep.subr.mxu0 0.0
  %45 = vmatpush1.msra.mxu0 0.0
  %46 = vmatprep.subr.mxu0 0.0
  %47 = vmatpush1.msra.mxu0 0.0
  %48 = vmatprep.subr.mxu0 0.0
  %49 = vmatpush1.msra.mxu0 0.0
  %50 = vmatprep.subr.mxu0 0.0
  %51 = vmatpush1.msra.mxu0 0.0
  %52 = vmatprep.subr.mxu0 0.0
  %53 = vmatpush1.msra.mxu0 0.0
  %54 = vmatprep.subr.mxu0 0.0
  %55 = vmatpush1.msra.mxu0 0.0
  %56 = vmatprep.subr.mxu0 0.0
  %57 = vmatpush1.msra.mxu0 0.0
  %58 = vmatprep.subr.mxu0 0.0
  %59 = vmatpush1.msra.mxu0 0.0
  %60 = vmatprep.subr.mxu0 0.0
  %61 = vmatpush1.msra.mxu0 0.0
  %62 = vmatprep.subr.mxu0 0.0
  %63 = vmatpush1.msra.mxu0 0.0
  %64 = vmatprep.subr.mxu0 0.0
  %65 = vmatpush1.msra.mxu0 0.0
  %66 = vmatprep.subr.mxu0 0.0
  %67 = vmatpush1.msra.mxu0 0.0
  %68 = vmatprep.subr.mxu0 0.0
  %69 = vmatpush1.msra.mxu0 0.0
  %70 = vmatprep.subr.mxu0 0.0
  %71 = vmatpush1.msra.mxu0 0.0
  %72 = vmatprep.subr.mxu0 0.0
  %73 = vmatpush1.msra.mxu0 0.0
  %74 = vmatprep.subr.mxu0 0.0
  %75 = vmatpush1.msra.mxu0 0.0
  %76 = vmatprep.subr.mxu0 0.0
  %77 = vmatpush1.msra.mxu0 0.0
  %78 = vmatprep.subr.mxu0 0.0
  %79 = vmatpush1.msra.mxu0 0.0
  %80 = vmatprep.subr.mxu0 0.0
  %81 = vmatpush1.msra.mxu0 0.0
  %82 = vmatprep.subr.mxu0 0.0
  %83 = vmatpush1.msra.mxu0 0.0
  %84 = vmatprep.mubr.f32.mxu0 0.0
  %85 = vmatmul.mubr.f32.gmra.mrb[0].mxu0 %v18
  %v86 = vpop.f32.mrb[0].mxu0
  %v87 = vadd.f32 0.0, %v86
  %v88 = vpop.f32.mrb[0].mxu0
  %89 = vdwg.mxu0
  %v90 = vadd.f32 %v11, %v87
  %v91 = vxor.u32 %v90, 2147483648
  %v92 = vmul.f32 %v91, 1.442695
  %v93 = vpow.pop %v92
  %v94 = vadd.f32 %v93, 1.0
  %v95 = vrcp.pop %v94
  %v96 = vmul.f32 1.0, %v95
  %v97 = vtanh.pop %v90
  %v98 = vmul.f32 %v96, 0.0
  %100 = vrot.lane.b32.xlu0 %v97, 64
  %v101 = vpop.permute.xlu0 %100
  %v103 = vmul.f32 %v96, %v101
  %105 = vrot.lane.b32.xlu0 %v103, 32
  %v106 = vpop.permute.xlu0 %105
  %v108 = vadd.f32 %v98, %v106
  %v109 = vtanh.pop %v108
  %111 = vrot.lane.b32.xlu0 %v109, 64
  %v112 = vpop.permute.xlu0 %111
  %v114 = vmul.f32 %v96, %v112
  %v115 = vadd.f32 %v114, 0.0
  %s116 = scalar_lea.vmem %s0, 2
  %v117 = vld [vmem:[%s116] sm:$0x3]
  %119 = vrot.lane.b32.xlu0 %v114, 32
  %v120 = vpop.permute.xlu0 %119
  %v121 = vsel %vm16, %v120, 0
  %123 = vmatprep.subr.mxu0 0.0
  %124 = vmatpush1.msra.mxu0 %v12
  %125 = vmatprep.subr.mxu0 0.0
  %126 = vmatpush1.msra.mxu0 %v13
  %127 = vmatprep.subr.mxu0 0.0
  %128 = vmatpush1.msra.mxu0 %v14
  %129 = vmatprep.subr.mxu0 0.0
  %130 = vmatpush1.msra.mxu0 %v15
  %131 = vmatprep.subr.mxu0 0.0
  %132 = vmatpush1.msra.mxu0 0.0
  %133 = vmatprep.subr.mxu0 0.0
  %134 = vmatpush1.msra.mxu0 0.0
  %135 = vmatprep.subr.mxu0 0.0
  %136 = vmatpush1.msra.mxu0 0.0
  %137 = vmatprep.subr.mxu0 0.0
  %138 = vmatpush1.msra.mxu0 0.0
  %139 = vmatprep.subr.mxu0 0.0
  %140 = vmatpush1.msra.mxu0 0.0
  %141 = vmatprep.subr.mxu0 0.0
  %142 = vmatpush1.msra.mxu0 0.0
  %143 = vmatprep.subr.mxu0 0.0
  %144 = vmatpush1.msra.mxu0 0.0
  %145 = vmatprep.subr.mxu0 0.0
  %146 = vmatpush1.msra.mxu0 0.0
  %147 = vmatprep.subr.mxu0 0.0
  %148 = vmatpush1.msra.mxu0 0.0
  %149 = vmatprep.subr.mxu0 0.0
  %150 = vmatpush1.msra.mxu0 0.0
  %151 = vmatprep.subr.mxu0 0.0
  %152 = vmatpush1.msra.mxu0 0.0
  %153 = vmatprep.subr.mxu0 0.0
  %154 = vmatpush1.msra.mxu0 0.0
  %155 = vmatprep.subr.mxu0 0.0
  %156 = vmatpush1.msra.mxu0 0.0
  %157 = vmatprep.subr.mxu0 0.0
  %158 = vmatpush1.msra.mxu0 0.0
  %159 = vmatprep.subr.mxu0 0.0
  %160 = vmatpush1.msra.mxu0 0.0
  %161 = vmatprep.subr.mxu0 0.0
  %162 = vmatpush1.msra.mxu0 0.0
  %163 = vmatprep.subr.mxu0 0.0
  %164 = vmatpush1.msra.mxu0 0.0
  %165 = vmatprep.subr.mxu0 0.0
  %166 = vmatpush1.msra.mxu0 0.0
  %167 = vmatprep.subr.mxu0 0.0
  %168 = vmatpush1.msra.mxu0 0.0
  %169 = vmatprep.subr.mxu0 0.0
  %170 = vmatpush1.msra.mxu0 0.0
  %171 = vmatprep.subr.mxu0 0.0
  %172 = vmatpush1.msra.mxu0 0.0
  %173 = vmatprep.subr.mxu0 0.0
  %174 = vmatpush1.msra.mxu0 0.0
  %175 = vmatprep.subr.mxu0 0.0
  %176 = vmatpush1.msra.mxu0 0.0
  %177 = vmatprep.subr.mxu0 0.0
  %178 = vmatpush1.msra.mxu0 0.0
  %179 = vmatprep.subr.mxu0 0.0
  %180 = vmatpush1.msra.mxu0 0.0
  %181 = vmatprep.subr.mxu0 0.0
  %182 = vmatpush1.msra.mxu0 0.0
  %183 = vmatprep.subr.mxu0 0.0
  %184 = vmatpush1.msra.mxu0 0.0
  %185 = vmatprep.subr.mxu0 0.0
  %186 = vmatpush1.msra.mxu0 0.0
  %187 = vmatprep.mubr.f32.mxu0 0.0
  %188 = vmatmul.mubr.f32.gmra.mrb[0].mxu0 %v121
  %v189 = vpop.f32.mrb[0].mxu0
  %v190 = vadd.f32 0.0, %v189
  %v191 = vpop.f32.mrb[0].mxu0
  %192 = vdwg.mxu0
  %v193 = vadd.f32 %v117, %v190
  %v194 = vxor.u32 %v193, 2147483648
  %v195 = vmul.f32 %v194, 1.442695
  %v196 = vpow.pop %v195
  %v197 = vadd.f32 %v196, 1.0
  %v198 = vrcp.pop %v197
  %v199 = vmul.f32 1.0, %v198
  %v200 = vtanh.pop %v193
  %v201 = vmul.f32 %v199, %v108
  %203 = vrot.lane.b32.xlu0 %v200, 64
  %v204 = vpop.permute.xlu0 %203
  %v206 = vmul.f32 %v199, %v204
  %208 = vrot.lane.b32.xlu0 %v206, 32
  %v209 = vpop.permute.xlu0 %208
  %v211 = vadd.f32 %v201, %v209
  %v212 = vtanh.pop %v211
  %214 = vrot.lane.b32.xlu0 %v212, 64
  %v215 = vpop.permute.xlu0 %214
  %v217 = vmul.f32 %v199, %v215
  %v218 = vadd.f32 %v115, %v217
  %s219 = scalar_lea.vmem %s0, 4
  %v220 = vld [vmem:[%s219] sm:$0x3]
  %222 = vrot.lane.b32.xlu0 %v217, 32
  %v223 = vpop.permute.xlu0 %222
  %v224 = vsel %vm16, %v223, 0
  %226 = vmatprep.subr.mxu0 0.0
  %227 = vmatpush1.msra.mxu0 %v12
  %228 = vmatprep.subr.mxu0 0.0
  %229 = vmatpush1.msra.mxu0 %v13
  %230 = vmatprep.subr.mxu0 0.0
  %231 = vmatpush1.msra.mxu0 %v14
  %232 = vmatprep.subr.mxu0 0.0
  %233 = vmatpush1.msra.mxu0 %v15
  %234 = vmatprep.subr.mxu0 0.0
  %235 = vmatpush1.msra.mxu0 0.0
  %236 = vmatprep.subr.mxu0 0.0
  %237 = vmatpush1.msra.mxu0 0.0
  %238 = vmatprep.subr.mxu0 0.0
  %239 = vmatpush1.msra.mxu0 0.0
  %240 = vmatprep.subr.mxu0 0.0
  %241 = vmatpush1.msra.mxu0 0.0
  %242 = vmatprep.subr.mxu0 0.0
  %243 = vmatpush1.msra.mxu0 0.0
  %244 = vmatprep.subr.mxu0 0.0
  %245 = vmatpush1.msra.mxu0 0.0
  %246 = vmatprep.subr.mxu0 0.0
  %247 = vmatpush1.msra.mxu0 0.0
  %248 = vmatprep.subr.mxu0 0.0
  %249 = vmatpush1.msra.mxu0 0.0
  %250 = vmatprep.subr.mxu0 0.0
  %251 = vmatpush1.msra.mxu0 0.0
  %252 = vmatprep.subr.mxu0 0.0
  %253 = vmatpush1.msra.mxu0 0.0
  %254 = vmatprep.subr.mxu0 0.0
  %255 = vmatpush1.msra.mxu0 0.0
  %256 = vmatprep.subr.mxu0 0.0
  %257 = vmatpush1.msra.mxu0 0.0
  %258 = vmatprep.subr.mxu0 0.0
  %259 = vmatpush1.msra.mxu0 0.0
  %260 = vmatprep.subr.mxu0 0.0
  %261 = vmatpush1.msra.mxu0 0.0
  %262 = vmatprep.subr.mxu0 0.0
  %263 = vmatpush1.msra.mxu0 0.0
  %264 = vmatprep.subr.mxu0 0.0
  %265 = vmatpush1.msra.mxu0 0.0
  %266 = vmatprep.subr.mxu0 0.0
  %267 = vmatpush1.msra.mxu0 0.0
  %268 = vmatprep.subr.mxu0 0.0
  %269 = vmatpush1.msra.mxu0 0.0
  %270 = vmatprep.subr.mxu0 0.0
  %271 = vmatpush1.msra.mxu0 0.0
  %272 = vmatprep.subr.mxu0 0.0
  %273 = vmatpush1.msra.mxu0 0.0
  %274 = vmatprep.subr.mxu0 0.0
  %275 = vmatpush1.msra.mxu0 0.0
  %276 = vmatprep.subr.mxu0 0.0
  %277 = vmatpush1.msra.mxu0 0.0
  %278 = vmatprep.subr.mxu0 0.0
  %279 = vmatpush1.msra.mxu0 0.0
  %280 = vmatprep.subr.mxu0 0.0
  %281 = vmatpush1.msra.mxu0 0.0
  %282 = vmatprep.subr.mxu0 0.0
  %283 = vmatpush1.msra.mxu0 0.0
  %284 = vmatprep.subr.mxu0 0.0
  %285 = vmatpush1.msra.mxu0 0.0
  %286 = vmatprep.subr.mxu0 0.0
  %287 = vmatpush1.msra.mxu0 0.0
  %288 = vmatprep.subr.mxu0 0.0
  %289 = vmatpush1.msra.mxu0 0.0
  %290 = vmatprep.mubr.f32.mxu0 0.0
  %291 = vmatmul.mubr.f32.gmra.mrb[0].mxu0 %v224
  %v292 = vpop.f32.mrb[0].mxu0
  %v293 = vadd.f32 0.0, %v292
  %v294 = vpop.f32.mrb[0].mxu0
  %295 = vdwg.mxu0
  %v296 = vadd.f32 %v220, %v293
  %v297 = vxor.u32 %v296, 2147483648
  %v298 = vmul.f32 %v297, 1.442695
  %v299 = vpow.pop %v298
  %v300 = vadd.f32 %v299, 1.0
  %v301 = vrcp.pop %v300
  %v302 = vmul.f32 1.0, %v301
  %v303 = vtanh.pop %v296
  %v304 = vmul.f32 %v302, %v211
  %306 = vrot.lane.b32.xlu0 %v303, 64
  %v307 = vpop.permute.xlu0 %306
  %v309 = vmul.f32 %v302, %v307
  %311 = vrot.lane.b32.xlu0 %v309, 32
  %v312 = vpop.permute.xlu0 %311
  %v314 = vadd.f32 %v304, %v312
  %v315 = vtanh.pop %v314
  %317 = vrot.lane.b32.xlu0 %v315, 64
  %v318 = vpop.permute.xlu0 %317
  %v320 = vmul.f32 %v302, %v318
  %v321 = vadd.f32 %v218, %v320
  %s322 = scalar_lea.vmem %s0, 6
  %v323 = vld [vmem:[%s322] sm:$0x3]
  %325 = vrot.lane.b32.xlu0 %v320, 32
  %v326 = vpop.permute.xlu0 %325
  %v327 = vsel %vm16, %v326, 0
  %329 = vmatprep.subr.mxu0 0.0
  %330 = vmatpush1.msra.mxu0 %v12
  %331 = vmatprep.subr.mxu0 0.0
  %332 = vmatpush1.msra.mxu0 %v13
  %333 = vmatprep.subr.mxu0 0.0
  %334 = vmatpush1.msra.mxu0 %v14
  %335 = vmatprep.subr.mxu0 0.0
  %336 = vmatpush1.msra.mxu0 %v15
  %337 = vmatprep.subr.mxu0 0.0
  %338 = vmatpush1.msra.mxu0 0.0
  %339 = vmatprep.subr.mxu0 0.0
  %340 = vmatpush1.msra.mxu0 0.0
  %341 = vmatprep.subr.mxu0 0.0
  %342 = vmatpush1.msra.mxu0 0.0
  %343 = vmatprep.subr.mxu0 0.0
  %344 = vmatpush1.msra.mxu0 0.0
  %345 = vmatprep.subr.mxu0 0.0
  %346 = vmatpush1.msra.mxu0 0.0
  %347 = vmatprep.subr.mxu0 0.0
  %348 = vmatpush1.msra.mxu0 0.0
  %349 = vmatprep.subr.mxu0 0.0
  %350 = vmatpush1.msra.mxu0 0.0
  %351 = vmatprep.subr.mxu0 0.0
  %352 = vmatpush1.msra.mxu0 0.0
  %353 = vmatprep.subr.mxu0 0.0
  %354 = vmatpush1.msra.mxu0 0.0
  %355 = vmatprep.subr.mxu0 0.0
  %356 = vmatpush1.msra.mxu0 0.0
  %357 = vmatprep.subr.mxu0 0.0
  %358 = vmatpush1.msra.mxu0 0.0
  %359 = vmatprep.subr.mxu0 0.0
  %360 = vmatpush1.msra.mxu0 0.0
  %361 = vmatprep.subr.mxu0 0.0
  %362 = vmatpush1.msra.mxu0 0.0
  %363 = vmatprep.subr.mxu0 0.0
  %364 = vmatpush1.msra.mxu0 0.0
  %365 = vmatprep.subr.mxu0 0.0
  %366 = vmatpush1.msra.mxu0 0.0
  %367 = vmatprep.subr.mxu0 0.0
  %368 = vmatpush1.msra.mxu0 0.0
  %369 = vmatprep.subr.mxu0 0.0
  %370 = vmatpush1.msra.mxu0 0.0
  %371 = vmatprep.subr.mxu0 0.0
  %372 = vmatpush1.msra.mxu0 0.0
  %373 = vmatprep.subr.mxu0 0.0
  %374 = vmatpush1.msra.mxu0 0.0
  %375 = vmatprep.subr.mxu0 0.0
  %376 = vmatpush1.msra.mxu0 0.0
  %377 = vmatprep.subr.mxu0 0.0
  %378 = vmatpush1.msra.mxu0 0.0
  %379 = vmatprep.subr.mxu0 0.0
  %380 = vmatpush1.msra.mxu0 0.0
  %381 = vmatprep.subr.mxu0 0.0
  %382 = vmatpush1.msra.mxu0 0.0
  %383 = vmatprep.subr.mxu0 0.0
  %384 = vmatpush1.msra.mxu0 0.0
  %385 = vmatprep.subr.mxu0 0.0
  %386 = vmatpush1.msra.mxu0 0.0
  %387 = vmatprep.subr.mxu0 0.0
  %388 = vmatpush1.msra.mxu0 0.0
  %389 = vmatprep.subr.mxu0 0.0
  %390 = vmatpush1.msra.mxu0 0.0
  %391 = vmatprep.subr.mxu0 0.0
  %392 = vmatpush1.msra.mxu0 0.0
  %393 = vmatprep.mubr.f32.mxu0 0.0
  %394 = vmatmul.mubr.f32.gmra.mrb[0].mxu0 %v327
  %v395 = vpop.f32.mrb[0].mxu0
  %v396 = vadd.f32 0.0, %v395
  %v397 = vpop.f32.mrb[0].mxu0
  %398 = vdwg.mxu0
  %v399 = vadd.f32 %v323, %v396
  %v400 = vxor.u32 %v399, 2147483648
  %v401 = vmul.f32 %v400, 1.442695
  %v402 = vpow.pop %v401
  %v403 = vadd.f32 %v402, 1.0
  %v404 = vrcp.pop %v403
  %v405 = vmul.f32 1.0, %v404
  %v406 = vtanh.pop %v399
  %v407 = vmul.f32 %v405, %v314
  %409 = vrot.lane.b32.xlu0 %v406, 64
  %v410 = vpop.permute.xlu0 %409
  %v412 = vmul.f32 %v405, %v410
  %414 = vrot.lane.b32.xlu0 %v412, 32
  %v415 = vpop.permute.xlu0 %414
  %v417 = vadd.f32 %v407, %v415
  %v418 = vtanh.pop %v417
  %420 = vrot.lane.b32.xlu0 %v418, 64
  %v421 = vpop.permute.xlu0 %420
  %v423 = vmul.f32 %v405, %v421
  %v424 = vadd.f32 %v321, %v423
  %s425 = scalar_lea.vmem %s0, 8
  %v426 = vld [vmem:[%s425] sm:$0x3]
  %428 = vrot.lane.b32.xlu0 %v423, 32
  %v429 = vpop.permute.xlu0 %428
  %v430 = vsel %vm16, %v429, 0
  %432 = vmatprep.subr.mxu0 0.0
  %433 = vmatpush1.msra.mxu0 %v12
  %434 = vmatprep.subr.mxu0 0.0
  %435 = vmatpush1.msra.mxu0 %v13
  %436 = vmatprep.subr.mxu0 0.0
  %437 = vmatpush1.msra.mxu0 %v14
  %438 = vmatprep.subr.mxu0 0.0
  %439 = vmatpush1.msra.mxu0 %v15
  %440 = vmatprep.subr.mxu0 0.0
  %441 = vmatpush1.msra.mxu0 0.0
  %442 = vmatprep.subr.mxu0 0.0
  %443 = vmatpush1.msra.mxu0 0.0
  %444 = vmatprep.subr.mxu0 0.0
  %445 = vmatpush1.msra.mxu0 0.0
  %446 = vmatprep.subr.mxu0 0.0
  %447 = vmatpush1.msra.mxu0 0.0
  %448 = vmatprep.subr.mxu0 0.0
  %449 = vmatpush1.msra.mxu0 0.0
  %450 = vmatprep.subr.mxu0 0.0
  %451 = vmatpush1.msra.mxu0 0.0
  %452 = vmatprep.subr.mxu0 0.0
  %453 = vmatpush1.msra.mxu0 0.0
  %454 = vmatprep.subr.mxu0 0.0
  %455 = vmatpush1.msra.mxu0 0.0
  %456 = vmatprep.subr.mxu0 0.0
  %457 = vmatpush1.msra.mxu0 0.0
  %458 = vmatprep.subr.mxu0 0.0
  %459 = vmatpush1.msra.mxu0 0.0
  %460 = vmatprep.subr.mxu0 0.0
  %461 = vmatpush1.msra.mxu0 0.0
  %462 = vmatprep.subr.mxu0 0.0
  %463 = vmatpush1.msra.mxu0 0.0
  %464 = vmatprep.subr.mxu0 0.0
  %465 = vmatpush1.msra.mxu0 0.0
  %466 = vmatprep.subr.mxu0 0.0
  %467 = vmatpush1.msra.mxu0 0.0
  %468 = vmatprep.subr.mxu0 0.0
  %469 = vmatpush1.msra.mxu0 0.0
  %470 = vmatprep.subr.mxu0 0.0
  %471 = vmatpush1.msra.mxu0 0.0
  %472 = vmatprep.subr.mxu0 0.0
  %473 = vmatpush1.msra.mxu0 0.0
  %474 = vmatprep.subr.mxu0 0.0
  %475 = vmatpush1.msra.mxu0 0.0
  %476 = vmatprep.subr.mxu0 0.0
  %477 = vmatpush1.msra.mxu0 0.0
  %478 = vmatprep.subr.mxu0 0.0
  %479 = vmatpush1.msra.mxu0 0.0
  %480 = vmatprep.subr.mxu0 0.0
  %481 = vmatpush1.msra.mxu0 0.0
  %482 = vmatprep.subr.mxu0 0.0
  %483 = vmatpush1.msra.mxu0 0.0
  %484 = vmatprep.subr.mxu0 0.0
  %485 = vmatpush1.msra.mxu0 0.0
  %486 = vmatprep.subr.mxu0 0.0
  %487 = vmatpush1.msra.mxu0 0.0
  %488 = vmatprep.subr.mxu0 0.0
  %489 = vmatpush1.msra.mxu0 0.0
  %490 = vmatprep.subr.mxu0 0.0
  %491 = vmatpush1.msra.mxu0 0.0
  %492 = vmatprep.subr.mxu0 0.0
  %493 = vmatpush1.msra.mxu0 0.0
  %494 = vmatprep.subr.mxu0 0.0
  %495 = vmatpush1.msra.mxu0 0.0
  %496 = vmatprep.mubr.f32.mxu0 0.0
  %497 = vmatmul.mubr.f32.gmra.mrb[0].mxu0 %v430
  %v498 = vpop.f32.mrb[0].mxu0
  %v499 = vadd.f32 0.0, %v498
  %v500 = vpop.f32.mrb[0].mxu0
  %501 = vdwg.mxu0
  %v502 = vadd.f32 %v426, %v499
  %v503 = vxor.u32 %v502, 2147483648
  %v504 = vmul.f32 %v503, 1.442695
  %v505 = vpow.pop %v504
  %v506 = vadd.f32 %v505, 1.0
  %v507 = vrcp.pop %v506
  %v508 = vmul.f32 1.0, %v507
  %v509 = vtanh.pop %v502
  %v510 = vmul.f32 %v508, %v417
  %512 = vrot.lane.b32.xlu0 %v509, 64
  %v513 = vpop.permute.xlu0 %512
  %v515 = vmul.f32 %v508, %v513
  %517 = vrot.lane.b32.xlu0 %v515, 32
  %v518 = vpop.permute.xlu0 %517
  %v520 = vadd.f32 %v510, %v518
  %v521 = vtanh.pop %v520
  %523 = vrot.lane.b32.xlu0 %v521, 64
  %v524 = vpop.permute.xlu0 %523
  %v526 = vmul.f32 %v508, %v524
  %v527 = vadd.f32 %v424, %v526
  %s528 = scalar_lea.vmem %s0, 10
  %v529 = vld [vmem:[%s528] sm:$0x3]
  %531 = vrot.lane.b32.xlu0 %v526, 32
  %v532 = vpop.permute.xlu0 %531
  %v533 = vsel %vm16, %v532, 0
  %535 = vmatprep.subr.mxu0 0.0
  %536 = vmatpush1.msra.mxu0 %v12
  %537 = vmatprep.subr.mxu0 0.0
  %538 = vmatpush1.msra.mxu0 %v13
  %539 = vmatprep.subr.mxu0 0.0
  %540 = vmatpush1.msra.mxu0 %v14
  %541 = vmatprep.subr.mxu0 0.0
  %542 = vmatpush1.msra.mxu0 %v15
  %543 = vmatprep.subr.mxu0 0.0
  %544 = vmatpush1.msra.mxu0 0.0
  %545 = vmatprep.subr.mxu0 0.0
  %546 = vmatpush1.msra.mxu0 0.0
  %547 = vmatprep.subr.mxu0 0.0
  %548 = vmatpush1.msra.mxu0 0.0
  %549 = vmatprep.subr.mxu0 0.0
  %550 = vmatpush1.msra.mxu0 0.0
  %551 = vmatprep.subr.mxu0 0.0
  %552 = vmatpush1.msra.mxu0 0.0
  %553 = vmatprep.subr.mxu0 0.0
  %554 = vmatpush1.msra.mxu0 0.0
  %555 = vmatprep.subr.mxu0 0.0
  %556 = vmatpush1.msra.mxu0 0.0
  %557 = vmatprep.subr.mxu0 0.0
  %558 = vmatpush1.msra.mxu0 0.0
  %559 = vmatprep.subr.mxu0 0.0
  %560 = vmatpush1.msra.mxu0 0.0
  %561 = vmatprep.subr.mxu0 0.0
  %562 = vmatpush1.msra.mxu0 0.0
  %563 = vmatprep.subr.mxu0 0.0
  %564 = vmatpush1.msra.mxu0 0.0
  %565 = vmatprep.subr.mxu0 0.0
  %566 = vmatpush1.msra.mxu0 0.0
  %567 = vmatprep.subr.mxu0 0.0
  %568 = vmatpush1.msra.mxu0 0.0
  %569 = vmatprep.subr.mxu0 0.0
  %570 = vmatpush1.msra.mxu0 0.0
  %571 = vmatprep.subr.mxu0 0.0
  %572 = vmatpush1.msra.mxu0 0.0
  %573 = vmatprep.subr.mxu0 0.0
  %574 = vmatpush1.msra.mxu0 0.0
  %575 = vmatprep.subr.mxu0 0.0
  %576 = vmatpush1.msra.mxu0 0.0
  %577 = vmatprep.subr.mxu0 0.0
  %578 = vmatpush1.msra.mxu0 0.0
  %579 = vmatprep.subr.mxu0 0.0
  %580 = vmatpush1.msra.mxu0 0.0
  %581 = vmatprep.subr.mxu0 0.0
  %582 = vmatpush1.msra.mxu0 0.0
  %583 = vmatprep.subr.mxu0 0.0
  %584 = vmatpush1.msra.mxu0 0.0
  %585 = vmatprep.subr.mxu0 0.0
  %586 = vmatpush1.msra.mxu0 0.0
  %587 = vmatprep.subr.mxu0 0.0
  %588 = vmatpush1.msra.mxu0 0.0
  %589 = vmatprep.subr.mxu0 0.0
  %590 = vmatpush1.msra.mxu0 0.0
  %591 = vmatprep.subr.mxu0 0.0
  %592 = vmatpush1.msra.mxu0 0.0
  %593 = vmatprep.subr.mxu0 0.0
  %594 = vmatpush1.msra.mxu0 0.0
  %595 = vmatprep.subr.mxu0 0.0
  %596 = vmatpush1.msra.mxu0 0.0
  %597 = vmatprep.subr.mxu0 0.0
  %598 = vmatpush1.msra.mxu0 0.0
  %599 = vmatprep.mubr.f32.mxu0 0.0
  %600 = vmatmul.mubr.f32.gmra.mrb[0].mxu0 %v533
  %v601 = vpop.f32.mrb[0].mxu0
  %v602 = vadd.f32 0.0, %v601
  %v603 = vpop.f32.mrb[0].mxu0
  %604 = vdwg.mxu0
  %v605 = vadd.f32 %v529, %v602
  %v606 = vxor.u32 %v605, 2147483648
  %v607 = vmul.f32 %v606, 1.442695
  %v608 = vpow.pop %v607
  %v609 = vadd.f32 %v608, 1.0
  %v610 = vrcp.pop %v609
  %v611 = vmul.f32 1.0, %v610
  %v612 = vtanh.pop %v605
  %v613 = vmul.f32 %v611, %v520
  %615 = vrot.lane.b32.xlu0 %v612, 64
  %v616 = vpop.permute.xlu0 %615
  %v618 = vmul.f32 %v611, %v616
  %620 = vrot.lane.b32.xlu0 %v618, 32
  %v621 = vpop.permute.xlu0 %620
  %v623 = vadd.f32 %v613, %v621
  %v624 = vtanh.pop %v623
  %626 = vrot.lane.b32.xlu0 %v624, 64
  %v627 = vpop.permute.xlu0 %626
  %v629 = vmul.f32 %v611, %v627
  %v630 = vadd.f32 %v527, %v629
  %s631 = scalar_lea.vmem %s0, 12
  %v632 = vld [vmem:[%s631] sm:$0x3]
  %634 = vrot.lane.b32.xlu0 %v629, 32
  %v635 = vpop.permute.xlu0 %634
  %v636 = vsel %vm16, %v635, 0
  %638 = vmatprep.subr.mxu0 0.0
  %639 = vmatpush1.msra.mxu0 %v12
  %640 = vmatprep.subr.mxu0 0.0
  %641 = vmatpush1.msra.mxu0 %v13
  %642 = vmatprep.subr.mxu0 0.0
  %643 = vmatpush1.msra.mxu0 %v14
  %644 = vmatprep.subr.mxu0 0.0
  %645 = vmatpush1.msra.mxu0 %v15
  %646 = vmatprep.subr.mxu0 0.0
  %647 = vmatpush1.msra.mxu0 0.0
  %648 = vmatprep.subr.mxu0 0.0
  %649 = vmatpush1.msra.mxu0 0.0
  %650 = vmatprep.subr.mxu0 0.0
  %651 = vmatpush1.msra.mxu0 0.0
  %652 = vmatprep.subr.mxu0 0.0
  %653 = vmatpush1.msra.mxu0 0.0
  %654 = vmatprep.subr.mxu0 0.0
  %655 = vmatpush1.msra.mxu0 0.0
  %656 = vmatprep.subr.mxu0 0.0
  %657 = vmatpush1.msra.mxu0 0.0
  %658 = vmatprep.subr.mxu0 0.0
  %659 = vmatpush1.msra.mxu0 0.0
  %660 = vmatprep.subr.mxu0 0.0
  %661 = vmatpush1.msra.mxu0 0.0
  %662 = vmatprep.subr.mxu0 0.0
  %663 = vmatpush1.msra.mxu0 0.0
  %664 = vmatprep.subr.mxu0 0.0
  %665 = vmatpush1.msra.mxu0 0.0
  %666 = vmatprep.subr.mxu0 0.0
  %667 = vmatpush1.msra.mxu0 0.0
  %668 = vmatprep.subr.mxu0 0.0
  %669 = vmatpush1.msra.mxu0 0.0
  %670 = vmatprep.subr.mxu0 0.0
  %671 = vmatpush1.msra.mxu0 0.0
  %672 = vmatprep.subr.mxu0 0.0
  %673 = vmatpush1.msra.mxu0 0.0
  %674 = vmatprep.subr.mxu0 0.0
  %675 = vmatpush1.msra.mxu0 0.0
  %676 = vmatprep.subr.mxu0 0.0
  %677 = vmatpush1.msra.mxu0 0.0
  %678 = vmatprep.subr.mxu0 0.0
  %679 = vmatpush1.msra.mxu0 0.0
  %680 = vmatprep.subr.mxu0 0.0
  %681 = vmatpush1.msra.mxu0 0.0
  %682 = vmatprep.subr.mxu0 0.0
  %683 = vmatpush1.msra.mxu0 0.0
  %684 = vmatprep.subr.mxu0 0.0
  %685 = vmatpush1.msra.mxu0 0.0
  %686 = vmatprep.subr.mxu0 0.0
  %687 = vmatpush1.msra.mxu0 0.0
  %688 = vmatprep.subr.mxu0 0.0
  %689 = vmatpush1.msra.mxu0 0.0
  %690 = vmatprep.subr.mxu0 0.0
  %691 = vmatpush1.msra.mxu0 0.0
  %692 = vmatprep.subr.mxu0 0.0
  %693 = vmatpush1.msra.mxu0 0.0
  %694 = vmatprep.subr.mxu0 0.0
  %695 = vmatpush1.msra.mxu0 0.0
  %696 = vmatprep.subr.mxu0 0.0
  %697 = vmatpush1.msra.mxu0 0.0
  %698 = vmatprep.subr.mxu0 0.0
  %699 = vmatpush1.msra.mxu0 0.0
  %700 = vmatprep.subr.mxu0 0.0
  %701 = vmatpush1.msra.mxu0 0.0
  %702 = vmatprep.mubr.f32.mxu0 0.0
  %703 = vmatmul.mubr.f32.gmra.mrb[0].mxu0 %v636
  %v704 = vpop.f32.mrb[0].mxu0
  %v705 = vadd.f32 0.0, %v704
  %v706 = vpop.f32.mrb[0].mxu0
  %707 = vdwg.mxu0
  %v708 = vadd.f32 %v632, %v705
  %v709 = vxor.u32 %v708, 2147483648
  %v710 = vmul.f32 %v709, 1.442695
  %v711 = vpow.pop %v710
  %v712 = vadd.f32 %v711, 1.0
  %v713 = vrcp.pop %v712
  %v714 = vmul.f32 1.0, %v713
  %v715 = vtanh.pop %v708
  %v716 = vmul.f32 %v714, %v623
  %718 = vrot.lane.b32.xlu0 %v715, 64
  %v719 = vpop.permute.xlu0 %718
  %v721 = vmul.f32 %v714, %v719
  %723 = vrot.lane.b32.xlu0 %v721, 32
  %v724 = vpop.permute.xlu0 %723
  %v726 = vadd.f32 %v716, %v724
  %v727 = vtanh.pop %v726
  %729 = vrot.lane.b32.xlu0 %v727, 64
  %v730 = vpop.permute.xlu0 %729
  %v732 = vmul.f32 %v714, %v730
  %v733 = vadd.f32 %v630, %v732
  %s734 = scalar_lea.vmem %s0, 14
  %v735 = vld [vmem:[%s734] sm:$0x3]
  %737 = vrot.lane.b32.xlu0 %v732, 32
  %v738 = vpop.permute.xlu0 %737
  %v739 = vsel %vm16, %v738, 0
  %741 = vmatprep.subr.mxu0 0.0
  %742 = vmatpush1.msra.mxu0 %v12
  %743 = vmatprep.subr.mxu0 0.0
  %744 = vmatpush1.msra.mxu0 %v13
  %745 = vmatprep.subr.mxu0 0.0
  %746 = vmatpush1.msra.mxu0 %v14
  %747 = vmatprep.subr.mxu0 0.0
  %748 = vmatpush1.msra.mxu0 %v15
  %749 = vmatprep.subr.mxu0 0.0
  %750 = vmatpush1.msra.mxu0 0.0
  %751 = vmatprep.subr.mxu0 0.0
  %752 = vmatpush1.msra.mxu0 0.0
  %753 = vmatprep.subr.mxu0 0.0
  %754 = vmatpush1.msra.mxu0 0.0
  %755 = vmatprep.subr.mxu0 0.0
  %756 = vmatpush1.msra.mxu0 0.0
  %757 = vmatprep.subr.mxu0 0.0
  %758 = vmatpush1.msra.mxu0 0.0
  %759 = vmatprep.subr.mxu0 0.0
  %760 = vmatpush1.msra.mxu0 0.0
  %761 = vmatprep.subr.mxu0 0.0
  %762 = vmatpush1.msra.mxu0 0.0
  %763 = vmatprep.subr.mxu0 0.0
  %764 = vmatpush1.msra.mxu0 0.0
  %765 = vmatprep.subr.mxu0 0.0
  %766 = vmatpush1.msra.mxu0 0.0
  %767 = vmatprep.subr.mxu0 0.0
  %768 = vmatpush1.msra.mxu0 0.0
  %769 = vmatprep.subr.mxu0 0.0
  %770 = vmatpush1.msra.mxu0 0.0
  %771 = vmatprep.subr.mxu0 0.0
  %772 = vmatpush1.msra.mxu0 0.0
  %773 = vmatprep.subr.mxu0 0.0
  %774 = vmatpush1.msra.mxu0 0.0
  %775 = vmatprep.subr.mxu0 0.0
  %776 = vmatpush1.msra.mxu0 0.0
  %777 = vmatprep.subr.mxu0 0.0
  %778 = vmatpush1.msra.mxu0 0.0
  %779 = vmatprep.subr.mxu0 0.0
  %780 = vmatpush1.msra.mxu0 0.0
  %781 = vmatprep.subr.mxu0 0.0
  %782 = vmatpush1.msra.mxu0 0.0
  %783 = vmatprep.subr.mxu0 0.0
  %784 = vmatpush1.msra.mxu0 0.0
  %785 = vmatprep.subr.mxu0 0.0
  %786 = vmatpush1.msra.mxu0 0.0
  %787 = vmatprep.subr.mxu0 0.0
  %788 = vmatpush1.msra.mxu0 0.0
  %789 = vmatprep.subr.mxu0 0.0
  %790 = vmatpush1.msra.mxu0 0.0
  %791 = vmatprep.subr.mxu0 0.0
  %792 = vmatpush1.msra.mxu0 0.0
  %793 = vmatprep.subr.mxu0 0.0
  %794 = vmatpush1.msra.mxu0 0.0
  %795 = vmatprep.subr.mxu0 0.0
  %796 = vmatpush1.msra.mxu0 0.0
  %797 = vmatprep.subr.mxu0 0.0
  %798 = vmatpush1.msra.mxu0 0.0
  %799 = vmatprep.subr.mxu0 0.0
  %800 = vmatpush1.msra.mxu0 0.0
  %801 = vmatprep.subr.mxu0 0.0
  %802 = vmatpush1.msra.mxu0 0.0
  %803 = vmatprep.subr.mxu0 0.0
  %804 = vmatpush1.msra.mxu0 0.0
  %805 = vmatprep.mubr.f32.mxu0 0.0
  %806 = vmatmul.mubr.f32.gmra.mrb[0].mxu0 %v739
  %v807 = vpop.f32.mrb[0].mxu0
  %v808 = vadd.f32 0.0, %v807
  %v809 = vpop.f32.mrb[0].mxu0
  %810 = vdwg.mxu0
  %v811 = vadd.f32 %v735, %v808
  %v812 = vxor.u32 %v811, 2147483648
  %v813 = vmul.f32 %v812, 1.442695
  %v814 = vpow.pop %v813
  %v815 = vadd.f32 %v814, 1.0
  %v816 = vrcp.pop %v815
  %v817 = vmul.f32 1.0, %v816
  %v818 = vtanh.pop %v811
  %v819 = vmul.f32 %v817, %v726
  %821 = vrot.lane.b32.xlu0 %v818, 64
  %v822 = vpop.permute.xlu0 %821
  %v824 = vmul.f32 %v817, %v822
  %826 = vrot.lane.b32.xlu0 %v824, 32
  %v827 = vpop.permute.xlu0 %826
  %v829 = vadd.f32 %v819, %v827
  %v830 = vtanh.pop %v829
  %832 = vrot.lane.b32.xlu0 %v830, 64
  %v833 = vpop.permute.xlu0 %832
  %v835 = vmul.f32 %v817, %v833
  %v836 = vadd.f32 %v733, %v835
  %v837 = vmul.f32 %v836, 0.125
  %839 = vrot.lane.b32.xlu0 %v837, 32
  %v840 = vpop.permute.xlu0 %839
  %vm842 = vcmask 254976
  %843 = vst.msk [vmem:[%s2] sm:$0x3] %vm842, %v840
  // Predicated region
  $region10: #{safm_forward.6} parent=0 // pred_check
    _
  $region11: #{safm_forward.6} parent=0 // pred_check_branch
    %845 = sbr.rel (0) target = $region13
  $region12: #{safm_forward.6} parent=0 // pred_region
    _
  $region13: #{safm_forward.6} parent=0 // pred_fallthru
    _
  // Predicated region
  $region14: #{safm_forward.6} parent=0 // pred_check
    _
  $region15: #{safm_forward.6} parent=0 // pred_check_branch
    %847 = sbr.rel (0) target = $region17
  $region16: #{safm_forward.6} parent=0 // pred_region
    _
  $region17: #{safm_forward.6} parent=0 // pred_fallthru
    _

// kernel: safm_forward.8
$region0: #{safm_forward.8}
  #allocation0 [shape = 'u32[]', space=smem, size = 0x4, offset = 0x4, fixed_abs, tag = 'smem constant byte address 0x4 - core index']
  #allocation1 [shape = 'u32[144,128]{1,0:T(1,128)}', space=vmem, size = 0x12000, scoped, tag = 'internal scratch']
  #allocation2 [shape = 'f32[8,2,32]{2,1,0:T(2,128)}', space=vmem, size = 0x2000, scoped, tag = 'scratch operand']
  %s0 = inlined_call_operand.vmem [shape: f32[2,32], index: 0, kind: input, shape index: {}]
  %s1 = inlined_call_operand.vmem [shape: f32[1,32], index: 1, kind: input, shape index: {}]
  %s2 = inlined_call_operand.vmem [shape: f32[64,32], index: 2, kind: input, shape index: {}]
  %s3 = inlined_call_operand.vmem [shape: f32[1,32], index: 3, kind: input, shape index: {}]
  %s4 = inlined_call_operand.vmem [shape: f32[32,128], index: 4, kind: input, shape index: {}]
  %s5 = inlined_call_operand.vmem [shape: f32[1,128], index: 5, kind: input, shape index: {}]
  %s6 = inlined_call_operand.vmem [shape: f32[32,128], index: 6, kind: input, shape index: {}]
  %s7 = inlined_call_operand.vmem [shape: f32[2,8,32], index: 7, kind: output, shape index: {}]
  %s8 = sld [smem:[#allocation0]]
  $region38: #{safm_forward.8} parent=0
    _
  %s10 = ssub.s32 1, %s8
  %s11 = scalar_select 0, %s10, %s8
  // Predicated region
  $region2: #{safm_forward.8} parent=0 // pred_check
    _
  $region3: #{safm_forward.8} parent=0 // pred_check_branch
    %13 = sbr.rel (0) target = $region5
  $region4: #{safm_forward.8} parent=0 // pred_region
    _
  $region5: #{safm_forward.8} parent=0 // pred_fallthru
    _
  // Predicated region
  $region6: #{safm_forward.8} parent=0 // pred_check
    _
  $region7: #{safm_forward.8} parent=0 // pred_check_branch
    %15 = sbr.rel (0) target = $region9
  $region8: #{safm_forward.8} parent=0 // pred_region
    _
  $region9: #{safm_forward.8} parent=0 // pred_fallthru
    _
  // Predicated region
  $region10: #{safm_forward.8} parent=0 // pred_check
    _
  $region11: #{safm_forward.8} parent=0 // pred_check_branch
    %17 = sbr.rel (0) target = $region13
  $region12: #{safm_forward.8} parent=0 // pred_region
    _
  $region13: #{safm_forward.8} parent=0 // pred_fallthru
    _
  // Predicated region
  $region14: #{safm_forward.8} parent=0 // pred_check
    _
  $region15: #{safm_forward.8} parent=0 // pred_check_branch
    %19 = sbr.rel (0) target = $region17
  $region16: #{safm_forward.8} parent=0 // pred_region
    _
  $region17: #{safm_forward.8} parent=0 // pred_fallthru
    _
  // Predicated region
  $region18: #{safm_forward.8} parent=0 // pred_check
    _
  $region19: #{safm_forward.8} parent=0 // pred_check_branch
    %21 = sbr.rel (0) target = $region21
  $region20: #{safm_forward.8} parent=0 // pred_region
    _
  $region21: #{safm_forward.8} parent=0 // pred_fallthru
    _
  // Predicated region
  $region22: #{safm_forward.8} parent=0 // pred_check
    _
  $region23: #{safm_forward.8} parent=0 // pred_check_branch
    %23 = sbr.rel (0) target = $region25
  $region24: #{safm_forward.8} parent=0 // pred_region
    _
  $region25: #{safm_forward.8} parent=0 // pred_fallthru
    _
  // Predicated region
  $region26: #{safm_forward.8} parent=0 // pred_check
    _
  $region27: #{safm_forward.8} parent=0 // pred_check_branch
    %25 = sbr.rel (0) target = $region29
  $region28: #{safm_forward.8} parent=0 // pred_region
    _
  $region29: #{safm_forward.8} parent=0 // pred_fallthru
    _
  %v26 = vld [vmem:[%s0] sm:$0x3]
  %v27 = vld [vmem:[%s2] sm:$0xff]
  %v28 = vld [vmem:[%s2 + $0x8] sm:$0xff]
  %v29 = vld [vmem:[%s2 + $0x10] sm:$0xff]
  %v30 = vld [vmem:[%s2 + $0x18] sm:$0xff]
  %v31 = vld [vmem:[%s1] sm:$0x1]
  %v32 = vld [vmem:[%s2 + $0x20] sm:$0xff]
  %v33 = vld [vmem:[%s2 + $0x28] sm:$0xff]
  %v34 = vld [vmem:[%s2 + $0x30] sm:$0xff]
  %v35 = vld [vmem:[%s2 + $0x38] sm:$0xff]
  %vm36 = vcmask 261120
  %v38 = vsel %vm36, %v31, 0
  %40 = vmatprep.subr.mxu0 0.0
  %41 = vmatpush1.msra.mxu0 %v32
  %42 = vmatprep.subr.mxu0 0.0
  %43 = vmatpush1.msra.mxu0 %v33
  %44 = vmatprep.subr.mxu0 0.0
  %45 = vmatpush1.msra.mxu0 %v34
  %46 = vmatprep.subr.mxu0 0.0
  %47 = vmatpush1.msra.mxu0 %v35
  %48 = vmatprep.subr.mxu0 0.0
  %49 = vmatpush1.msra.mxu0 0.0
  %50 = vmatprep.subr.mxu0 0.0
  %51 = vmatpush1.msra.mxu0 0.0
  %52 = vmatprep.subr.mxu0 0.0
  %53 = vmatpush1.msra.mxu0 0.0
  %54 = vmatprep.subr.mxu0 0.0
  %55 = vmatpush1.msra.mxu0 0.0
  %56 = vmatprep.subr.mxu0 0.0
  %57 = vmatpush1.msra.mxu0 0.0
  %58 = vmatprep.subr.mxu0 0.0
  %59 = vmatpush1.msra.mxu0 0.0
  %60 = vmatprep.subr.mxu0 0.0
  %61 = vmatpush1.msra.mxu0 0.0
  %62 = vmatprep.subr.mxu0 0.0
  %63 = vmatpush1.msra.mxu0 0.0
  %64 = vmatprep.subr.mxu0 0.0
  %65 = vmatpush1.msra.mxu0 0.0
  %66 = vmatprep.subr.mxu0 0.0
  %67 = vmatpush1.msra.mxu0 0.0
  %68 = vmatprep.subr.mxu0 0.0
  %69 = vmatpush1.msra.mxu0 0.0
  %70 = vmatprep.subr.mxu0 0.0
  %71 = vmatpush1.msra.mxu0 0.0
  %72 = vmatprep.subr.mxu0 0.0
  %73 = vmatpush1.msra.mxu0 0.0
  %74 = vmatprep.subr.mxu0 0.0
  %75 = vmatpush1.msra.mxu0 0.0
  %76 = vmatprep.subr.mxu0 0.0
  %77 = vmatpush1.msra.mxu0 0.0
  %78 = vmatprep.subr.mxu0 0.0
  %79 = vmatpush1.msra.mxu0 0.0
  %80 = vmatprep.subr.mxu0 0.0
  %81 = vmatpush1.msra.mxu0 0.0
  %82 = vmatprep.subr.mxu0 0.0
  %83 = vmatpush1.msra.mxu0 0.0
  %84 = vmatprep.subr.mxu0 0.0
  %85 = vmatpush1.msra.mxu0 0.0
  %86 = vmatprep.subr.mxu0 0.0
  %87 = vmatpush1.msra.mxu0 0.0
  %88 = vmatprep.subr.mxu0 0.0
  %89 = vmatpush1.msra.mxu0 0.0
  %90 = vmatprep.subr.mxu0 0.0
  %91 = vmatpush1.msra.mxu0 0.0
  %92 = vmatprep.subr.mxu0 0.0
  %93 = vmatpush1.msra.mxu0 0.0
  %94 = vmatprep.subr.mxu0 0.0
  %95 = vmatpush1.msra.mxu0 0.0
  %96 = vmatprep.subr.mxu0 0.0
  %97 = vmatpush1.msra.mxu0 0.0
  %98 = vmatprep.subr.mxu0 0.0
  %99 = vmatpush1.msra.mxu0 0.0
  %100 = vmatprep.subr.mxu0 0.0
  %101 = vmatpush1.msra.mxu0 0.0
  %102 = vmatprep.subr.mxu0 0.0
  %103 = vmatpush1.msra.mxu0 0.0
  %104 = vmatprep.mubr.f32.mxu0 0.0
  %105 = vmatmul.mubr.f32.gmra.mrb[0].mxu0 %v38
  %v106 = vpop.f32.mrb[0].mxu0
  %v107 = vadd.f32 0.0, %v106
  %v108 = vpop.f32.mrb[0].mxu0
  %109 = vdwg.mxu0
  %v110 = vlaneseq
  %v111 = vshrl.u32 %v110, 7
  %v112 = vsub.s32 0, %v111
  %v113 = vrot.slane %v107, %v112
  %v115 = vsel %vm36, %v26, 0
  %117 = vmatprep.subr.mxu0 0.0
  %118 = vmatpush1.msra.mxu0 %v27
  %119 = vmatprep.subr.mxu0 0.0
  %120 = vmatpush1.msra.mxu0 %v28
  %121 = vmatprep.subr.mxu0 0.0
  %122 = vmatpush1.msra.mxu0 %v29
  %123 = vmatprep.subr.mxu0 0.0
  %124 = vmatpush1.msra.mxu0 %v30
  %125 = vmatprep.subr.mxu0 0.0
  %126 = vmatpush1.msra.mxu0 0.0
  %127 = vmatprep.subr.mxu0 0.0
  %128 = vmatpush1.msra.mxu0 0.0
  %129 = vmatprep.subr.mxu0 0.0
  %130 = vmatpush1.msra.mxu0 0.0
  %131 = vmatprep.subr.mxu0 0.0
  %132 = vmatpush1.msra.mxu0 0.0
  %133 = vmatprep.subr.mxu0 0.0
  %134 = vmatpush1.msra.mxu0 0.0
  %135 = vmatprep.subr.mxu0 0.0
  %136 = vmatpush1.msra.mxu0 0.0
  %137 = vmatprep.subr.mxu0 0.0
  %138 = vmatpush1.msra.mxu0 0.0
  %139 = vmatprep.subr.mxu0 0.0
  %140 = vmatpush1.msra.mxu0 0.0
  %141 = vmatprep.subr.mxu0 0.0
  %142 = vmatpush1.msra.mxu0 0.0
  %143 = vmatprep.subr.mxu0 0.0
  %144 = vmatpush1.msra.mxu0 0.0
  %145 = vmatprep.subr.mxu0 0.0
  %146 = vmatpush1.msra.mxu0 0.0
  %147 = vmatprep.subr.mxu0 0.0
  %148 = vmatpush1.msra.mxu0 0.0
  %149 = vmatprep.subr.mxu0 0.0
  %150 = vmatpush1.msra.mxu0 0.0
  %151 = vmatprep.subr.mxu0 0.0
  %152 = vmatpush1.msra.mxu0 0.0
  %153 = vmatprep.subr.mxu0 0.0
  %154 = vmatpush1.msra.mxu0 0.0
  %155 = vmatprep.subr.mxu0 0.0
  %156 = vmatpush1.msra.mxu0 0.0
  %157 = vmatprep.subr.mxu0 0.0
  %158 = vmatpush1.msra.mxu0 0.0
  %159 = vmatprep.subr.mxu0 0.0
  %160 = vmatpush1.msra.mxu0 0.0
  %161 = vmatprep.subr.mxu0 0.0
  %162 = vmatpush1.msra.mxu0 0.0
  %163 = vmatprep.subr.mxu0 0.0
  %164 = vmatpush1.msra.mxu0 0.0
  %165 = vmatprep.subr.mxu0 0.0
  %166 = vmatpush1.msra.mxu0 0.0
  %167 = vmatprep.subr.mxu0 0.0
  %168 = vmatpush1.msra.mxu0 0.0
  %169 = vmatprep.subr.mxu0 0.0
  %170 = vmatpush1.msra.mxu0 0.0
  %171 = vmatprep.subr.mxu0 0.0
  %172 = vmatpush1.msra.mxu0 0.0
  %173 = vmatprep.subr.mxu0 0.0
  %174 = vmatpush1.msra.mxu0 0.0
  %175 = vmatprep.subr.mxu0 0.0
  %176 = vmatpush1.msra.mxu0 0.0
  %177 = vmatprep.subr.mxu0 0.0
  %178 = vmatpush1.msra.mxu0 0.0
  %179 = vmatprep.subr.mxu0 0.0
  %180 = vmatpush1.msra.mxu0 0.0
  %181 = vmatprep.mubr.f32.mxu0 0.0
  %182 = vmatmul.mubr.f32.gmra.mrb[0].mxu0 %v115
  %v183 = vpop.f32.mrb[0].mxu0
  %v184 = vadd.f32 %v113, %v183
  %v185 = vpop.f32.mrb[0].mxu0
  %186 = vdwg.mxu0
  %v187 = vld [vmem:[%s3] sm:$0x1]
  %v189 = vlaneseq
  %v190 = vshrl.u32 %v189, 7
  %v191 = vsub.s32 0, %v190
  %v192 = vrot.slane %v187, %v191
  %v194 = vadd.f32 %v184, %v192
  %v195 = vld [vmem:[%s4] sm:$0xff]
  %v196 = vld [vmem:[%s4 + $0x8] sm:$0xff]
  %v197 = vld [vmem:[%s4 + $0x10] sm:$0xff]
  %v198 = vld [vmem:[%s4 + $0x18] sm:$0xff]
  %v199 = vld [vmem:[%s5] sm:$0x1]
  %v201 = vlaneseq
  %v202 = vshrl.u32 %v201, 7
  %v203 = vsub.s32 0, %v202
  %v204 = vrot.slane %v199, %v203
  %v207 = vsel %vm36, %v194, 0
  %209 = vmatprep.subr.mxu0 0.0
  %210 = vmatpush1.msra.mxu0 %v195
  %211 = vmatprep.subr.mxu0 0.0
  %212 = vmatpush1.msra.mxu0 %v196
  %213 = vmatprep.subr.mxu0 0.0
  %214 = vmatpush1.msra.mxu0 %v197
  %215 = vmatprep.subr.mxu0 0.0
  %216 = vmatpush1.msra.mxu0 %v198
  %217 = vmatprep.subr.mxu0 0.0
  %218 = vmatpush1.msra.mxu0 0.0
  %219 = vmatprep.subr.mxu0 0.0
  %220 = vmatpush1.msra.mxu0 0.0
  %221 = vmatprep.subr.mxu0 0.0
  %222 = vmatpush1.msra.mxu0 0.0
  %223 = vmatprep.subr.mxu0 0.0
  %224 = vmatpush1.msra.mxu0 0.0
  %225 = vmatprep.subr.mxu0 0.0
  %226 = vmatpush1.msra.mxu0 0.0
  %227 = vmatprep.subr.mxu0 0.0
  %228 = vmatpush1.msra.mxu0 0.0
  %229 = vmatprep.subr.mxu0 0.0
  %230 = vmatpush1.msra.mxu0 0.0
  %231 = vmatprep.subr.mxu0 0.0
  %232 = vmatpush1.msra.mxu0 0.0
  %233 = vmatprep.subr.mxu0 0.0
  %234 = vmatpush1.msra.mxu0 0.0
  %235 = vmatprep.subr.mxu0 0.0
  %236 = vmatpush1.msra.mxu0 0.0
  %237 = vmatprep.subr.mxu0 0.0
  %238 = vmatpush1.msra.mxu0 0.0
  %239 = vmatprep.subr.mxu0 0.0
  %240 = vmatpush1.msra.mxu0 0.0
  %241 = vmatprep.subr.mxu0 0.0
  %242 = vmatpush1.msra.mxu0 0.0
  %243 = vmatprep.subr.mxu0 0.0
  %244 = vmatpush1.msra.mxu0 0.0
  %245 = vmatprep.subr.mxu0 0.0
  %246 = vmatpush1.msra.mxu0 0.0
  %247 = vmatprep.subr.mxu0 0.0
  %248 = vmatpush1.msra.mxu0 0.0
  %249 = vmatprep.subr.mxu0 0.0
  %250 = vmatpush1.msra.mxu0 0.0
  %251 = vmatprep.subr.mxu0 0.0
  %252 = vmatpush1.msra.mxu0 0.0
  %253 = vmatprep.subr.mxu0 0.0
  %254 = vmatpush1.msra.mxu0 0.0
  %255 = vmatprep.subr.mxu0 0.0
  %256 = vmatpush1.msra.mxu0 0.0
  %257 = vmatprep.subr.mxu0 0.0
  %258 = vmatpush1.msra.mxu0 0.0
  %259 = vmatprep.subr.mxu0 0.0
  %260 = vmatpush1.msra.mxu0 0.0
  %261 = vmatprep.subr.mxu0 0.0
  %262 = vmatpush1.msra.mxu0 0.0
  %263 = vmatprep.subr.mxu0 0.0
  %264 = vmatpush1.msra.mxu0 0.0
  %265 = vmatprep.subr.mxu0 0.0
  %266 = vmatpush1.msra.mxu0 0.0
  %267 = vmatprep.subr.mxu0 0.0
  %268 = vmatpush1.msra.mxu0 0.0
  %269 = vmatprep.subr.mxu0 0.0
  %270 = vmatpush1.msra.mxu0 0.0
  %271 = vmatprep.subr.mxu0 0.0
  %272 = vmatpush1.msra.mxu0 0.0
  %273 = vmatprep.mubr.f32.mxu0 0.0
  %274 = vmatmul.mubr.f32.gmra.mrb[0].mxu0 %v207
  %v275 = vpop.f32.mrb[0].mxu0
  %v276 = vadd.f32 %v204, %v275
  %v277 = vpop.f32.mrb[0].mxu0
  %278 = vdwg.mxu0
  %v279 = vld [vmem:[%s6] sm:$0xff]
  %v280 = vld [vmem:[%s6 + $0x8] sm:$0xff]
  %v281 = vld [vmem:[%s6 + $0x10] sm:$0xff]
  %v282 = vld [vmem:[%s6 + $0x18] sm:$0xff]
  %v284 = vsel %vm36, 0.0, 0
  %286 = vmatprep.subr.mxu0 0.0
  %287 = vmatpush1.msra.mxu0 %v279
  %288 = vmatprep.subr.mxu0 0.0
  %289 = vmatpush1.msra.mxu0 %v280
  %290 = vmatprep.subr.mxu0 0.0
  %291 = vmatpush1.msra.mxu0 %v281
  %292 = vmatprep.subr.mxu0 0.0
  %293 = vmatpush1.msra.mxu0 %v282
  %294 = vmatprep.subr.mxu0 0.0
  %295 = vmatpush1.msra.mxu0 0.0
  %296 = vmatprep.subr.mxu0 0.0
  %297 = vmatpush1.msra.mxu0 0.0
  %298 = vmatprep.subr.mxu0 0.0
  %299 = vmatpush1.msra.mxu0 0.0
  %300 = vmatprep.subr.mxu0 0.0
  %301 = vmatpush1.msra.mxu0 0.0
  %302 = vmatprep.subr.mxu0 0.0
  %303 = vmatpush1.msra.mxu0 0.0
  %304 = vmatprep.subr.mxu0 0.0
  %305 = vmatpush1.msra.mxu0 0.0
  %306 = vmatprep.subr.mxu0 0.0
  %307 = vmatpush1.msra.mxu0 0.0
  %308 = vmatprep.subr.mxu0 0.0
  %309 = vmatpush1.msra.mxu0 0.0
  %310 = vmatprep.subr.mxu0 0.0
  %311 = vmatpush1.msra.mxu0 0.0
  %312 = vmatprep.subr.mxu0 0.0
  %313 = vmatpush1.msra.mxu0 0.0
  %314 = vmatprep.subr.mxu0 0.0
  %315 = vmatpush1.msra.mxu0 0.0
  %316 = vmatprep.subr.mxu0 0.0
  %317 = vmatpush1.msra.mxu0 0.0
  %318 = vmatprep.subr.mxu0 0.0
  %319 = vmatpush1.msra.mxu0 0.0
  %320 = vmatprep.subr.mxu0 0.0
  %321 = vmatpush1.msra.mxu0 0.0
  %322 = vmatprep.subr.mxu0 0.0
  %323 = vmatpush1.msra.mxu0 0.0
  %324 = vmatprep.subr.mxu0 0.0
  %325 = vmatpush1.msra.mxu0 0.0
  %326 = vmatprep.subr.mxu0 0.0
  %327 = vmatpush1.msra.mxu0 0.0
  %328 = vmatprep.subr.mxu0 0.0
  %329 = vmatpush1.msra.mxu0 0.0
  %330 = vmatprep.subr.mxu0 0.0
  %331 = vmatpush1.msra.mxu0 0.0
  %332 = vmatprep.subr.mxu0 0.0
  %333 = vmatpush1.msra.mxu0 0.0
  %334 = vmatprep.subr.mxu0 0.0
  %335 = vmatpush1.msra.mxu0 0.0
  %336 = vmatprep.subr.mxu0 0.0
  %337 = vmatpush1.msra.mxu0 0.0
  %338 = vmatprep.subr.mxu0 0.0
  %339 = vmatpush1.msra.mxu0 0.0
  %340 = vmatprep.subr.mxu0 0.0
  %341 = vmatpush1.msra.mxu0 0.0
  %342 = vmatprep.subr.mxu0 0.0
  %343 = vmatpush1.msra.mxu0 0.0
  %344 = vmatprep.subr.mxu0 0.0
  %345 = vmatpush1.msra.mxu0 0.0
  %346 = vmatprep.subr.mxu0 0.0
  %347 = vmatpush1.msra.mxu0 0.0
  %348 = vmatprep.subr.mxu0 0.0
  %349 = vmatpush1.msra.mxu0 0.0
  %350 = vmatprep.mubr.f32.mxu0 0.0
  %351 = vmatmul.mubr.f32.gmra.mrb[0].mxu0 %v284
  %v352 = vpop.f32.mrb[0].mxu0
  %v353 = vadd.f32 0.0, %v352
  %v354 = vpop.f32.mrb[0].mxu0
  %355 = vdwg.mxu0
  %v356 = vadd.f32 %v276, %v353
  %v357 = vxor.u32 %v356, 2147483648
  %v358 = vmul.f32 %v357, 1.442695
  %v359 = vpow.pop %v358
  %v360 = vadd.f32 %v359, 1.0
  %v361 = vrcp.pop %v360
  %v362 = vmul.f32 1.0, %v361
  %v363 = vtanh.pop %v356
  %v364 = vmul.f32 %v362, 0.0
  %366 = vrot.lane.b32.xlu0 %v363, 64
  %v367 = vpop.permute.xlu0 %366
  %v369 = vmul.f32 %v362, %v367
  %371 = vrot.lane.b32.xlu0 %v369, 32
  %v372 = vpop.permute.xlu0 %371
  %v374 = vadd.f32 %v364, %v372
  %v375 = vtanh.pop %v374
  %377 = vrot.lane.b32.xlu0 %v375, 64
  %v378 = vpop.permute.xlu0 %377
  %v380 = vmul.f32 %v362, %v378
  %382 = vrot.lane.b32.xlu0 %v380, 32
  %v383 = vpop.permute.xlu0 %382
  %vm385 = vcmask 254976
  %386 = vst.msk [vmem:[#allocation2] sm:$0x3] %vm385, %v383
  %v387 = vld [vmem:[%s6] sm:$0xff]
  %v388 = vld [vmem:[%s6 + $0x8] sm:$0xff]
  %v389 = vld [vmem:[%s6 + $0x10] sm:$0xff]
  %v390 = vld [vmem:[%s6 + $0x18] sm:$0xff]
  %v391 = vsel %vm36, %v383, 0
  %393 = vmatprep.subr.mxu0 0.0
  %394 = vmatpush1.msra.mxu0 %v387
  %395 = vmatprep.subr.mxu0 0.0
  %396 = vmatpush1.msra.mxu0 %v388
  %397 = vmatprep.subr.mxu0 0.0
  %398 = vmatpush1.msra.mxu0 %v389
  %399 = vmatprep.subr.mxu0 0.0
  %400 = vmatpush1.msra.mxu0 %v390
  %401 = vmatprep.subr.mxu0 0.0
  %402 = vmatpush1.msra.mxu0 0.0
  %403 = vmatprep.subr.mxu0 0.0
  %404 = vmatpush1.msra.mxu0 0.0
  %405 = vmatprep.subr.mxu0 0.0
  %406 = vmatpush1.msra.mxu0 0.0
  %407 = vmatprep.subr.mxu0 0.0
  %408 = vmatpush1.msra.mxu0 0.0
  %409 = vmatprep.subr.mxu0 0.0
  %410 = vmatpush1.msra.mxu0 0.0
  %411 = vmatprep.subr.mxu0 0.0
  %412 = vmatpush1.msra.mxu0 0.0
  %413 = vmatprep.subr.mxu0 0.0
  %414 = vmatpush1.msra.mxu0 0.0
  %415 = vmatprep.subr.mxu0 0.0
  %416 = vmatpush1.msra.mxu0 0.0
  %417 = vmatprep.subr.mxu0 0.0
  %418 = vmatpush1.msra.mxu0 0.0
  %419 = vmatprep.subr.mxu0 0.0
  %420 = vmatpush1.msra.mxu0 0.0
  %421 = vmatprep.subr.mxu0 0.0
  %422 = vmatpush1.msra.mxu0 0.0
  %423 = vmatprep.subr.mxu0 0.0
  %424 = vmatpush1.msra.mxu0 0.0
  %425 = vmatprep.subr.mxu0 0.0
  %426 = vmatpush1.msra.mxu0 0.0
  %427 = vmatprep.subr.mxu0 0.0
  %428 = vmatpush1.msra.mxu0 0.0
  %429 = vmatprep.subr.mxu0 0.0
  %430 = vmatpush1.msra.mxu0 0.0
  %431 = vmatprep.subr.mxu0 0.0
  %432 = vmatpush1.msra.mxu0 0.0
  %433 = vmatprep.subr.mxu0 0.0
  %434 = vmatpush1.msra.mxu0 0.0
  %435 = vmatprep.subr.mxu0 0.0
  %436 = vmatpush1.msra.mxu0 0.0
  %437 = vmatprep.subr.mxu0 0.0
  %438 = vmatpush1.msra.mxu0 0.0
  %439 = vmatprep.subr.mxu0 0.0
  %440 = vmatpush1.msra.mxu0 0.0
  %441 = vmatprep.subr.mxu0 0.0
  %442 = vmatpush1.msra.mxu0 0.0
  %443 = vmatprep.subr.mxu0 0.0
  %444 = vmatpush1.msra.mxu0 0.0
  %445 = vmatprep.subr.mxu0 0.0
  %446 = vmatpush1.msra.mxu0 0.0
  %447 = vmatprep.subr.mxu0 0.0
  %448 = vmatpush1.msra.mxu0 0.0
  %449 = vmatprep.subr.mxu0 0.0
  %450 = vmatpush1.msra.mxu0 0.0
  %451 = vmatprep.subr.mxu0 0.0
  %452 = vmatpush1.msra.mxu0 0.0
  %453 = vmatprep.subr.mxu0 0.0
  %454 = vmatpush1.msra.mxu0 0.0
  %455 = vmatprep.subr.mxu0 0.0
  %456 = vmatpush1.msra.mxu0 0.0
  %457 = vmatprep.mubr.f32.mxu0 0.0
  %458 = vmatmul.mubr.f32.gmra.mrb[0].mxu0 %v391
  %v459 = vpop.f32.mrb[0].mxu0
  %v460 = vadd.f32 0.0, %v459
  %v461 = vpop.f32.mrb[0].mxu0
  %462 = vdwg.mxu0
  %v463 = vadd.f32 %v276, %v460
  %v464 = vxor.u32 %v463, 2147483648
  %v465 = vmul.f32 %v464, 1.442695
  %v466 = vpow.pop %v465
  %v467 = vadd.f32 %v466, 1.0
  %v468 = vrcp.pop %v467
  %v469 = vmul.f32 1.0, %v468
  %v470 = vtanh.pop %v463
  %v471 = vmul.f32 %v469, %v374
  %473 = vrot.lane.b32.xlu0 %v470, 64
  %v474 = vpop.permute.xlu0 %473
  %v476 = vmul.f32 %v469, %v474
  %478 = vrot.lane.b32.xlu0 %v476, 32
  %v479 = vpop.permute.xlu0 %478
  %v481 = vadd.f32 %v471, %v479
  %v482 = vtanh.pop %v481
  %484 = vrot.lane.b32.xlu0 %v482, 64
  %v485 = vpop.permute.xlu0 %484
  %v487 = vmul.f32 %v469, %v485
  %489 = vrot.lane.b32.xlu0 %v487, 32
  %v490 = vpop.permute.xlu0 %489
  %s492 = scalar_lea.vmem [#allocation2], 2
  %493 = vst.msk [vmem:[%s492] sm:$0x3] %vm385, %v490
  %v494 = vld [vmem:[%s6] sm:$0xff]
  %v495 = vld [vmem:[%s6 + $0x8] sm:$0xff]
  %v496 = vld [vmem:[%s6 + $0x10] sm:$0xff]
  %v497 = vld [vmem:[%s6 + $0x18] sm:$0xff]
  %v498 = vsel %vm36, %v490, 0
  %500 = vmatprep.subr.mxu0 0.0
  %501 = vmatpush1.msra.mxu0 %v494
  %502 = vmatprep.subr.mxu0 0.0
  %503 = vmatpush1.msra.mxu0 %v495
  %504 = vmatprep.subr.mxu0 0.0
  %505 = vmatpush1.msra.mxu0 %v496
  %506 = vmatprep.subr.mxu0 0.0
  %507 = vmatpush1.msra.mxu0 %v497
  %508 = vmatprep.subr.mxu0 0.0
  %509 = vmatpush1.msra.mxu0 0.0
  %510 = vmatprep.subr.mxu0 0.0
  %511 = vmatpush1.msra.mxu0 0.0
  %512 = vmatprep.subr.mxu0 0.0
  %513 = vmatpush1.msra.mxu0 0.0
  %514 = vmatprep.subr.mxu0 0.0
  %515 = vmatpush1.msra.mxu0 0.0
  %516 = vmatprep.subr.mxu0 0.0
  %517 = vmatpush1.msra.mxu0 0.0
  %518 = vmatprep.subr.mxu0 0.0
  %519 = vmatpush1.msra.mxu0 0.0
  %520 = vmatprep.subr.mxu0 0.0
  %521 = vmatpush1.msra.mxu0 0.0
  %522 = vmatprep.subr.mxu0 0.0
  %523 = vmatpush1.msra.mxu0 0.0
  %524 = vmatprep.subr.mxu0 0.0
  %525 = vmatpush1.msra.mxu0 0.0
  %526 = vmatprep.subr.mxu0 0.0
  %527 = vmatpush1.msra.mxu0 0.0
  %528 = vmatprep.subr.mxu0 0.0
  %529 = vmatpush1.msra.mxu0 0.0
  %530 = vmatprep.subr.mxu0 0.0
  %531 = vmatpush1.msra.mxu0 0.0
  %532 = vmatprep.subr.mxu0 0.0
  %533 = vmatpush1.msra.mxu0 0.0
  %534 = vmatprep.subr.mxu0 0.0
  %535 = vmatpush1.msra.mxu0 0.0
  %536 = vmatprep.subr.mxu0 0.0
  %537 = vmatpush1.msra.mxu0 0.0
  %538 = vmatprep.subr.mxu0 0.0
  %539 = vmatpush1.msra.mxu0 0.0
  %540 = vmatprep.subr.mxu0 0.0
  %541 = vmatpush1.msra.mxu0 0.0
  %542 = vmatprep.subr.mxu0 0.0
  %543 = vmatpush1.msra.mxu0 0.0
  %544 = vmatprep.subr.mxu0 0.0
  %545 = vmatpush1.msra.mxu0 0.0
  %546 = vmatprep.subr.mxu0 0.0
  %547 = vmatpush1.msra.mxu0 0.0
  %548 = vmatprep.subr.mxu0 0.0
  %549 = vmatpush1.msra.mxu0 0.0
  %550 = vmatprep.subr.mxu0 0.0
  %551 = vmatpush1.msra.mxu0 0.0
  %552 = vmatprep.subr.mxu0 0.0
  %553 = vmatpush1.msra.mxu0 0.0
  %554 = vmatprep.subr.mxu0 0.0
  %555 = vmatpush1.msra.mxu0 0.0
  %556 = vmatprep.subr.mxu0 0.0
  %557 = vmatpush1.msra.mxu0 0.0
  %558 = vmatprep.subr.mxu0 0.0
  %559 = vmatpush1.msra.mxu0 0.0
  %560 = vmatprep.subr.mxu0 0.0
  %561 = vmatpush1.msra.mxu0 0.0
  %562 = vmatprep.subr.mxu0 0.0
  %563 = vmatpush1.msra.mxu0 0.0
  %564 = vmatprep.mubr.f32.mxu0 0.0
  %565 = vmatmul.mubr.f32.gmra.mrb[0].mxu0 %v498
  %v566 = vpop.f32.mrb[0].mxu0
  %v567 = vadd.f32 0.0, %v566
  %v568 = vpop.f32.mrb[0].mxu0
  %569 = vdwg.mxu0
  %v570 = vadd.f32 %v276, %v567
  %v571 = vxor.u32 %v570, 2147483648
  %v572 = vmul.f32 %v571, 1.442695
  %v573 = vpow.pop %v572
  %v574 = vadd.f32 %v573, 1.0
  %v575 = vrcp.pop %v574
  %v576 = vmul.f32 1.0, %v575
  %v577 = vtanh.pop %v570
  %v578 = vmul.f32 %v576, %v481
  %580 = vrot.lane.b32.xlu0 %v577, 64
  %v581 = vpop.permute.xlu0 %580
  %v583 = vmul.f32 %v576, %v581
  %585 = vrot.lane.b32.xlu0 %v583, 32
  %v586 = vpop.permute.xlu0 %585
  %v588 = vadd.f32 %v578, %v586
  %v589 = vtanh.pop %v588
  %591 = vrot.lane.b32.xlu0 %v589, 64
  %v592 = vpop.permute.xlu0 %591
  %v594 = vmul.f32 %v576, %v592
  %596 = vrot.lane.b32.xlu0 %v594, 32
  %v597 = vpop.permute.xlu0 %596
  %s599 = scalar_lea.vmem [#allocation2], 4
  %600 = vst.msk [vmem:[%s599] sm:$0x3] %vm385, %v597
  %v601 = vld [vmem:[%s6] sm:$0xff]
  %v602 = vld [vmem:[%s6 + $0x8] sm:$0xff]
  %v603 = vld [vmem:[%s6 + $0x10] sm:$0xff]
  %v604 = vld [vmem:[%s6 + $0x18] sm:$0xff]
  %v605 = vsel %vm36, %v597, 0
  %607 = vmatprep.subr.mxu0 0.0
  %608 = vmatpush1.msra.mxu0 %v601
  %609 = vmatprep.subr.mxu0 0.0
  %610 = vmatpush1.msra.mxu0 %v602
  %611 = vmatprep.subr.mxu0 0.0
  %612 = vmatpush1.msra.mxu0 %v603
  %613 = vmatprep.subr.mxu0 0.0
  %614 = vmatpush1.msra.mxu0 %v604
  %615 = vmatprep.subr.mxu0 0.0
  %616 = vmatpush1.msra.mxu0 0.0
  %617 = vmatprep.subr.mxu0 0.0
  %618 = vmatpush1.msra.mxu0 0.0
  %619 = vmatprep.subr.mxu0 0.0
  %620 = vmatpush1.msra.mxu0 0.0
  %621 = vmatprep.subr.mxu0 0.0
  %622 = vmatpush1.msra.mxu0 0.0
  %623 = vmatprep.subr.mxu0 0.0
  %624 = vmatpush1.msra.mxu0 0.0
  %625 = vmatprep.subr.mxu0 0.0
  %626 = vmatpush1.msra.mxu0 0.0
  %627 = vmatprep.subr.mxu0 0.0
  %628 = vmatpush1.msra.mxu0 0.0
  %629 = vmatprep.subr.mxu0 0.0
  %630 = vmatpush1.msra.mxu0 0.0
  %631 = vmatprep.subr.mxu0 0.0
  %632 = vmatpush1.msra.mxu0 0.0
  %633 = vmatprep.subr.mxu0 0.0
  %634 = vmatpush1.msra.mxu0 0.0
  %635 = vmatprep.subr.mxu0 0.0
  %636 = vmatpush1.msra.mxu0 0.0
  %637 = vmatprep.subr.mxu0 0.0
  %638 = vmatpush1.msra.mxu0 0.0
  %639 = vmatprep.subr.mxu0 0.0
  %640 = vmatpush1.msra.mxu0 0.0
  %641 = vmatprep.subr.mxu0 0.0
  %642 = vmatpush1.msra.mxu0 0.0
  %643 = vmatprep.subr.mxu0 0.0
  %644 = vmatpush1.msra.mxu0 0.0
  %645 = vmatprep.subr.mxu0 0.0
  %646 = vmatpush1.msra.mxu0 0.0
  %647 = vmatprep.subr.mxu0 0.0
  %648 = vmatpush1.msra.mxu0 0.0
  %649 = vmatprep.subr.mxu0 0.0
  %650 = vmatpush1.msra.mxu0 0.0
  %651 = vmatprep.subr.mxu0 0.0
  %652 = vmatpush1.msra.mxu0 0.0
  %653 = vmatprep.subr.mxu0 0.0
  %654 = vmatpush1.msra.mxu0 0.0
  %655 = vmatprep.subr.mxu0 0.0
  %656 = vmatpush1.msra.mxu0 0.0
  %657 = vmatprep.subr.mxu0 0.0
  %658 = vmatpush1.msra.mxu0 0.0
  %659 = vmatprep.subr.mxu0 0.0
  %660 = vmatpush1.msra.mxu0 0.0
  %661 = vmatprep.subr.mxu0 0.0
  %662 = vmatpush1.msra.mxu0 0.0
  %663 = vmatprep.subr.mxu0 0.0
  %664 = vmatpush1.msra.mxu0 0.0
  %665 = vmatprep.subr.mxu0 0.0
  %666 = vmatpush1.msra.mxu0 0.0
  %667 = vmatprep.subr.mxu0 0.0
  %668 = vmatpush1.msra.mxu0 0.0
  %669 = vmatprep.subr.mxu0 0.0
  %670 = vmatpush1.msra.mxu0 0.0
  %671 = vmatprep.mubr.f32.mxu0 0.0
  %672 = vmatmul.mubr.f32.gmra.mrb[0].mxu0 %v605
  %v673 = vpop.f32.mrb[0].mxu0
  %v674 = vadd.f32 0.0, %v673
  %v675 = vpop.f32.mrb[0].mxu0
  %676 = vdwg.mxu0
  %v677 = vadd.f32 %v276, %v674
  %v678 = vxor.u32 %v677, 2147483648
  %v679 = vmul.f32 %v678, 1.442695
  %v680 = vpow.pop %v679
  %v681 = vadd.f32 %v680, 1.0
  %v682 = vrcp.pop %v681
  %v683 = vmul.f32 1.0, %v682
  %v684 = vtanh.pop %v677
  %v685 = vmul.f32 %v683, %v588
  %687 = vrot.lane.b32.xlu0 %v684, 64
  %v688 = vpop.permute.xlu0 %687
  %v690 = vmul.f32 %v683, %v688
  %692 = vrot.lane.b32.xlu0 %v690, 32
  %v693 = vpop.permute.xlu0 %692
  %v695 = vadd.f32 %v685, %v693
  %v696 = vtanh.pop %v695
  %698 = vrot.lane.b32.xlu0 %v696, 64
  %v699 = vpop.permute.xlu0 %698
  %v701 = vmul.f32 %v683, %v699
  %703 = vrot.lane.b32.xlu0 %v701, 32
  %v704 = vpop.permute.xlu0 %703
  %s706 = scalar_lea.vmem [#allocation2], 6
  %707 = vst.msk [vmem:[%s706] sm:$0x3] %vm385, %v704
  %v708 = vld [vmem:[%s6] sm:$0xff]
  %v709 = vld [vmem:[%s6 + $0x8] sm:$0xff]
  %v710 = vld [vmem:[%s6 + $0x10] sm:$0xff]
  %v711 = vld [vmem:[%s6 + $0x18] sm:$0xff]
  %v712 = vsel %vm36, %v704, 0
  %714 = vmatprep.subr.mxu0 0.0
  %715 = vmatpush1.msra.mxu0 %v708
  %716 = vmatprep.subr.mxu0 0.0
  %717 = vmatpush1.msra.mxu0 %v709
  %718 = vmatprep.subr.mxu0 0.0
  %719 = vmatpush1.msra.mxu0 %v710
  %720 = vmatprep.subr.mxu0 0.0
  %721 = vmatpush1.msra.mxu0 %v711
  %722 = vmatprep.subr.mxu0 0.0
  %723 = vmatpush1.msra.mxu0 0.0
  %724 = vmatprep.subr.mxu0 0.0
  %725 = vmatpush1.msra.mxu0 0.0
  %726 = vmatprep.subr.mxu0 0.0
  %727 = vmatpush1.msra.mxu0 0.0
  %728 = vmatprep.subr.mxu0 0.0
  %729 = vmatpush1.msra.mxu0 0.0
  %730 = vmatprep.subr.mxu0 0.0
  %731 = vmatpush1.msra.mxu0 0.0
  %732 = vmatprep.subr.mxu0 0.0
  %733 = vmatpush1.msra.mxu0 0.0
  %734 = vmatprep.subr.mxu0 0.0
  %735 = vmatpush1.msra.mxu0 0.0
  %736 = vmatprep.subr.mxu0 0.0
  %737 = vmatpush1.msra.mxu0 0.0
  %738 = vmatprep.subr.mxu0 0.0
  %739 = vmatpush1.msra.mxu0 0.0
  %740 = vmatprep.subr.mxu0 0.0
  %741 = vmatpush1.msra.mxu0 0.0
  %742 = vmatprep.subr.mxu0 0.0
  %743 = vmatpush1.msra.mxu0 0.0
  %744 = vmatprep.subr.mxu0 0.0
  %745 = vmatpush1.msra.mxu0 0.0
  %746 = vmatprep.subr.mxu0 0.0
  %747 = vmatpush1.msra.mxu0 0.0
  %748 = vmatprep.subr.mxu0 0.0
  %749 = vmatpush1.msra.mxu0 0.0
  %750 = vmatprep.subr.mxu0 0.0
  %751 = vmatpush1.msra.mxu0 0.0
  %752 = vmatprep.subr.mxu0 0.0
  %753 = vmatpush1.msra.mxu0 0.0
  %754 = vmatprep.subr.mxu0 0.0
  %755 = vmatpush1.msra.mxu0 0.0
  %756 = vmatprep.subr.mxu0 0.0
  %757 = vmatpush1.msra.mxu0 0.0
  %758 = vmatprep.subr.mxu0 0.0
  %759 = vmatpush1.msra.mxu0 0.0
  %760 = vmatprep.subr.mxu0 0.0
  %761 = vmatpush1.msra.mxu0 0.0
  %762 = vmatprep.subr.mxu0 0.0
  %763 = vmatpush1.msra.mxu0 0.0
  %764 = vmatprep.subr.mxu0 0.0
  %765 = vmatpush1.msra.mxu0 0.0
  %766 = vmatprep.subr.mxu0 0.0
  %767 = vmatpush1.msra.mxu0 0.0
  %768 = vmatprep.subr.mxu0 0.0
  %769 = vmatpush1.msra.mxu0 0.0
  %770 = vmatprep.subr.mxu0 0.0
  %771 = vmatpush1.msra.mxu0 0.0
  %772 = vmatprep.subr.mxu0 0.0
  %773 = vmatpush1.msra.mxu0 0.0
  %774 = vmatprep.subr.mxu0 0.0
  %775 = vmatpush1.msra.mxu0 0.0
  %776 = vmatprep.subr.mxu0 0.0
  %777 = vmatpush1.msra.mxu0 0.0
  %778 = vmatprep.mubr.f32.mxu0 0.0
  %779 = vmatmul.mubr.f32.gmra.mrb[0].mxu0 %v712
  %v780 = vpop.f32.mrb[0].mxu0
  %v781 = vadd.f32 0.0, %v780
  %v782 = vpop.f32.mrb[0].mxu0
  %783 = vdwg.mxu0
  %v784 = vadd.f32 %v276, %v781
  %v785 = vxor.u32 %v784, 2147483648
  %v786 = vmul.f32 %v785, 1.442695
  %v787 = vpow.pop %v786
  %v788 = vadd.f32 %v787, 1.0
  %v789 = vrcp.pop %v788
  %v790 = vmul.f32 1.0, %v789
  %v791 = vtanh.pop %v784
  %v792 = vmul.f32 %v790, %v695
  %794 = vrot.lane.b32.xlu0 %v791, 64
  %v795 = vpop.permute.xlu0 %794
  %v797 = vmul.f32 %v790, %v795
  %799 = vrot.lane.b32.xlu0 %v797, 32
  %v800 = vpop.permute.xlu0 %799
  %v802 = vadd.f32 %v792, %v800
  %v803 = vtanh.pop %v802
  %805 = vrot.lane.b32.xlu0 %v803, 64
  %v806 = vpop.permute.xlu0 %805
  %v808 = vmul.f32 %v790, %v806
  %810 = vrot.lane.b32.xlu0 %v808, 32
  %v811 = vpop.permute.xlu0 %810
  %s813 = scalar_lea.vmem [#allocation2], 8
  %814 = vst.msk [vmem:[%s813] sm:$0x3] %vm385, %v811
  %v815 = vld [vmem:[%s6] sm:$0xff]
  %v816 = vld [vmem:[%s6 + $0x8] sm:$0xff]
  %v817 = vld [vmem:[%s6 + $0x10] sm:$0xff]
  %v818 = vld [vmem:[%s6 + $0x18] sm:$0xff]
  %v819 = vsel %vm36, %v811, 0
  %821 = vmatprep.subr.mxu0 0.0
  %822 = vmatpush1.msra.mxu0 %v815
  %823 = vmatprep.subr.mxu0 0.0
  %824 = vmatpush1.msra.mxu0 %v816
  %825 = vmatprep.subr.mxu0 0.0
  %826 = vmatpush1.msra.mxu0 %v817
  %827 = vmatprep.subr.mxu0 0.0
  %828 = vmatpush1.msra.mxu0 %v818
  %829 = vmatprep.subr.mxu0 0.0
  %830 = vmatpush1.msra.mxu0 0.0
  %831 = vmatprep.subr.mxu0 0.0
  %832 = vmatpush1.msra.mxu0 0.0
  %833 = vmatprep.subr.mxu0 0.0
  %834 = vmatpush1.msra.mxu0 0.0
  %835 = vmatprep.subr.mxu0 0.0
  %836 = vmatpush1.msra.mxu0 0.0
  %837 = vmatprep.subr.mxu0 0.0
  %838 = vmatpush1.msra.mxu0 0.0
  %839 = vmatprep.subr.mxu0 0.0
  %840 = vmatpush1.msra.mxu0 0.0
  %841 = vmatprep.subr.mxu0 0.0
  %842 = vmatpush1.msra.mxu0 0.0
  %843 = vmatprep.subr.mxu0 0.0
  %844 = vmatpush1.msra.mxu0 0.0
  %845 = vmatprep.subr.mxu0 0.0
  %846 = vmatpush1.msra.mxu0 0.0
  %847 = vmatprep.subr.mxu0 0.0
  %848 = vmatpush1.msra.mxu0 0.0
  %849 = vmatprep.subr.mxu0 0.0
  %850 = vmatpush1.msra.mxu0 0.0
  %851 = vmatprep.subr.mxu0 0.0
  %852 = vmatpush1.msra.mxu0 0.0
  %853 = vmatprep.subr.mxu0 0.0
  %854 = vmatpush1.msra.mxu0 0.0
  %855 = vmatprep.subr.mxu0 0.0
  %856 = vmatpush1.msra.mxu0 0.0
  %857 = vmatprep.subr.mxu0 0.0
  %858 = vmatpush1.msra.mxu0 0.0
  %859 = vmatprep.subr.mxu0 0.0
  %860 = vmatpush1.msra.mxu0 0.0
  %861 = vmatprep.subr.mxu0 0.0
  %862 = vmatpush1.msra.mxu0 0.0
  %863 = vmatprep.subr.mxu0 0.0
  %864 = vmatpush1.msra.mxu0 0.0
  %865 = vmatprep.subr.mxu0 0.0
  %866 = vmatpush1.msra.mxu0 0.0
  %867 = vmatprep.subr.mxu0 0.0
  %868 = vmatpush1.msra.mxu0 0.0
  %869 = vmatprep.subr.mxu0 0.0
  %870 = vmatpush1.msra.mxu0 0.0
  %871 = vmatprep.subr.mxu0 0.0
  %872 = vmatpush1.msra.mxu0 0.0
  %873 = vmatprep.subr.mxu0 0.0
  %874 = vmatpush1.msra.mxu0 0.0
  %875 = vmatprep.subr.mxu0 0.0
  %876 = vmatpush1.msra.mxu0 0.0
  %877 = vmatprep.subr.mxu0 0.0
  %878 = vmatpush1.msra.mxu0 0.0
  %879 = vmatprep.subr.mxu0 0.0
  %880 = vmatpush1.msra.mxu0 0.0
  %881 = vmatprep.subr.mxu0 0.0
  %882 = vmatpush1.msra.mxu0 0.0
  %883 = vmatprep.subr.mxu0 0.0
  %884 = vmatpush1.msra.mxu0 0.0
  %885 = vmatprep.mubr.f32.mxu0 0.0
  %886 = vmatmul.mubr.f32.gmra.mrb[0].mxu0 %v819
  %v887 = vpop.f32.mrb[0].mxu0
  %v888 = vadd.f32 0.0, %v887
  %v889 = vpop.f32.mrb[0].mxu0
  %890 = vdwg.mxu0
  %v891 = vadd.f32 %v276, %v888
  %v892 = vxor.u32 %v891, 2147483648
  %v893 = vmul.f32 %v892, 1.442695
  %v894 = vpow.pop %v893
  %v895 = vadd.f32 %v894, 1.0
  %v896 = vrcp.pop %v895
  %v897 = vmul.f32 1.0, %v896
  %v898 = vtanh.pop %v891
  %v899 = vmul.f32 %v897, %v802
  %901 = vrot.lane.b32.xlu0 %v898, 64
  %v902 = vpop.permute.xlu0 %901
  %v904 = vmul.f32 %v897, %v902
  %906 = vrot.lane.b32.xlu0 %v904, 32
  %v907 = vpop.permute.xlu0 %906
  %v909 = vadd.f32 %v899, %v907
  %v910 = vtanh.pop %v909
  %912 = vrot.lane.b32.xlu0 %v910, 64
  %v913 = vpop.permute.xlu0 %912
  %v915 = vmul.f32 %v897, %v913
  %917 = vrot.lane.b32.xlu0 %v915, 32
  %v918 = vpop.permute.xlu0 %917
  %s920 = scalar_lea.vmem [#allocation2], 10
  %921 = vst.msk [vmem:[%s920] sm:$0x3] %vm385, %v918
  %v922 = vld [vmem:[%s6] sm:$0xff]
  %v923 = vld [vmem:[%s6 + $0x8] sm:$0xff]
  %v924 = vld [vmem:[%s6 + $0x10] sm:$0xff]
  %v925 = vld [vmem:[%s6 + $0x18] sm:$0xff]
  %v926 = vsel %vm36, %v918, 0
  %928 = vmatprep.subr.mxu0 0.0
  %929 = vmatpush1.msra.mxu0 %v922
  %930 = vmatprep.subr.mxu0 0.0
  %931 = vmatpush1.msra.mxu0 %v923
  %932 = vmatprep.subr.mxu0 0.0
  %933 = vmatpush1.msra.mxu0 %v924
  %934 = vmatprep.subr.mxu0 0.0
  %935 = vmatpush1.msra.mxu0 %v925
  %936 = vmatprep.subr.mxu0 0.0
  %937 = vmatpush1.msra.mxu0 0.0
  %938 = vmatprep.subr.mxu0 0.0
  %939 = vmatpush1.msra.mxu0 0.0
  %940 = vmatprep.subr.mxu0 0.0
  %941 = vmatpush1.msra.mxu0 0.0
  %942 = vmatprep.subr.mxu0 0.0
  %943 = vmatpush1.msra.mxu0 0.0
  %944 = vmatprep.subr.mxu0 0.0
  %945 = vmatpush1.msra.mxu0 0.0
  %946 = vmatprep.subr.mxu0 0.0
  %947 = vmatpush1.msra.mxu0 0.0
  %948 = vmatprep.subr.mxu0 0.0
  %949 = vmatpush1.msra.mxu0 0.0
  %950 = vmatprep.subr.mxu0 0.0
  %951 = vmatpush1.msra.mxu0 0.0
  %952 = vmatprep.subr.mxu0 0.0
  %953 = vmatpush1.msra.mxu0 0.0
  %954 = vmatprep.subr.mxu0 0.0
  %955 = vmatpush1.msra.mxu0 0.0
  %956 = vmatprep.subr.mxu0 0.0
  %957 = vmatpush1.msra.mxu0 0.0
  %958 = vmatprep.subr.mxu0 0.0
  %959 = vmatpush1.msra.mxu0 0.0
  %960 = vmatprep.subr.mxu0 0.0
  %961 = vmatpush1.msra.mxu0 0.0
  %962 = vmatprep.subr.mxu0 0.0
  %963 = vmatpush1.msra.mxu0 0.0
  %964 = vmatprep.subr.mxu0 0.0
  %965 = vmatpush1.msra.mxu0 0.0
  %966 = vmatprep.subr.mxu0 0.0
  %967 = vmatpush1.msra.mxu0 0.0
  %968 = vmatprep.subr.mxu0 0.0
  %969 = vmatpush1.msra.mxu0 0.0
  %970 = vmatprep.subr.mxu0 0.0
  %971 = vmatpush1.msra.mxu0 0.0
  %972 = vmatprep.subr.mxu0 0.0
  %973 = vmatpush1.msra.mxu0 0.0
  %974 = vmatprep.subr.mxu0 0.0
  %975 = vmatpush1.msra.mxu0 0.0
  %976 = vmatprep.subr.mxu0 0.0
  %977 = vmatpush1.msra.mxu0 0.0
  %978 = vmatprep.subr.mxu0 0.0
  %979 = vmatpush1.msra.mxu0 0.0
  %980 = vmatprep.subr.mxu0 0.0
  %981 = vmatpush1.msra.mxu0 0.0
  %982 = vmatprep.subr.mxu0 0.0
  %983 = vmatpush1.msra.mxu0 0.0
  %984 = vmatprep.subr.mxu0 0.0
  %985 = vmatpush1.msra.mxu0 0.0
  %986 = vmatprep.subr.mxu0 0.0
  %987 = vmatpush1.msra.mxu0 0.0
  %988 = vmatprep.subr.mxu0 0.0
  %989 = vmatpush1.msra.mxu0 0.0
  %990 = vmatprep.subr.mxu0 0.0
  %991 = vmatpush1.msra.mxu0 0.0
  %992 = vmatprep.mubr.f32.mxu0 0.0
  %993 = vmatmul.mubr.f32.gmra.mrb[0].mxu0 %v926
  %v994 = vpop.f32.mrb[0].mxu0
  %v995 = vadd.f32 0.0, %v994
  %v996 = vpop.f32.mrb[0].mxu0
  %997 = vdwg.mxu0
  %v998 = vadd.f32 %v276, %v995
  %v999 = vxor.u32 %v998, 2147483648
  %v1000 = vmul.f32 %v999, 1.442695
  %v1001 = vpow.pop %v1000
  %v1002 = vadd.f32 %v1001, 1.0
  %v1003 = vrcp.pop %v1002
  %v1004 = vmul.f32 1.0, %v1003
  %v1005 = vtanh.pop %v998
  %v1006 = vmul.f32 %v1004, %v909
  %1008 = vrot.lane.b32.xlu0 %v1005, 64
  %v1009 = vpop.permute.xlu0 %1008
  %v1011 = vmul.f32 %v1004, %v1009
  %1013 = vrot.lane.b32.xlu0 %v1011, 32
  %v1014 = vpop.permute.xlu0 %1013
  %v1016 = vadd.f32 %v1006, %v1014
  %v1017 = vtanh.pop %v1016
  %1019 = vrot.lane.b32.xlu0 %v1017, 64
  %v1020 = vpop.permute.xlu0 %1019
  %v1022 = vmul.f32 %v1004, %v1020
  %1024 = vrot.lane.b32.xlu0 %v1022, 32
  %v1025 = vpop.permute.xlu0 %1024
  %s1027 = scalar_lea.vmem [#allocation2], 12
  %1028 = vst.msk [vmem:[%s1027] sm:$0x3] %vm385, %v1025
  %v1029 = vld [vmem:[%s6] sm:$0xff]
  %v1030 = vld [vmem:[%s6 + $0x8] sm:$0xff]
  %v1031 = vld [vmem:[%s6 + $0x10] sm:$0xff]
  %v1032 = vld [vmem:[%s6 + $0x18] sm:$0xff]
  %v1033 = vsel %vm36, %v1025, 0
  %1035 = vmatprep.subr.mxu0 0.0
  %1036 = vmatpush1.msra.mxu0 %v1029
  %1037 = vmatprep.subr.mxu0 0.0
  %1038 = vmatpush1.msra.mxu0 %v1030
  %1039 = vmatprep.subr.mxu0 0.0
  %1040 = vmatpush1.msra.mxu0 %v1031
  %1041 = vmatprep.subr.mxu0 0.0
  %1042 = vmatpush1.msra.mxu0 %v1032
  %1043 = vmatprep.subr.mxu0 0.0
  %1044 = vmatpush1.msra.mxu0 0.0
  %1045 = vmatprep.subr.mxu0 0.0
  %1046 = vmatpush1.msra.mxu0 0.0
  %1047 = vmatprep.subr.mxu0 0.0
  %1048 = vmatpush1.msra.mxu0 0.0
  %1049 = vmatprep.subr.mxu0 0.0
  %1050 = vmatpush1.msra.mxu0 0.0
  %1051 = vmatprep.subr.mxu0 0.0
  %1052 = vmatpush1.msra.mxu0 0.0
  %1053 = vmatprep.subr.mxu0 0.0
  %1054 = vmatpush1.msra.mxu0 0.0
  %1055 = vmatprep.subr.mxu0 0.0
  %1056 = vmatpush1.msra.mxu0 0.0
  %1057 = vmatprep.subr.mxu0 0.0
  %1058 = vmatpush1.msra.mxu0 0.0
  %1059 = vmatprep.subr.mxu0 0.0
  %1060 = vmatpush1.msra.mxu0 0.0
  %1061 = vmatprep.subr.mxu0 0.0
  %1062 = vmatpush1.msra.mxu0 0.0
  %1063 = vmatprep.subr.mxu0 0.0
  %1064 = vmatpush1.msra.mxu0 0.0
  %1065 = vmatprep.subr.mxu0 0.0
  %1066 = vmatpush1.msra.mxu0 0.0
  %1067 = vmatprep.subr.mxu0 0.0
  %1068 = vmatpush1.msra.mxu0 0.0
  %1069 = vmatprep.subr.mxu0 0.0
  %1070 = vmatpush1.msra.mxu0 0.0
  %1071 = vmatprep.subr.mxu0 0.0
  %1072 = vmatpush1.msra.mxu0 0.0
  %1073 = vmatprep.subr.mxu0 0.0
  %1074 = vmatpush1.msra.mxu0 0.0
  %1075 = vmatprep.subr.mxu0 0.0
  %1076 = vmatpush1.msra.mxu0 0.0
  %1077 = vmatprep.subr.mxu0 0.0
  %1078 = vmatpush1.msra.mxu0 0.0
  %1079 = vmatprep.subr.mxu0 0.0
  %1080 = vmatpush1.msra.mxu0 0.0
  %1081 = vmatprep.subr.mxu0 0.0
  %1082 = vmatpush1.msra.mxu0 0.0
  %1083 = vmatprep.subr.mxu0 0.0
  %1084 = vmatpush1.msra.mxu0 0.0
  %1085 = vmatprep.subr.mxu0 0.0
  %1086 = vmatpush1.msra.mxu0 0.0
  %1087 = vmatprep.subr.mxu0 0.0
  %1088 = vmatpush1.msra.mxu0 0.0
  %1089 = vmatprep.subr.mxu0 0.0
  %1090 = vmatpush1.msra.mxu0 0.0
  %1091 = vmatprep.subr.mxu0 0.0
  %1092 = vmatpush1.msra.mxu0 0.0
  %1093 = vmatprep.subr.mxu0 0.0
  %1094 = vmatpush1.msra.mxu0 0.0
  %1095 = vmatprep.subr.mxu0 0.0
  %1096 = vmatpush1.msra.mxu0 0.0
  %1097 = vmatprep.subr.mxu0 0.0
  %1098 = vmatpush1.msra.mxu0 0.0
  %1099 = vmatprep.mubr.f32.mxu0 0.0
  %1100 = vmatmul.mubr.f32.gmra.mrb[0].mxu0 %v1033
  %v1101 = vpop.f32.mrb[0].mxu0
  %v1102 = vadd.f32 0.0, %v1101
  %v1103 = vpop.f32.mrb[0].mxu0
  %1104 = vdwg.mxu0
  %v1105 = vadd.f32 %v276, %v1102
  %v1106 = vxor.u32 %v1105, 2147483648
  %v1107 = vmul.f32 %v1106, 1.442695
  %v1108 = vpow.pop %v1107
  %v1109 = vadd.f32 %v1108, 1.0
  %v1110 = vrcp.pop %v1109
  %v1111 = vmul.f32 1.0, %v1110
  %v1112 = vtanh.pop %v1105
  %v1113 = vmul.f32 %v1111, %v1016
  %1115 = vrot.lane.b32.xlu0 %v1112, 64
  %v1116 = vpop.permute.xlu0 %1115
  %v1118 = vmul.f32 %v1111, %v1116
  %1120 = vrot.lane.b32.xlu0 %v1118, 32
  %v1121 = vpop.permute.xlu0 %1120
  %v1123 = vadd.f32 %v1113, %v1121
  %v1124 = vtanh.pop %v1123
  %1126 = vrot.lane.b32.xlu0 %v1124, 64
  %v1127 = vpop.permute.xlu0 %1126
  %v1129 = vmul.f32 %v1111, %v1127
  %1131 = vrot.lane.b32.xlu0 %v1129, 32
  %v1132 = vpop.permute.xlu0 %1131
  %s1134 = scalar_lea.vmem [#allocation2], 14
  %1135 = vst.msk [vmem:[%s1134] sm:$0x3] %vm385, %v1132
  %v1136 = vld [vmem:[#allocation2] sm:$0x3]
  %v1137 = vld [vmem:[#allocation2 + $0x2] sm:$0x3]
  %v1138 = vld [vmem:[#allocation2 + $0x4] sm:$0x3]
  %v1139 = vld [vmem:[#allocation2 + $0x6] sm:$0x3]
  %v1140 = vld [vmem:[#allocation2 + $0x8] sm:$0x3]
  %v1141 = vld [vmem:[#allocation2 + $0xa] sm:$0x3]
  %v1142 = vld [vmem:[#allocation2 + $0xc] sm:$0x3]
  %v1143 = vld [vmem:[#allocation2 + $0xe] sm:$0x3]
  %v1152 = vrot.slane %v1137, 7
  %vm1153 = vcmask 1041409
  %v1154 = vsel %vm1153, %v1152, %v1136
  %v1155 = vrot.slane %v1138, 6
  %vm1156 = vcmask 1042434
  %v1157 = vsel %vm1156, %v1155, %v1154
  %v1158 = vrot.slane %v1139, 5
  %vm1159 = vcmask 1043459
  %v1160 = vsel %vm1159, %v1158, %v1157
  %v1161 = vrot.slane %v1140, 4
  %vm1162 = vcmask 1044484
  %v1163 = vsel %vm1162, %v1161, %v1160
  %v1164 = vrot.slane %v1141, 3
  %vm1165 = vcmask 1045509
  %v1166 = vsel %vm1165, %v1164, %v1163
  %v1167 = vrot.slane %v1142, 2
  %vm1168 = vcmask 1046534
  %v1169 = vsel %vm1168, %v1167, %v1166
  %v1170 = vrot.slane %v1143, 1
  %vm1171 = vcmask 1047559
  %v1172 = vsel %vm1171, %v1170, %v1169
  %1174 = vst.msk [vmem:[%s7] sm:$0xff] %vm36, %v1172
  %v1175 = vsel %vm1156, %v1152, %v1136
  %v1176 = vsel %vm1159, %v1155, %v1175
  %v1177 = vsel %vm1162, %v1158, %v1176
  %v1178 = vsel %vm1165, %v1161, %v1177
  %v1179 = vsel %vm1168, %v1164, %v1178
  %v1180 = vsel %vm1171, %v1167, %v1179
  %s1183 = scalar_lea.vmem %s7, 8
  %vm1184 = vcmask 261121
  %1185 = vst.msk [vmem:[%s1183 - $0x1] sm:$0xfe] %vm1184, %v1180
  %vm1186 = vcmask 253952
  %1187 = vst.msk [vmem:[%s1183 + $0x7] sm:$0x1] %vm1186, %v1170
  // Predicated region
  $region30: #{safm_forward.8} parent=0 // pred_check
    _
  $region31: #{safm_forward.8} parent=0 // pred_check_branch
    %1189 = sbr.rel (0) target = $region33
  $region32: #{safm_forward.8} parent=0 // pred_region
    _
  $region33: #{safm_forward.8} parent=0 // pred_fallthru
    _
  // Predicated region
  $region34: #{safm_forward.8} parent=0 // pred_check
    _
  $region35: #{safm_forward.8} parent=0 // pred_check_branch
    %1191 = sbr.rel (0) target = $region37
  $region36: #{safm_forward.8} parent=0 // pred_region
    _
  $region37: #{safm_forward.8} parent=0 // pred_fallthru
    _

// kernel: safm_forward.9
$region0: #{safm_forward.9}
  #allocation0 [shape = 'u32[]', space=smem, size = 0x4, offset = 0x4, fixed_abs, tag = 'smem constant byte address 0x4 - core index']
  #allocation1 [shape = 'u32[144,128]{1,0:T(1,128)}', space=vmem, size = 0x12000, scoped, tag = 'internal scratch']
  %s0 = inlined_call_operand.vmem [shape: f32[16,32], index: 0, kind: input, shape index: {}]
  %s1 = inlined_call_operand.vmem [shape: f32[32,16], index: 1, kind: input, shape index: {}]
  %s2 = inlined_call_operand.vmem [shape: f32[1,16], index: 2, kind: input, shape index: {}]
  %s3 = inlined_call_operand.hbm [shape: f32[16,16], index: 3, kind: output, shape index: {}]
  %s4 = sld [smem:[#allocation0]]
  $region22: #{safm_forward.9} parent=0
    _
  %s6 = ssub.s32 1, %s4
  %s7 = scalar_select 0, %s6, %s4
  $region1: #{safm_forward.9} parent=0
    #allocation2 [shape = 'u8[8192]{0}', space=vmem, size = 0x2000, scoped, tag = 'output window, operand 0, single buffered']
    #allocation3 [shape = 's32[1]{0}', space=sflag, size = 0x4, scoped, tag = 'scoped memory for safm_forward.9']
    %8 = vsyncpa [#allocation3], 0
    // Predicated region
    $region2: #{safm_forward.9} parent=1 // pred_check
      _
    $region3: #{safm_forward.9} parent=1 // pred_check_branch
      %10 = sbr.rel (0) target = $region5
    $region4: #{safm_forward.9} parent=1 // pred_region
      _
    $region5: #{safm_forward.9} parent=1 // pred_fallthru
      _
    // Predicated region
    $region6: #{safm_forward.9} parent=1 // pred_check
      _
    $region7: #{safm_forward.9} parent=1 // pred_check_branch
      %12 = sbr.rel (0) target = $region9
    $region8: #{safm_forward.9} parent=1 // pred_region
      _
    $region9: #{safm_forward.9} parent=1 // pred_fallthru
      _
    // Predicated region
    $region10: #{safm_forward.9} parent=1 // pred_check
      _
    $region11: #{safm_forward.9} parent=1 // pred_check_branch
      %14 = sbr.rel (0) target = $region13
    $region12: #{safm_forward.9} parent=1 // pred_region
      _
    $region13: #{safm_forward.9} parent=1 // pred_fallthru
      _
    %v15 = vld [vmem:[%s0] sm:$0xff]
    %v16 = vld [vmem:[%s0 + $0x8] sm:$0xff]
    %v17 = vld [vmem:[%s1] sm:$0xff]
    %v18 = vld [vmem:[%s1 + $0x8] sm:$0xff]
    %v19 = vld [vmem:[%s1 + $0x10] sm:$0xff]
    %v20 = vld [vmem:[%s1 + $0x18] sm:$0xff]
    %v21 = vld [vmem:[%s2] sm:$0x1]
    %v23 = vlaneseq
    %v24 = vshrl.u32 %v23, 7
    %v25 = vsub.s32 0, %v24
    %v26 = vrot.slane %v21, %v25
    %vm28 = vcmask 261120
    %v30 = vsel %vm28, %v15, 0
    %v33 = vsel %vm28, %v16, 0
    %35 = vmatprep.subr.mxu0 0.0
    %36 = vmatpush1.msra.mxu0 %v17
    %37 = vmatprep.subr.mxu0 0.0
    %38 = vmatpush1.msra.mxu0 %v18
    %39 = vmatprep.subr.mxu0 0.0
    %40 = vmatpush1.msra.mxu0 %v19
    %41 = vmatprep.subr.mxu0 0.0
    %42 = vmatpush1.msra.mxu0 %v20
    %43 = vmatprep.subr.mxu0 0.0
    %44 = vmatpush1.msra.mxu0 0.0
    %45 = vmatprep.subr.mxu0 0.0
    %46 = vmatpush1.msra.mxu0 0.0
    %47 = vmatprep.subr.mxu0 0.0
    %48 = vmatpush1.msra.mxu0 0.0
    %49 = vmatprep.subr.mxu0 0.0
    %50 = vmatpush1.msra.mxu0 0.0
    %51 = vmatprep.subr.mxu0 0.0
    %52 = vmatpush1.msra.mxu0 0.0
    %53 = vmatprep.subr.mxu0 0.0
    %54 = vmatpush1.msra.mxu0 0.0
    %55 = vmatprep.subr.mxu0 0.0
    %56 = vmatpush1.msra.mxu0 0.0
    %57 = vmatprep.subr.mxu0 0.0
    %58 = vmatpush1.msra.mxu0 0.0
    %59 = vmatprep.subr.mxu0 0.0
    %60 = vmatpush1.msra.mxu0 0.0
    %61 = vmatprep.subr.mxu0 0.0
    %62 = vmatpush1.msra.mxu0 0.0
    %63 = vmatprep.subr.mxu0 0.0
    %64 = vmatpush1.msra.mxu0 0.0
    %65 = vmatprep.subr.mxu0 0.0
    %66 = vmatpush1.msra.mxu0 0.0
    %67 = vmatprep.subr.mxu0 0.0
    %68 = vmatpush1.msra.mxu0 0.0
    %69 = vmatprep.subr.mxu0 0.0
    %70 = vmatpush1.msra.mxu0 0.0
    %71 = vmatprep.subr.mxu0 0.0
    %72 = vmatpush1.msra.mxu0 0.0
    %73 = vmatprep.subr.mxu0 0.0
    %74 = vmatpush1.msra.mxu0 0.0
    %75 = vmatprep.subr.mxu0 0.0
    %76 = vmatpush1.msra.mxu0 0.0
    %77 = vmatprep.subr.mxu0 0.0
    %78 = vmatpush1.msra.mxu0 0.0
    %79 = vmatprep.subr.mxu0 0.0
    %80 = vmatpush1.msra.mxu0 0.0
    %81 = vmatprep.subr.mxu0 0.0
    %82 = vmatpush1.msra.mxu0 0.0
    %83 = vmatprep.subr.mxu0 0.0
    %84 = vmatpush1.msra.mxu0 0.0
    %85 = vmatprep.subr.mxu0 0.0
    %86 = vmatpush1.msra.mxu0 0.0
    %87 = vmatprep.subr.mxu0 0.0
    %88 = vmatpush1.msra.mxu0 0.0
    %89 = vmatprep.subr.mxu0 0.0
    %90 = vmatpush1.msra.mxu0 0.0
    %91 = vmatprep.subr.mxu0 0.0
    %92 = vmatpush1.msra.mxu0 0.0
    %93 = vmatprep.subr.mxu0 0.0
    %94 = vmatpush1.msra.mxu0 0.0
    %95 = vmatprep.subr.mxu0 0.0
    %96 = vmatpush1.msra.mxu0 0.0
    %97 = vmatprep.subr.mxu0 0.0
    %98 = vmatpush1.msra.mxu0 0.0
    %99 = vmatprep.mubr.f32.mxu0 0.0
    %100 = vmatmul.mubr.f32.gmra.mrb[0].mxu0 %v30
    %v101 = vpop.f32.mrb[0].mxu0
    %v102 = vadd.f32 %v26, %v101
    %v103 = vpop.f32.mrb[0].mxu0
    %104 = vmatprep.mubr.f32.mxu0 0.0
    %105 = vmatmul.mubr.f32.gmra.mrb[0].mxu0 %v33
    %v106 = vpop.f32.mrb[0].mxu0
    %v107 = vadd.f32 %v26, %v106
    %v108 = vpop.f32.mrb[0].mxu0
    %109 = vdwg.mxu0
    %vm110 = vcmask 130048
    %111 = vst.msk [vmem:[#allocation2] sm:$0xff] %vm110, %v102
    %112 = vst.msk [vmem:[#allocation2 + $0x8] sm:$0xff] %vm110, %v107
    // Predicated region
    $region14: #{safm_forward.9} parent=1 // pred_check
      _
    $region15: #{safm_forward.9} parent=1 // pred_check_branch
      %114 = sbr.rel (0) target = $region17
    $region16: #{safm_forward.9} parent=1 // pred_region
      %s116 = ssub.s32 256, 256
      %117 = vsyncadd [#allocation3], %s116
      %s118 = sshll.u32 [#allocation2], 4
      %s119 = int_to_ptr.vmem [resolvable:$true] %s118
      %124 = dma.vmem_to_hbm [thread:$0]  %s119, 256, %s3, [#allocation3], 128, 128, 8
    $region17: #{safm_forward.9} parent=1 // pred_fallthru
      _
    // Predicated region
    $region18: #{safm_forward.9} parent=1 // pred_check
      _
    $region19: #{safm_forward.9} parent=1 // pred_check_branch
      %126 = sbr.rel (0) target = $region21
    $region20: #{safm_forward.9} parent=1 // pred_region
      %127 = dma.done [#allocation3], 256
    $region21: #{safm_forward.9} parent=1 // pred_fallthru
      _
    %128 = vsyncpa [#allocation3], 1

</llo_original>
